<compile_context>
chip_gen: v7x
topology: tpu7x:2x2x1
jax: 0.10.0
libtpu: 0.0.40
codegen_flags: <defaults>
</compile_context>

<pallas_src>
from functools import partial

import jax
import jax.numpy as jnp
from jax.experimental import pallas as pl
from jax.experimental.pallas import tpu as pltpu

NFB = 4            # config.nfb  (input channels)
C = 9              # config.C    (kernel height of all three convs)
KW = 9             # conv11 kernel width
COUT1 = 16         # conv11 output channels
KH23 = 2 * C - 1   # 17: height of the composed conv12 o conv13 kernel
PAD23 = 4          # conv12's height padding
CP = 8             # input channels zero-padded to a full sublane group


def _signal_cnn_kernel(x_ref, wc_ref, qb_ref, bc_ref, o_ref, qp_ref,
                       *, Bblk, Wp, M1, M3, lpad):
    """One batch block per grid step.  Layout: channels on sublanes, flattened
    (h*Wp + w) spatial index on lanes ("wide" rows of pitch Wp)."""
    QPW = qp_ref.shape[1]

    # Zero the stage-2 pad columns once per grid STEP (the per-element interior
    # writes never touch them).  Not gated on program_id==0 on purpose: the
    # "parallel" batch axis may be sharded across TensorCores, and a core that
    # never runs step 0 would otherwise see uninitialized pads.
    qp_ref[:, 0:lpad] = jnp.zeros((KH23, lpad), jnp.float32)
    qp_ref[:, lpad + M1:] = jnp.zeros((KH23, QPW - lpad - M1), jnp.float32)

    # Hoisted loop invariants (JAX does not CSE broadcasts inside loops).
    q_init = jnp.broadcast_to(qb_ref[...], (KH23, M1))     # composed bias W23^T b1
    acc_init = jnp.full((1, M3), bc_ref[0], jnp.float32)   # composed bias b3 + b2*sum(w3)

    for bi in range(Bblk):                 # static, small, fully unrolled
        x8 = x_ref[bi]                     # (CP, Lp) zero-padded input, wide rows

        # ---- stage 1: conv11 with conv12∘conv13's channel mix folded in ----
        # 9 dots of K = KW*CP = 72 (one per kernel row) instead of 81 K=4 taps.
        q = q_init
        for kh in range(C):
            base = kh * Wp
            pk = jnp.concatenate(
                [x8[:, base + kw: base + kw + M1] for kw in range(KW)],
                axis=0)                                             # (72, M1)
            q = q + jnp.dot(wc_ref[kh], pk,
                            preferred_element_type=jnp.float32)    # (17, M1)

        # ---- stage 2: 17-tap height conv of conv12∘conv13 (VPU shifted adds) ----
        qp_ref[:, lpad:lpad + M1] = q      # lane-aligned interior store
        acc = acc_init
        for m in range(KH23):
            off = (lpad - PAD23 * Wp) + m * Wp
            acc = acc + qp_ref[m:m + 1, off:off + M3]

        # nn.Dropout(p=0.75): identity at inference time.
        # TODO(synk): training-mode dropout (torch RNG mask + 1/(1-p) scale) not implemented.
        o_ref[bi] = acc                    # (1, M3) wide row for this element


def signal_cnn_forward(x, params):
    """x: (B, NFB, H, W) float32 -> (B, 1, H3, W) float32 (NCHW, like PyTorch)."""
    w1, b1, w2, b2, w3, b3 = params
    B, Cin, H, W = x.shape
    H1 = H + 2 * 3 - C + 1          # conv11 output height  (= H - 2)
    H2 = H1 + 2 * PAD23 - C + 1     # conv12 output height  (= H1)
    H3 = H2 - C + 1                 # conv13 output height  (= H - 10)
    assert H3 >= 1, "H must be >= 11 for SignalCNN"
    Wp = W + 2 * 4                  # padded width (also the wide row pitch)
    Hp = H + 2 * 3 + 1              # +1 slack zero row so wide-row tap reads stay in bounds
    Lp = Hp * Wp
    M1 = H1 * Wp                    # stage-1 output columns (wide)
    M3 = H3 * Wp                    # final output columns (wide)
    lpad = pl.cdiv(PAD23 * Wp, 128) * 128   # lane-aligned left pad of the stage-2 scratch
    QPW = lpad + M1 + PAD23 * Wp            # stage-2 scratch width

    # ---- batch blocking: amortize per-step overhead, keep >=2 grid steps ----
    Bblk = 8 if B >= 16 else max(1, B // 2)
    nb = pl.cdiv(B, Bblk)
    Bpad = nb * Bblk

    # ---- layout glue: zero-pad batch/channels/space, flatten spatial onto lanes ----
    xp = jnp.pad(x, ((0, Bpad - B), (0, CP - Cin), (3, 3 + 1), (4, 4)))
    xt = xp.reshape(Bpad, CP, Lp).astype(jnp.float32)

    # ---- weight prep (tiny, host side) ----
    # exact composition of conv12 (pad (4,0), k=(9,1)) with conv13 (k=(9,1)):
    #   w23[c, m] = sum_{k2+k3=m} w2[c, k2] * w3[k3]   (full 1-D convolution)
    w2v = w2[0, :, :, 0]                                            # (16, 9)
    w3v = w3[0, 0, :, 0]                                            # (9,)
    w23 = jax.vmap(lambda r: jnp.convolve(r, w3v, mode='full'))(w2v)  # (16, 17)
    # fold the exact 16->1 channel mix into conv11's weights / bias:
    wc = jnp.einsum('cm,cikl->mikl', w23, w1)                       # (17, NFB, C, KW)
    wc_k = jnp.transpose(wc, (2, 0, 3, 1))                          # (kh, m, kw, i)
    wc_k = jnp.pad(wc_k, ((0, 0), (0, 0), (0, 0), (0, CP - NFB)))
    wc_k = wc_k.reshape(C, KH23, KW * CP).astype(jnp.float32)       # (9, 17, 72)
    qb = jnp.einsum('cm,c->m', w23, b1).reshape(KH23, 1).astype(jnp.float32)
    bc = (b3 + b2 * jnp.sum(w3v)).astype(jnp.float32)               # (1,) composed scalar

    kernel = partial(_signal_cnn_kernel, Bblk=Bblk, Wp=Wp, M1=M1, M3=M3, lpad=lpad)
    out_wide = pl.pallas_call(
        kernel,
        out_shape=jax.ShapeDtypeStruct((Bpad, 1, M3), jnp.float32),
        grid=(nb,),
        in_specs=[
            pl.BlockSpec((Bblk, CP, Lp), lambda b: (b, 0, 0)),
            pl.BlockSpec((C, KH23, KW * CP), lambda b: (0, 0, 0)),
            pl.BlockSpec((KH23, 1), lambda b: (0, 0)),
            pl.BlockSpec(memory_space=pltpu.MemorySpace.SMEM),
        ],
        out_specs=pl.BlockSpec((Bblk, 1, M3), lambda b: (b, 0, 0)),
        scratch_shapes=[pltpu.VMEM((KH23, QPW), jnp.float32)],
        compiler_params=pltpu.CompilerParams(
            dimension_semantics=("parallel",)),
    )(xt, wc_k, qb, bc)

    # layout glue: drop padded batch rows and the Wp->W don't-care columns.
    out = out_wide.reshape(Bpad, H3, Wp)[:B, :, :W]
    return out.reshape(B, 1, H3, W)


def init_params(key):
    """Deterministic PyTorch-default-style init (uniform +/- 1/sqrt(fan_in))."""
    ks = jax.random.split(key, 6)

    def u(k, shape, fan_in):
        bound = 1.0 / jnp.sqrt(jnp.float32(fan_in))
        return jax.random.uniform(k, shape, jnp.float32, -bound, bound)

    w1 = u(ks[0], (COUT1, NFB, C, KW), NFB * C * KW)
    b1 = u(ks[1], (COUT1,), NFB * C * KW)
    w2 = u(ks[2], (1, COUT1, C, 1), COUT1 * C)
    b2 = u(ks[3], (1,), COUT1 * C)
    w3 = u(ks[4], (1, 1, C, 1), C)
    b3 = u(ks[5], (1,), C)
    return (w1, b1, w2, b2, w3, b3)


def reference_forward(x, params):
    """Pure-JAX NCHW conv reference (matches torch.nn.Conv2d semantics)."""
    w1, b1, w2, b2, w3, b3 = params
    dn = ("NCHW", "OIHW", "NCHW")
    hp = jax.lax.Precision.HIGHEST
    y = jax.lax.conv_general_dilated(x, w1, (1, 1), [(3, 3), (4, 4)],
                                     dimension_numbers=dn, precision=hp)
    y = y + b1.reshape(1, -1, 1, 1)
    y = jax.lax.conv_general_dilated(y, w2, (1, 1), [(4, 4), (0, 0)],
                                     dimension_numbers=dn, precision=hp)
    y = y + b2.reshape(1, -1, 1, 1)
    y = jax.lax.conv_general_dilated(y, w3, (1, 1), [(0, 0), (0, 0)],
                                     dimension_numbers=dn, precision=hp)
    y = y + b3.reshape(1, -1, 1, 1)
    return y


if __name__ == "__main__":
    key = jax.random.PRNGKey(0)
    pkey, xkey = jax.random.split(key)
    params = init_params(pkey)

    B, H, W = 2, 16, 16
    x = jax.random.normal(xkey, (B, NFB, H, W), jnp.float32)

    fwd = jax.jit(signal_cnn_forward)
    out = jax.block_until_ready(fwd(x, params))

    assert out.shape == (B, 1, H - 10, W), out.shape
    ref = reference_forward(x, params)
    max_err = float(jnp.max(jnp.abs(out - ref)))
    # Tightened from 5e-2: far below any layout/composition-bug signal, but
    # above MXU f32 matmul rounding regardless of how many passes it uses.
    assert max_err < 2e-3, f"max abs error vs reference = {max_err}"

    print("KERNEL_OK")
</pallas_src>

<mosaic_0001>
module attributes {stable_mosaic.version = 11 : i64} {
  func.func @_signal_cnn_kernel(%arg0: i32, %arg1: memref<1x8x552xf32, #tpu.memory_space<vmem>>, %arg2: memref<9x17x72xf32, #tpu.memory_space<vmem>>, %arg3: memref<17x1xf32, #tpu.memory_space<vmem>>, %arg4: memref<1xf32, #tpu.memory_space<smem>>, %arg5: memref<1x1x144xf32, #tpu.memory_space<vmem>>, %arg6: memref<17x560xf32, #tpu.memory_space<vmem>>) attributes {dimension_semantics = [#tpu.dimension_semantics<parallel>], iteration_bounds = array<i64: 2>, scalar_prefetch = 0 : i64, scratch_operands = 1 : i64, tpu.core_type = #tpu.core_type<tc>, window_params = [{transform_indices = @transform_0, window_bounds = array<i64: 1, 8, 552>}, {pipeline_mode = #tpu.pipeline_mode<synchronous>, transform_indices = @transform_1, window_bounds = array<i64: 9, 17, 72>}, {pipeline_mode = #tpu.pipeline_mode<synchronous>, transform_indices = @transform_2, window_bounds = array<i64: 17, 1>}, {transform_indices = @transform_3, window_bounds = array<i64: 1>}, {transform_indices = @transform_4, window_bounds = array<i64: 1, 1, 144>}]} {
    %cst = arith.constant 0.000000e+00 : f32
    %0 = vector.broadcast %cst : f32 to vector<17x128xf32>
    %c0 = arith.constant 0 : index
    %c0_0 = arith.constant 0 : index
    %1 = vector.load %arg6[%c0, %c0_0] : memref<17x560xf32, #tpu.memory_space<vmem>>, vector<17x128xf32>
    tpu.vector_store %arg6[%c0, %c0_0], %0 {strides = array<i32>} : memref<17x560xf32, #tpu.memory_space<vmem>>, vector<17x128xf32>,
    %cst_1 = arith.constant 0.000000e+00 : f32
    %2 = vector.broadcast %cst_1 : f32 to vector<17x96xf32>
    %c0_2 = arith.constant 0 : index
    %c464 = arith.constant 464 : index
    %3 = vector.load %arg6[%c0_2, %c464] : memref<17x560xf32, #tpu.memory_space<vmem>>, vector<17x96xf32>
    tpu.vector_store %arg6[%c0_2, %c464], %2 {strides = array<i32>} : memref<17x560xf32, #tpu.memory_space<vmem>>, vector<17x96xf32>,
    %c0_3 = arith.constant 0 : index
    %c0_4 = arith.constant 0 : index
    %4 = vector.load %arg3[%c0_3, %c0_4] : memref<17x1xf32, #tpu.memory_space<vmem>>, vector<17x1xf32>
    %5 = vector.shape_cast %4 : vector<17x1xf32> to vector<17x1xf32>
    %6 = vector.broadcast %5 : vector<17x1xf32> to vector<17x336xf32>
    %c0_5 = arith.constant 0 : index
    %7 = memref.load %arg4[%c0_5] : memref<1xf32, #tpu.memory_space<smem>>
    %8 = vector.broadcast %7 : f32 to vector<1x144xf32>
    %c0_6 = arith.constant 0 : index
    %c0_7 = arith.constant 0 : index
    %c0_8 = arith.constant 0 : index
    %9 = vector.load %arg1[%c0_6, %c0_7, %c0_8] : memref<1x8x552xf32, #tpu.memory_space<vmem>>, vector<1x8x552xf32>
    %10 = vector.shape_cast %9 : vector<1x8x552xf32> to vector<8x552xf32>
    %11 = vector.extract_strided_slice %10 {offsets = [0, 0], sizes = [8, 336], strides = [1, 1]} : vector<8x552xf32> to vector<8x336xf32>
    %12 = vector.extract_strided_slice %10 {offsets = [0, 1], sizes = [8, 336], strides = [1, 1]} : vector<8x552xf32> to vector<8x336xf32>
    %13 = vector.extract_strided_slice %10 {offsets = [0, 2], sizes = [8, 336], strides = [1, 1]} : vector<8x552xf32> to vector<8x336xf32>
    %14 = vector.extract_strided_slice %10 {offsets = [0, 3], sizes = [8, 336], strides = [1, 1]} : vector<8x552xf32> to vector<8x336xf32>
    %15 = vector.extract_strided_slice %10 {offsets = [0, 4], sizes = [8, 336], strides = [1, 1]} : vector<8x552xf32> to vector<8x336xf32>
    %16 = vector.extract_strided_slice %10 {offsets = [0, 5], sizes = [8, 336], strides = [1, 1]} : vector<8x552xf32> to vector<8x336xf32>
    %17 = vector.extract_strided_slice %10 {offsets = [0, 6], sizes = [8, 336], strides = [1, 1]} : vector<8x552xf32> to vector<8x336xf32>
    %18 = vector.extract_strided_slice %10 {offsets = [0, 7], sizes = [8, 336], strides = [1, 1]} : vector<8x552xf32> to vector<8x336xf32>
    %19 = vector.extract_strided_slice %10 {offsets = [0, 8], sizes = [8, 336], strides = [1, 1]} : vector<8x552xf32> to vector<8x336xf32>
    %20 = tpu.concatenate %11, %12, %13, %14, %15, %16, %17, %18, %19 in 0 : vector<8x336xf32>, vector<8x336xf32>, vector<8x336xf32>, vector<8x336xf32>, vector<8x336xf32>, vector<8x336xf32>, vector<8x336xf32>, vector<8x336xf32>, vector<8x336xf32> -> vector<72x336xf32>
    %c0_9 = arith.constant 0 : index
    %c0_10 = arith.constant 0 : index
    %c0_11 = arith.constant 0 : index
    %21 = vector.load %arg2[%c0_9, %c0_10, %c0_11] : memref<9x17x72xf32, #tpu.memory_space<vmem>>, vector<1x17x72xf32>
    %22 = vector.shape_cast %21 : vector<1x17x72xf32> to vector<17x72xf32>
    %cst_12 = arith.constant dense<0.000000e+00> : vector<17x336xf32>
    %23 = tpu.matmul %22, %20, %cst_12 {dimension_numbers = #tpu.dot_dimension_numbers<[1], [0], [0], [1], [0, 0, 1, 1], [], []>} : vector<17x72xf32>, vector<72x336xf32>, vector<17x336xf32> -> vector<17x336xf32>
    %24 = arith.addf %6, %23 : vector<17x336xf32>
    %25 = vector.extract_strided_slice %10 {offsets = [0, 24], sizes = [8, 336], strides = [1, 1]} : vector<8x552xf32> to vector<8x336xf32>
    %26 = vector.extract_strided_slice %10 {offsets = [0, 25], sizes = [8, 336], strides = [1, 1]} : vector<8x552xf32> to vector<8x336xf32>
    %27 = vector.extract_strided_slice %10 {offsets = [0, 26], sizes = [8, 336], strides = [1, 1]} : vector<8x552xf32> to vector<8x336xf32>
    %28 = vector.extract_strided_slice %10 {offsets = [0, 27], sizes = [8, 336], strides = [1, 1]} : vector<8x552xf32> to vector<8x336xf32>
    %29 = vector.extract_strided_slice %10 {offsets = [0, 28], sizes = [8, 336], strides = [1, 1]} : vector<8x552xf32> to vector<8x336xf32>
    %30 = vector.extract_strided_slice %10 {offsets = [0, 29], sizes = [8, 336], strides = [1, 1]} : vector<8x552xf32> to vector<8x336xf32>
    %31 = vector.extract_strided_slice %10 {offsets = [0, 30], sizes = [8, 336], strides = [1, 1]} : vector<8x552xf32> to vector<8x336xf32>
    %32 = vector.extract_strided_slice %10 {offsets = [0, 31], sizes = [8, 336], strides = [1, 1]} : vector<8x552xf32> to vector<8x336xf32>
    %33 = vector.extract_strided_slice %10 {offsets = [0, 32], sizes = [8, 336], strides = [1, 1]} : vector<8x552xf32> to vector<8x336xf32>
    %34 = tpu.concatenate %25, %26, %27, %28, %29, %30, %31, %32, %33 in 0 : vector<8x336xf32>, vector<8x336xf32>, vector<8x336xf32>, vector<8x336xf32>, vector<8x336xf32>, vector<8x336xf32>, vector<8x336xf32>, vector<8x336xf32>, vector<8x336xf32> -> vector<72x336xf32>
    %c1 = arith.constant 1 : index
    %c0_13 = arith.constant 0 : index
    %c0_14 = arith.constant 0 : index
    %35 = vector.load %arg2[%c1, %c0_13, %c0_14] : memref<9x17x72xf32, #tpu.memory_space<vmem>>, vector<1x17x72xf32>
    %36 = vector.shape_cast %35 : vector<1x17x72xf32> to vector<17x72xf32>
    %cst_15 = arith.constant dense<0.000000e+00> : vector<17x336xf32>
    %37 = tpu.matmul %36, %34, %cst_15 {dimension_numbers = #tpu.dot_dimension_numbers<[1], [0], [0], [1], [0, 0, 1, 1], [], []>} : vector<17x72xf32>, vector<72x336xf32>, vector<17x336xf32> -> vector<17x336xf32>
    %38 = arith.addf %24, %37 : vector<17x336xf32>
    %39 = vector.extract_strided_slice %10 {offsets = [0, 48], sizes = [8, 336], strides = [1, 1]} : vector<8x552xf32> to vector<8x336xf32>
    %40 = vector.extract_strided_slice %10 {offsets = [0, 49], sizes = [8, 336], strides = [1, 1]} : vector<8x552xf32> to vector<8x336xf32>
    %41 = vector.extract_strided_slice %10 {offsets = [0, 50], sizes = [8, 336], strides = [1, 1]} : vector<8x552xf32> to vector<8x336xf32>
    %42 = vector.extract_strided_slice %10 {offsets = [0, 51], sizes = [8, 336], strides = [1, 1]} : vector<8x552xf32> to vector<8x336xf32>
    %43 = vector.extract_strided_slice %10 {offsets = [0, 52], sizes = [8, 336], strides = [1, 1]} : vector<8x552xf32> to vector<8x336xf32>
    %44 = vector.extract_strided_slice %10 {offsets = [0, 53], sizes = [8, 336], strides = [1, 1]} : vector<8x552xf32> to vector<8x336xf32>
    %45 = vector.extract_strided_slice %10 {offsets = [0, 54], sizes = [8, 336], strides = [1, 1]} : vector<8x552xf32> to vector<8x336xf32>
    %46 = vector.extract_strided_slice %10 {offsets = [0, 55], sizes = [8, 336], strides = [1, 1]} : vector<8x552xf32> to vector<8x336xf32>
    %47 = vector.extract_strided_slice %10 {offsets = [0, 56], sizes = [8, 336], strides = [1, 1]} : vector<8x552xf32> to vector<8x336xf32>
    %48 = tpu.concatenate %39, %40, %41, %42, %43, %44, %45, %46, %47 in 0 : vector<8x336xf32>, vector<8x336xf32>, vector<8x336xf32>, vector<8x336xf32>, vector<8x336xf32>, vector<8x336xf32>, vector<8x336xf32>, vector<8x336xf32>, vector<8x336xf32> -> vector<72x336xf32>
    %c2 = arith.constant 2 : index
    %c0_16 = arith.constant 0 : index
    %c0_17 = arith.constant 0 : index
    %49 = vector.load %arg2[%c2, %c0_16, %c0_17] : memref<9x17x72xf32, #tpu.memory_space<vmem>>, vector<1x17x72xf32>
    %50 = vector.shape_cast %49 : vector<1x17x72xf32> to vector<17x72xf32>
    %cst_18 = arith.constant dense<0.000000e+00> : vector<17x336xf32>
    %51 = tpu.matmul %50, %48, %cst_18 {dimension_numbers = #tpu.dot_dimension_numbers<[1], [0], [0], [1], [0, 0, 1, 1], [], []>} : vector<17x72xf32>, vector<72x336xf32>, vector<17x336xf32> -> vector<17x336xf32>
    %52 = arith.addf %38, %51 : vector<17x336xf32>
    %53 = vector.extract_strided_slice %10 {offsets = [0, 72], sizes = [8, 336], strides = [1, 1]} : vector<8x552xf32> to vector<8x336xf32>
    %54 = vector.extract_strided_slice %10 {offsets = [0, 73], sizes = [8, 336], strides = [1, 1]} : vector<8x552xf32> to vector<8x336xf32>
    %55 = vector.extract_strided_slice %10 {offsets = [0, 74], sizes = [8, 336], strides = [1, 1]} : vector<8x552xf32> to vector<8x336xf32>
    %56 = vector.extract_strided_slice %10 {offsets = [0, 75], sizes = [8, 336], strides = [1, 1]} : vector<8x552xf32> to vector<8x336xf32>
    %57 = vector.extract_strided_slice %10 {offsets = [0, 76], sizes = [8, 336], strides = [1, 1]} : vector<8x552xf32> to vector<8x336xf32>
    %58 = vector.extract_strided_slice %10 {offsets = [0, 77], sizes = [8, 336], strides = [1, 1]} : vector<8x552xf32> to vector<8x336xf32>
    %59 = vector.extract_strided_slice %10 {offsets = [0, 78], sizes = [8, 336], strides = [1, 1]} : vector<8x552xf32> to vector<8x336xf32>
    %60 = vector.extract_strided_slice %10 {offsets = [0, 79], sizes = [8, 336], strides = [1, 1]} : vector<8x552xf32> to vector<8x336xf32>
    %61 = vector.extract_strided_slice %10 {offsets = [0, 80], sizes = [8, 336], strides = [1, 1]} : vector<8x552xf32> to vector<8x336xf32>
    %62 = tpu.concatenate %53, %54, %55, %56, %57, %58, %59, %60, %61 in 0 : vector<8x336xf32>, vector<8x336xf32>, vector<8x336xf32>, vector<8x336xf32>, vector<8x336xf32>, vector<8x336xf32>, vector<8x336xf32>, vector<8x336xf32>, vector<8x336xf32> -> vector<72x336xf32>
    %c3 = arith.constant 3 : index
    %c0_19 = arith.constant 0 : index
    %c0_20 = arith.constant 0 : index
    %63 = vector.load %arg2[%c3, %c0_19, %c0_20] : memref<9x17x72xf32, #tpu.memory_space<vmem>>, vector<1x17x72xf32>
    %64 = vector.shape_cast %63 : vector<1x17x72xf32> to vector<17x72xf32>
    %cst_21 = arith.constant dense<0.000000e+00> : vector<17x336xf32>
    %65 = tpu.matmul %64, %62, %cst_21 {dimension_numbers = #tpu.dot_dimension_numbers<[1], [0], [0], [1], [0, 0, 1, 1], [], []>} : vector<17x72xf32>, vector<72x336xf32>, vector<17x336xf32> -> vector<17x336xf32>
    %66 = arith.addf %52, %65 : vector<17x336xf32>
    %67 = vector.extract_strided_slice %10 {offsets = [0, 96], sizes = [8, 336], strides = [1, 1]} : vector<8x552xf32> to vector<8x336xf32>
    %68 = vector.extract_strided_slice %10 {offsets = [0, 97], sizes = [8, 336], strides = [1, 1]} : vector<8x552xf32> to vector<8x336xf32>
    %69 = vector.extract_strided_slice %10 {offsets = [0, 98], sizes = [8, 336], strides = [1, 1]} : vector<8x552xf32> to vector<8x336xf32>
    %70 = vector.extract_strided_slice %10 {offsets = [0, 99], sizes = [8, 336], strides = [1, 1]} : vector<8x552xf32> to vector<8x336xf32>
    %71 = vector.extract_strided_slice %10 {offsets = [0, 100], sizes = [8, 336], strides = [1, 1]} : vector<8x552xf32> to vector<8x336xf32>
    %72 = vector.extract_strided_slice %10 {offsets = [0, 101], sizes = [8, 336], strides = [1, 1]} : vector<8x552xf32> to vector<8x336xf32>
    %73 = vector.extract_strided_slice %10 {offsets = [0, 102], sizes = [8, 336], strides = [1, 1]} : vector<8x552xf32> to vector<8x336xf32>
    %74 = vector.extract_strided_slice %10 {offsets = [0, 103], sizes = [8, 336], strides = [1, 1]} : vector<8x552xf32> to vector<8x336xf32>
    %75 = vector.extract_strided_slice %10 {offsets = [0, 104], sizes = [8, 336], strides = [1, 1]} : vector<8x552xf32> to vector<8x336xf32>
    %76 = tpu.concatenate %67, %68, %69, %70, %71, %72, %73, %74, %75 in 0 : vector<8x336xf32>, vector<8x336xf32>, vector<8x336xf32>, vector<8x336xf32>, vector<8x336xf32>, vector<8x336xf32>, vector<8x336xf32>, vector<8x336xf32>, vector<8x336xf32> -> vector<72x336xf32>
    %c4 = arith.constant 4 : index
    %c0_22 = arith.constant 0 : index
    %c0_23 = arith.constant 0 : index
    %77 = vector.load %arg2[%c4, %c0_22, %c0_23] : memref<9x17x72xf32, #tpu.memory_space<vmem>>, vector<1x17x72xf32>
    %78 = vector.shape_cast %77 : vector<1x17x72xf32> to vector<17x72xf32>
    %cst_24 = arith.constant dense<0.000000e+00> : vector<17x336xf32>
    %79 = tpu.matmul %78, %76, %cst_24 {dimension_numbers = #tpu.dot_dimension_numbers<[1], [0], [0], [1], [0, 0, 1, 1], [], []>} : vector<17x72xf32>, vector<72x336xf32>, vector<17x336xf32> -> vector<17x336xf32>
    %80 = arith.addf %66, %79 : vector<17x336xf32>
    %81 = vector.extract_strided_slice %10 {offsets = [0, 120], sizes = [8, 336], strides = [1, 1]} : vector<8x552xf32> to vector<8x336xf32>
    %82 = vector.extract_strided_slice %10 {offsets = [0, 121], sizes = [8, 336], strides = [1, 1]} : vector<8x552xf32> to vector<8x336xf32>
    %83 = vector.extract_strided_slice %10 {offsets = [0, 122], sizes = [8, 336], strides = [1, 1]} : vector<8x552xf32> to vector<8x336xf32>
    %84 = vector.extract_strided_slice %10 {offsets = [0, 123], sizes = [8, 336], strides = [1, 1]} : vector<8x552xf32> to vector<8x336xf32>
    %85 = vector.extract_strided_slice %10 {offsets = [0, 124], sizes = [8, 336], strides = [1, 1]} : vector<8x552xf32> to vector<8x336xf32>
    %86 = vector.extract_strided_slice %10 {offsets = [0, 125], sizes = [8, 336], strides = [1, 1]} : vector<8x552xf32> to vector<8x336xf32>
    %87 = vector.extract_strided_slice %10 {offsets = [0, 126], sizes = [8, 336], strides = [1, 1]} : vector<8x552xf32> to vector<8x336xf32>
    %88 = vector.extract_strided_slice %10 {offsets = [0, 127], sizes = [8, 336], strides = [1, 1]} : vector<8x552xf32> to vector<8x336xf32>
    %89 = vector.extract_strided_slice %10 {offsets = [0, 128], sizes = [8, 336], strides = [1, 1]} : vector<8x552xf32> to vector<8x336xf32>
    %90 = tpu.concatenate %81, %82, %83, %84, %85, %86, %87, %88, %89 in 0 : vector<8x336xf32>, vector<8x336xf32>, vector<8x336xf32>, vector<8x336xf32>, vector<8x336xf32>, vector<8x336xf32>, vector<8x336xf32>, vector<8x336xf32>, vector<8x336xf32> -> vector<72x336xf32>
    %c5 = arith.constant 5 : index
    %c0_25 = arith.constant 0 : index
    %c0_26 = arith.constant 0 : index
    %91 = vector.load %arg2[%c5, %c0_25, %c0_26] : memref<9x17x72xf32, #tpu.memory_space<vmem>>, vector<1x17x72xf32>
    %92 = vector.shape_cast %91 : vector<1x17x72xf32> to vector<17x72xf32>
    %cst_27 = arith.constant dense<0.000000e+00> : vector<17x336xf32>
    %93 = tpu.matmul %92, %90, %cst_27 {dimension_numbers = #tpu.dot_dimension_numbers<[1], [0], [0], [1], [0, 0, 1, 1], [], []>} : vector<17x72xf32>, vector<72x336xf32>, vector<17x336xf32> -> vector<17x336xf32>
    %94 = arith.addf %80, %93 : vector<17x336xf32>
    %95 = vector.extract_strided_slice %10 {offsets = [0, 144], sizes = [8, 336], strides = [1, 1]} : vector<8x552xf32> to vector<8x336xf32>
    %96 = vector.extract_strided_slice %10 {offsets = [0, 145], sizes = [8, 336], strides = [1, 1]} : vector<8x552xf32> to vector<8x336xf32>
    %97 = vector.extract_strided_slice %10 {offsets = [0, 146], sizes = [8, 336], strides = [1, 1]} : vector<8x552xf32> to vector<8x336xf32>
    %98 = vector.extract_strided_slice %10 {offsets = [0, 147], sizes = [8, 336], strides = [1, 1]} : vector<8x552xf32> to vector<8x336xf32>
    %99 = vector.extract_strided_slice %10 {offsets = [0, 148], sizes = [8, 336], strides = [1, 1]} : vector<8x552xf32> to vector<8x336xf32>
    %100 = vector.extract_strided_slice %10 {offsets = [0, 149], sizes = [8, 336], strides = [1, 1]} : vector<8x552xf32> to vector<8x336xf32>
    %101 = vector.extract_strided_slice %10 {offsets = [0, 150], sizes = [8, 336], strides = [1, 1]} : vector<8x552xf32> to vector<8x336xf32>
    %102 = vector.extract_strided_slice %10 {offsets = [0, 151], sizes = [8, 336], strides = [1, 1]} : vector<8x552xf32> to vector<8x336xf32>
    %103 = vector.extract_strided_slice %10 {offsets = [0, 152], sizes = [8, 336], strides = [1, 1]} : vector<8x552xf32> to vector<8x336xf32>
    %104 = tpu.concatenate %95, %96, %97, %98, %99, %100, %101, %102, %103 in 0 : vector<8x336xf32>, vector<8x336xf32>, vector<8x336xf32>, vector<8x336xf32>, vector<8x336xf32>, vector<8x336xf32>, vector<8x336xf32>, vector<8x336xf32>, vector<8x336xf32> -> vector<72x336xf32>
    %c6 = arith.constant 6 : index
    %c0_28 = arith.constant 0 : index
    %c0_29 = arith.constant 0 : index
    %105 = vector.load %arg2[%c6, %c0_28, %c0_29] : memref<9x17x72xf32, #tpu.memory_space<vmem>>, vector<1x17x72xf32>
    %106 = vector.shape_cast %105 : vector<1x17x72xf32> to vector<17x72xf32>
    %cst_30 = arith.constant dense<0.000000e+00> : vector<17x336xf32>
    %107 = tpu.matmul %106, %104, %cst_30 {dimension_numbers = #tpu.dot_dimension_numbers<[1], [0], [0], [1], [0, 0, 1, 1], [], []>} : vector<17x72xf32>, vector<72x336xf32>, vector<17x336xf32> -> vector<17x336xf32>
    %108 = arith.addf %94, %107 : vector<17x336xf32>
    %109 = vector.extract_strided_slice %10 {offsets = [0, 168], sizes = [8, 336], strides = [1, 1]} : vector<8x552xf32> to vector<8x336xf32>
    %110 = vector.extract_strided_slice %10 {offsets = [0, 169], sizes = [8, 336], strides = [1, 1]} : vector<8x552xf32> to vector<8x336xf32>
    %111 = vector.extract_strided_slice %10 {offsets = [0, 170], sizes = [8, 336], strides = [1, 1]} : vector<8x552xf32> to vector<8x336xf32>
    %112 = vector.extract_strided_slice %10 {offsets = [0, 171], sizes = [8, 336], strides = [1, 1]} : vector<8x552xf32> to vector<8x336xf32>
    %113 = vector.extract_strided_slice %10 {offsets = [0, 172], sizes = [8, 336], strides = [1, 1]} : vector<8x552xf32> to vector<8x336xf32>
    %114 = vector.extract_strided_slice %10 {offsets = [0, 173], sizes = [8, 336], strides = [1, 1]} : vector<8x552xf32> to vector<8x336xf32>
    %115 = vector.extract_strided_slice %10 {offsets = [0, 174], sizes = [8, 336], strides = [1, 1]} : vector<8x552xf32> to vector<8x336xf32>
    %116 = vector.extract_strided_slice %10 {offsets = [0, 175], sizes = [8, 336], strides = [1, 1]} : vector<8x552xf32> to vector<8x336xf32>
    %117 = vector.extract_strided_slice %10 {offsets = [0, 176], sizes = [8, 336], strides = [1, 1]} : vector<8x552xf32> to vector<8x336xf32>
    %118 = tpu.concatenate %109, %110, %111, %112, %113, %114, %115, %116, %117 in 0 : vector<8x336xf32>, vector<8x336xf32>, vector<8x336xf32>, vector<8x336xf32>, vector<8x336xf32>, vector<8x336xf32>, vector<8x336xf32>, vector<8x336xf32>, vector<8x336xf32> -> vector<72x336xf32>
    %c7 = arith.constant 7 : index
    %c0_31 = arith.constant 0 : index
    %c0_32 = arith.constant 0 : index
    %119 = vector.load %arg2[%c7, %c0_31, %c0_32] : memref<9x17x72xf32, #tpu.memory_space<vmem>>, vector<1x17x72xf32>
    %120 = vector.shape_cast %119 : vector<1x17x72xf32> to vector<17x72xf32>
    %cst_33 = arith.constant dense<0.000000e+00> : vector<17x336xf32>
    %121 = tpu.matmul %120, %118, %cst_33 {dimension_numbers = #tpu.dot_dimension_numbers<[1], [0], [0], [1], [0, 0, 1, 1], [], []>} : vector<17x72xf32>, vector<72x336xf32>, vector<17x336xf32> -> vector<17x336xf32>
    %122 = arith.addf %108, %121 : vector<17x336xf32>
    %123 = vector.extract_strided_slice %10 {offsets = [0, 192], sizes = [8, 336], strides = [1, 1]} : vector<8x552xf32> to vector<8x336xf32>
    %124 = vector.extract_strided_slice %10 {offsets = [0, 193], sizes = [8, 336], strides = [1, 1]} : vector<8x552xf32> to vector<8x336xf32>
    %125 = vector.extract_strided_slice %10 {offsets = [0, 194], sizes = [8, 336], strides = [1, 1]} : vector<8x552xf32> to vector<8x336xf32>
    %126 = vector.extract_strided_slice %10 {offsets = [0, 195], sizes = [8, 336], strides = [1, 1]} : vector<8x552xf32> to vector<8x336xf32>
    %127 = vector.extract_strided_slice %10 {offsets = [0, 196], sizes = [8, 336], strides = [1, 1]} : vector<8x552xf32> to vector<8x336xf32>
    %128 = vector.extract_strided_slice %10 {offsets = [0, 197], sizes = [8, 336], strides = [1, 1]} : vector<8x552xf32> to vector<8x336xf32>
    %129 = vector.extract_strided_slice %10 {offsets = [0, 198], sizes = [8, 336], strides = [1, 1]} : vector<8x552xf32> to vector<8x336xf32>
    %130 = vector.extract_strided_slice %10 {offsets = [0, 199], sizes = [8, 336], strides = [1, 1]} : vector<8x552xf32> to vector<8x336xf32>
    %131 = vector.extract_strided_slice %10 {offsets = [0, 200], sizes = [8, 336], strides = [1, 1]} : vector<8x552xf32> to vector<8x336xf32>
    %132 = tpu.concatenate %123, %124, %125, %126, %127, %128, %129, %130, %131 in 0 : vector<8x336xf32>, vector<8x336xf32>, vector<8x336xf32>, vector<8x336xf32>, vector<8x336xf32>, vector<8x336xf32>, vector<8x336xf32>, vector<8x336xf32>, vector<8x336xf32> -> vector<72x336xf32>
    %c8 = arith.constant 8 : index
    %c0_34 = arith.constant 0 : index
    %c0_35 = arith.constant 0 : index
    %133 = vector.load %arg2[%c8, %c0_34, %c0_35] : memref<9x17x72xf32, #tpu.memory_space<vmem>>, vector<1x17x72xf32>
    %134 = vector.shape_cast %133 : vector<1x17x72xf32> to vector<17x72xf32>
    %cst_36 = arith.constant dense<0.000000e+00> : vector<17x336xf32>
    %135 = tpu.matmul %134, %132, %cst_36 {dimension_numbers = #tpu.dot_dimension_numbers<[1], [0], [0], [1], [0, 0, 1, 1], [], []>} : vector<17x72xf32>, vector<72x336xf32>, vector<17x336xf32> -> vector<17x336xf32>
    %136 = arith.addf %122, %135 : vector<17x336xf32>
    %c0_37 = arith.constant 0 : index
    %c128 = arith.constant 128 : index
    %137 = vector.load %arg6[%c0_37, %c128] : memref<17x560xf32, #tpu.memory_space<vmem>>, vector<17x336xf32>
    tpu.vector_store %arg6[%c0_37, %c128], %136 {strides = array<i32>} : memref<17x560xf32, #tpu.memory_space<vmem>>, vector<17x336xf32>,
    %c0_38 = arith.constant 0 : index
    %c32 = arith.constant 32 : index
    %138 = vector.load %arg6[%c0_38, %c32] : memref<17x560xf32, #tpu.memory_space<vmem>>, vector<1x144xf32>
    %139 = arith.addf %8, %138 : vector<1x144xf32>
    %c1_39 = arith.constant 1 : index
    %c56 = arith.constant 56 : index
    %140 = vector.load %arg6[%c1_39, %c56] : memref<17x560xf32, #tpu.memory_space<vmem>>, vector<1x144xf32>
    %141 = arith.addf %139, %140 : vector<1x144xf32>
    %c2_40 = arith.constant 2 : index
    %c80 = arith.constant 80 : index
    %142 = vector.load %arg6[%c2_40, %c80] : memref<17x560xf32, #tpu.memory_space<vmem>>, vector<1x144xf32>
    %143 = arith.addf %141, %142 : vector<1x144xf32>
    %c3_41 = arith.constant 3 : index
    %c104 = arith.constant 104 : index
    %144 = vector.load %arg6[%c3_41, %c104] : memref<17x560xf32, #tpu.memory_space<vmem>>, vector<1x144xf32>
    %145 = arith.addf %143, %144 : vector<1x144xf32>
    %c4_42 = arith.constant 4 : index
    %c128_43 = arith.constant 128 : index
    %146 = vector.load %arg6[%c4_42, %c128_43] : memref<17x560xf32, #tpu.memory_space<vmem>>, vector<1x144xf32>
    %147 = arith.addf %145, %146 : vector<1x144xf32>
    %c5_44 = arith.constant 5 : index
    %c152 = arith.constant 152 : index
    %148 = vector.load %arg6[%c5_44, %c152] : memref<17x560xf32, #tpu.memory_space<vmem>>, vector<1x144xf32>
    %149 = arith.addf %147, %148 : vector<1x144xf32>
    %c6_45 = arith.constant 6 : index
    %c176 = arith.constant 176 : index
    %150 = vector.load %arg6[%c6_45, %c176] : memref<17x560xf32, #tpu.memory_space<vmem>>, vector<1x144xf32>
    %151 = arith.addf %149, %150 : vector<1x144xf32>
    %c7_46 = arith.constant 7 : index
    %c200 = arith.constant 200 : index
    %152 = vector.load %arg6[%c7_46, %c200] : memref<17x560xf32, #tpu.memory_space<vmem>>, vector<1x144xf32>
    %153 = arith.addf %151, %152 : vector<1x144xf32>
    %c8_47 = arith.constant 8 : index
    %c224 = arith.constant 224 : index
    %154 = vector.load %arg6[%c8_47, %c224] : memref<17x560xf32, #tpu.memory_space<vmem>>, vector<1x144xf32>
    %155 = arith.addf %153, %154 : vector<1x144xf32>
    %c9 = arith.constant 9 : index
    %c248 = arith.constant 248 : index
    %156 = vector.load %arg6[%c9, %c248] : memref<17x560xf32, #tpu.memory_space<vmem>>, vector<1x144xf32>
    %157 = arith.addf %155, %156 : vector<1x144xf32>
    %c10 = arith.constant 10 : index
    %c272 = arith.constant 272 : index
    %158 = vector.load %arg6[%c10, %c272] : memref<17x560xf32, #tpu.memory_space<vmem>>, vector<1x144xf32>
    %159 = arith.addf %157, %158 : vector<1x144xf32>
    %c11 = arith.constant 11 : index
    %c296 = arith.constant 296 : index
    %160 = vector.load %arg6[%c11, %c296] : memref<17x560xf32, #tpu.memory_space<vmem>>, vector<1x144xf32>
    %161 = arith.addf %159, %160 : vector<1x144xf32>
    %c12 = arith.constant 12 : index
    %c320 = arith.constant 320 : index
    %162 = vector.load %arg6[%c12, %c320] : memref<17x560xf32, #tpu.memory_space<vmem>>, vector<1x144xf32>
    %163 = arith.addf %161, %162 : vector<1x144xf32>
    %c13 = arith.constant 13 : index
    %c344 = arith.constant 344 : index
    %164 = vector.load %arg6[%c13, %c344] : memref<17x560xf32, #tpu.memory_space<vmem>>, vector<1x144xf32>
    %165 = arith.addf %163, %164 : vector<1x144xf32>
    %c14 = arith.constant 14 : index
    %c368 = arith.constant 368 : index
    %166 = vector.load %arg6[%c14, %c368] : memref<17x560xf32, #tpu.memory_space<vmem>>, vector<1x144xf32>
    %167 = arith.addf %165, %166 : vector<1x144xf32>
    %c15 = arith.constant 15 : index
    %c392 = arith.constant 392 : index
    %168 = vector.load %arg6[%c15, %c392] : memref<17x560xf32, #tpu.memory_space<vmem>>, vector<1x144xf32>
    %169 = arith.addf %167, %168 : vector<1x144xf32>
    %c16 = arith.constant 16 : index
    %c416 = arith.constant 416 : index
    %170 = vector.load %arg6[%c16, %c416] : memref<17x560xf32, #tpu.memory_space<vmem>>, vector<1x144xf32>
    %171 = arith.addf %169, %170 : vector<1x144xf32>
    %c0_48 = arith.constant 0 : index
    %c0_49 = arith.constant 0 : index
    %c0_50 = arith.constant 0 : index
    %172 = vector.load %arg5[%c0_48, %c0_49, %c0_50] : memref<1x1x144xf32, #tpu.memory_space<vmem>>, vector<1x1x144xf32>
    %173 = vector.shape_cast %172 : vector<1x1x144xf32> to vector<1x144xf32>
    %174 = vector.shape_cast %171 : vector<1x144xf32> to vector<1x1x144xf32>
    tpu.vector_store %arg5[%c0_48, %c0_49, %c0_50], %174 {strides = array<i32>} : memref<1x1x144xf32, #tpu.memory_space<vmem>>, vector<1x1x144xf32>,
    return
  }
  func.func @transform_0(%arg0: i32) -> (i32, i32, i32) {
    %c0_i32 = arith.constant 0 : i32
    %c0_i32_0 = arith.constant 0 : i32
    %c0_i32_1 = arith.constant 0 : i32
    return %arg0, %c0_i32, %c0_i32_0 : i32, i32, i32
  }
  func.func @transform_1(%arg0: i32) -> (i32, i32, i32) {
    %c0_i32 = arith.constant 0 : i32
    %c0_i32_0 = arith.constant 0 : i32
    %c0_i32_1 = arith.constant 0 : i32
    %c0_i32_2 = arith.constant 0 : i32
    return %c0_i32, %c0_i32_0, %c0_i32_1 : i32, i32, i32
  }
  func.func @transform_2(%arg0: i32) -> (i32, i32) {
    %c0_i32 = arith.constant 0 : i32
    %c0_i32_0 = arith.constant 0 : i32
    %c0_i32_1 = arith.constant 0 : i32
    return %c0_i32, %c0_i32_0 : i32, i32
  }
  func.func @transform_3(%arg0: i32) -> i32 {
    %c0_i32 = arith.constant 0 : i32
    %c0_i32_0 = arith.constant 0 : i32
    return %c0_i32 : i32
  }
  func.func @transform_4(%arg0: i32) -> (i32, i32, i32) {
    %c0_i32 = arith.constant 0 : i32
    %c0_i32_0 = arith.constant 0 : i32
    %c0_i32_1 = arith.constant 0 : i32
    return %arg0, %c0_i32, %c0_i32_0 : i32, i32, i32
  }
}

</mosaic_0001>

<llo_original>
// kernel: signal_cnn_forward.1
$region0: #{signal_cnn_forward.1}
  #allocation0 [shape = 'u32[]', space=smem, size = 0x4, offset = 0x4, fixed_abs, tag = 'smem constant byte address 0x4 - core index']
  #allocation1 [shape = 'u32[144,128]{1,0:T(1,128)}', space=vmem, size = 0x12000, scoped, tag = 'internal scratch']
  #allocation2 [shape = 'f32[17,560]{1,0:T(8,128)}', space=vmem, size = 0xf000, scoped, tag = 'scratch operand']
  #allocation3 [shape = 'f32[1]{0:T(128)S(6)}', space=smem, size = 0x200, scoped, tag = 'scoped memory for signal_cnn_forward.1']
  %s0 = inlined_call_operand.vmem [shape: f32[2,8,552], index: 0, kind: input, shape index: {}]
  %s1 = inlined_call_operand.vmem [shape: f32[9,17,72], index: 1, kind: input, shape index: {}]
  %s2 = inlined_call_operand.vmem [shape: f32[17,1], index: 2, kind: input, shape index: {}]
  %s3 = inlined_call_operand.<no memory space> [shape: f32[1], index: 3, kind: input, shape index: {}]
  %s4 = inlined_call_operand.vmem [shape: f32[2,1,144], index: 4, kind: output, shape index: {}]
  %s5 = sld [smem:[#allocation0]]
  $region49: #{signal_cnn_forward.1} parent=0
    _
  %s7 = ssub.s32 1, %s5
  %s8 = scalar_select 0, %s7, %s5
  %9 = sst [smem:[#allocation3]] %s3
  loop: start=0, step=1, limit=4
  $region2: #{signal_cnn_forward.1} parent=0 // loop_pre_header
    _
  $region3: #{signal_cnn_forward.1} parent=0 // loop_header
    %s11 = sphi 0, %s15
    %p12 = scmp.ge.s32.totalorder %s11, 4
    %s21 = sphi 0, %s23
    %s24 = sphi 0, %s21
    %s25 = sphi 0, %s24
    %s41 = sphi 0, %s25
    %s45 = sphi 0, %s45
    %s47 = sphi 0, %s45
    %s48 = sphi 0, %s47
    %s62 = sphi 0, %s48
    %s66 = sphi 0, %s66
    %s68 = sphi 0, %s66
    %s69 = sphi 0, %s68
    %s83 = sphi 0, %s69
    %s87 = sphi 0, %s87
    %s89 = sphi 0, %s87
    %s90 = sphi 0, %s89
    %s104 = sphi 0, %s90
    %s110 = sphi 0, %s112
    %s113 = sphi 0, %s110
    %s114 = sphi 0, %s113
    %s130 = sphi 0, %s114
  $region4: #{signal_cnn_forward.1} parent=0 // loop_header_branch
    %14 = sbr.rel (%p12) target = $region8
  $region5: #{signal_cnn_forward.1} parent=0 // loop_body
    %s16 = ssub.s32 %s11, 1
    %s17 = ssub.s32 %s11, 2
    %s18 = sadd.s32 %s11, 1
    %s19 = ssub.s32 %s11, %s18
    %p20 = scmp.eq.s32.totalorder %s19, 0
    %s22 = sadd.s32 %s21, 1
    %s23 = scalar_select %p20, %s21, %s22
    %p26 = pneg %p20
    %p27 = scmp.eq.s32.totalorder %s11, 1
    %p28 = por %p26, %p27
    %p29 = scmp.ne.s32.totalorder %s21, %s24
    %p30 = scmp.eq.s32.totalorder %s11, 0
    %p31 = por %p29, %p30
    %p32 = scmp.ne.s32.totalorder %s21, %s24
    %p33 = scmp.eq.s32.totalorder %s16, 1
    %p34 = por %p32, %p33
    %p35 = scmp.ne.s32.totalorder %s24, %s25
    %p36 = scmp.eq.s32.totalorder %s16, 0
    %p37 = por %p35, %p36
    %p38 = scmp.ne.s32.totalorder %s24, %s25
    %p39 = scmp.eq.s32.totalorder %s17, 1
    %p40 = por %p38, %p39
    %p42 = scmp.ne.s32.totalorder %s25, %s41
    %p43 = scmp.eq.s32.totalorder %s17, 0
    %p44 = por %p42, %p43
    %s46 = sadd.s32 %s45, 1
    %p49 = scmp.eq.s32.totalorder %s11, 1
    %p50 = scmp.ne.s32.totalorder %s45, %s47
    %p51 = scmp.eq.s32.totalorder %s11, 0
    %p52 = por %p50, %p51
    %p53 = scmp.ne.s32.totalorder %s45, %s47
    %p54 = scmp.eq.s32.totalorder %s16, 1
    %p55 = por %p53, %p54
    %p56 = scmp.ne.s32.totalorder %s47, %s48
    %p57 = scmp.eq.s32.totalorder %s16, 0
    %p58 = por %p56, %p57
    %p59 = scmp.ne.s32.totalorder %s47, %s48
    %p60 = scmp.eq.s32.totalorder %s17, 1
    %p61 = por %p59, %p60
    %p63 = scmp.ne.s32.totalorder %s48, %s62
    %p64 = scmp.eq.s32.totalorder %s17, 0
    %p65 = por %p63, %p64
    %s67 = sadd.s32 %s66, 1
    %p70 = scmp.eq.s32.totalorder %s11, 1
    %p71 = scmp.ne.s32.totalorder %s66, %s68
    %p72 = scmp.eq.s32.totalorder %s11, 0
    %p73 = por %p71, %p72
    %p74 = scmp.ne.s32.totalorder %s66, %s68
    %p75 = scmp.eq.s32.totalorder %s16, 1
    %p76 = por %p74, %p75
    %p77 = scmp.ne.s32.totalorder %s68, %s69
    %p78 = scmp.eq.s32.totalorder %s16, 0
    %p79 = por %p77, %p78
    %p80 = scmp.ne.s32.totalorder %s68, %s69
    %p81 = scmp.eq.s32.totalorder %s17, 1
    %p82 = por %p80, %p81
    %p84 = scmp.ne.s32.totalorder %s69, %s83
    %p85 = scmp.eq.s32.totalorder %s17, 0
    %p86 = por %p84, %p85
    %s88 = sadd.s32 %s87, 1
    %p91 = scmp.eq.s32.totalorder %s11, 1
    %p92 = scmp.ne.s32.totalorder %s87, %s89
    %p93 = scmp.eq.s32.totalorder %s11, 0
    %p94 = por %p92, %p93
    %p95 = scmp.ne.s32.totalorder %s87, %s89
    %p96 = scmp.eq.s32.totalorder %s16, 1
    %p97 = por %p95, %p96
    %p98 = scmp.ne.s32.totalorder %s89, %s90
    %p99 = scmp.eq.s32.totalorder %s16, 0
    %p100 = por %p98, %p99
    %p101 = scmp.ne.s32.totalorder %s89, %s90
    %p102 = scmp.eq.s32.totalorder %s17, 1
    %p103 = por %p101, %p102
    %p105 = scmp.ne.s32.totalorder %s90, %s104
    %p106 = scmp.eq.s32.totalorder %s17, 0
    %p107 = por %p105, %p106
    %s108 = ssub.s32 %s11, %s18
    %p109 = scmp.eq.s32.totalorder %s108, 0
    %s111 = sadd.s32 %s110, 1
    %s112 = scalar_select %p109, %s110, %s111
    %p115 = pneg %p109
    %p116 = scmp.eq.s32.totalorder %s11, 1
    %p117 = por %p115, %p116
    %p118 = scmp.ne.s32.totalorder %s110, %s113
    %p119 = scmp.eq.s32.totalorder %s11, 0
    %p120 = por %p118, %p119
    %p121 = scmp.ne.s32.totalorder %s110, %s113
    %p122 = scmp.eq.s32.totalorder %s16, 1
    %p123 = por %p121, %p122
    %p124 = scmp.ne.s32.totalorder %s113, %s114
    %p125 = scmp.eq.s32.totalorder %s16, 0
    %p126 = por %p124, %p125
    %p127 = scmp.ne.s32.totalorder %s113, %s114
    %p128 = scmp.eq.s32.totalorder %s17, 1
    %p129 = por %p127, %p128
    %p131 = scmp.ne.s32.totalorder %s114, %s130
    %p132 = scmp.eq.s32.totalorder %s17, 0
    %p133 = por %p131, %p132
    %p134 = scmp.le.s32.totalorder 1, %s11
    %p135 = scmp.lt.s32.totalorder %s11, 3
    %p136 = pnand %p134, %p135
    %p137 = pneg %p136
    // Predicated region
    $region9: #{signal_cnn_forward.1} parent=5 // pred_check
      _
    $region10: #{signal_cnn_forward.1} parent=5 // pred_check_branch
      %139 = sbr.rel (%p136) target = $region12
    $region11: #{signal_cnn_forward.1} parent=5 // pred_region
      %s140 = ssub.s32 %s11, 1
      // Predicated region
      $region13: #{signal_cnn_forward.1} parent=11 // pred_check
        %p141 = pneg %p58
      $region14: #{signal_cnn_forward.1} parent=11 // pred_check_branch
        %143 = sbr.rel (%p141) target = $region16
      $region15: #{signal_cnn_forward.1} parent=11 // pred_region
        _
      $region16: #{signal_cnn_forward.1} parent=11 // pred_fallthru
        _
      // Predicated region
      $region17: #{signal_cnn_forward.1} parent=11 // pred_check
        %p144 = pneg %p79
      $region18: #{signal_cnn_forward.1} parent=11 // pred_check_branch
        %146 = sbr.rel (%p144) target = $region20
      $region19: #{signal_cnn_forward.1} parent=11 // pred_region
        _
      $region20: #{signal_cnn_forward.1} parent=11 // pred_fallthru
        _
      // Predicated region
      $region21: #{signal_cnn_forward.1} parent=11 // pred_check
        %p147 = pneg %p100
      $region22: #{signal_cnn_forward.1} parent=11 // pred_check_branch
        %149 = sbr.rel (%p147) target = $region24
      $region23: #{signal_cnn_forward.1} parent=11 // pred_region
        _
      $region24: #{signal_cnn_forward.1} parent=11 // pred_fallthru
        _
    $region12: #{signal_cnn_forward.1} parent=5 // pred_fallthru
      _
    %p150 = scmp.lt.s32.totalorder %s11, 2
    // Predicated region
    $region25: #{signal_cnn_forward.1} parent=5 // pred_check
      %p151 = pneg %p150
    $region26: #{signal_cnn_forward.1} parent=5 // pred_check_branch
      %153 = sbr.rel (%p151) target = $region28
    $region27: #{signal_cnn_forward.1} parent=5 // pred_region
      // Predicated region
      $region29: #{signal_cnn_forward.1} parent=27 // pred_check
        %p154 = pneg %p31
      $region30: #{signal_cnn_forward.1} parent=27 // pred_check_branch
        %156 = sbr.rel (%p154) target = $region32
      $region31: #{signal_cnn_forward.1} parent=27 // pred_region
        %p157 = scmp.lt.s32.totalorder %s11, 1
        %s158 = scalar_select %p157, %s11, 1
        %s159 = smul.addr %s158, 5
        %s160 = smul.addr %s159, 8
        %s161 = scalar_lea.vmem %s0, %s160
      $region32: #{signal_cnn_forward.1} parent=27 // pred_fallthru
        _
    $region28: #{signal_cnn_forward.1} parent=5 // pred_fallthru
      _
    %p162 = scmp.le.s32.totalorder 1, %s11
    %p163 = scmp.lt.s32.totalorder %s11, 3
    %p164 = pnand %p162, %p163
    %p165 = pneg %p164
    // Predicated region
    $region33: #{signal_cnn_forward.1} parent=5 // pred_check
      _
    $region34: #{signal_cnn_forward.1} parent=5 // pred_check_branch
      %167 = sbr.rel (%p164) target = $region36
    $region35: #{signal_cnn_forward.1} parent=5 // pred_region
      %s168 = ssub.s32 %s11, 1
      %p169 = scmp.lt.s32.totalorder %s16, 1
      %s170 = scalar_select %p169, %s16, 1
      %s171 = smul.addr %s170, 5
      %s172 = smul.addr %s171, 8
      %s173 = scalar_lea.vmem %s0, %s172
      %p174 = pneg %p37
      %p175 = pneg %p34
      %p176 = pneg %p58
      %p177 = pneg %p55
      %p178 = pneg %p79
      %p179 = pneg %p76
      %p180 = pneg %p100
      %p181 = pneg %p97
      %p182 = pneg %p126
      %p183 = pneg %p123
      %p184 = scmp.lt.s32.totalorder %s16, 1
      %s185 = scalar_select %p184, %s16, 1
      %s186 = smul.addr %s185, 2
      %s187 = scalar_lea.vmem %s4, %s186
      %p188 = scmp.lt.s32.totalorder %s16, 1
      %s189 = scalar_select %p188, %s16, 1
      %s190 = smul.addr %s189, 5
      %s191 = smul.addr %s190, 8
      %s192 = scalar_lea.vmem %s0, %s191
      %p193 = scmp.lt.s32.totalorder %s16, 1
      %s194 = scalar_select %p193, %s16, 1
      %s195 = smul.addr %s194, 2
      %s196 = scalar_lea.vmem %s4, %s195
      %197 = vst [vmem:[#allocation2] sm:$0xff] 0.0
      %198 = vst [vmem:[#allocation2 + $0x28] sm:$0xff] 0.0
      %199 = vst [vmem:[#allocation2 + $0x50] sm:$0x1] 0.0
      %vm200 = vcmask 1048192
      %201 = vst.msk [vmem:[#allocation2 + $0x18] sm:$0xff] %vm200, 0.0
      %vm202 = vcmask 392192
      %203 = vst.msk [vmem:[#allocation2 + $0x20] sm:$0xff] %vm202, 0.0
      %204 = vst.msk [vmem:[#allocation2 + $0x40] sm:$0xff] %vm200, 0.0
      %205 = vst.msk [vmem:[#allocation2 + $0x48] sm:$0xff] %vm202, 0.0
      %vm206 = vcmask 1041024
      %207 = vst.msk [vmem:[#allocation2 + $0x68] sm:$0x1] %vm206, 0.0
      %vm208 = vcmask 385024
      %209 = vst.msk [vmem:[#allocation2 + $0x70] sm:$0x1] %vm208, 0.0
      %v210 = vld [vmem:[%s2] sm:$0xff]
      %v211 = vld [vmem:[%s2 + $0x8] sm:$0xff]
      %v212 = vld [vmem:[%s2 + $0x10] sm:$0x1]
      %214 = vset.pattern.permute.xlu0 0
      %215 = vperm.xlu0 %214, %v210
      %v216 = vpop.permute.xlu0 %215
      %219 = vset.pattern.permute.xlu0 0
      %220 = vperm.xlu0 %219, %v211
      %v221 = vpop.permute.xlu0 %220
      %224 = vset.pattern.permute.xlu0 0
      %225 = vperm.xlu0 %224, %v212
      %v226 = vpop.permute.xlu0 %225
      %s228 = sld [smem:[#allocation3]]
      %v229 = vstv %s228
      %v230 = vld [vmem:[%s192] sm:$0xff]
      %v231 = vld [vmem:[%s192 + $0x8] sm:$0xff]
      %v232 = vld [vmem:[%s192 + $0x10] sm:$0xff]
      %v233 = vld [vmem:[%s192 + $0x18] sm:$0xff]
      %v234 = vld [vmem:[%s192 + $0x20] sm:$0xff]
      %238 = vrot.lane.b32.xlu0 %v230, 127
      %v239 = vpop.permute.xlu0 %238
      %240 = vrot.lane.b32.xlu0 %v231, 127
      %v241 = vpop.permute.xlu0 %240
      %242 = vrot.lane.b32.xlu0 %v232, 127
      %v243 = vpop.permute.xlu0 %242
      %vm244 = vcmask 1039360
      %v245 = vsel %vm244, %v239, %v241
      %v246 = vsel %vm244, %v241, %v243
      %250 = vrot.lane.b32.xlu0 %v230, 126
      %v251 = vpop.permute.xlu0 %250
      %252 = vrot.lane.b32.xlu0 %v231, 126
      %v253 = vpop.permute.xlu0 %252
      %254 = vrot.lane.b32.xlu0 %v232, 126
      %v255 = vpop.permute.xlu0 %254
      %vm256 = vcmask 1031168
      %v257 = vsel %vm256, %v251, %v253
      %v258 = vsel %vm256, %v253, %v255
      %262 = vrot.lane.b32.xlu0 %v230, 125
      %v263 = vpop.permute.xlu0 %262
      %264 = vrot.lane.b32.xlu0 %v231, 125
      %v265 = vpop.permute.xlu0 %264
      %266 = vrot.lane.b32.xlu0 %v232, 125
      %v267 = vpop.permute.xlu0 %266
      %vm268 = vcmask 1022976
      %v269 = vsel %vm268, %v263, %v265
      %v270 = vsel %vm268, %v265, %v267
      %274 = vrot.lane.b32.xlu0 %v230, 124
      %v275 = vpop.permute.xlu0 %274
      %276 = vrot.lane.b32.xlu0 %v231, 124
      %v277 = vpop.permute.xlu0 %276
      %278 = vrot.lane.b32.xlu0 %v232, 124
      %v279 = vpop.permute.xlu0 %278
      %vm280 = vcmask 1014784
      %v281 = vsel %vm280, %v275, %v277
      %v282 = vsel %vm280, %v277, %v279
      %286 = vrot.lane.b32.xlu0 %v230, 123
      %v287 = vpop.permute.xlu0 %286
      %288 = vrot.lane.b32.xlu0 %v231, 123
      %v289 = vpop.permute.xlu0 %288
      %290 = vrot.lane.b32.xlu0 %v232, 123
      %v291 = vpop.permute.xlu0 %290
      %vm292 = vcmask 1006592
      %v293 = vsel %vm292, %v287, %v289
      %v294 = vsel %vm292, %v289, %v291
      %298 = vrot.lane.b32.xlu0 %v230, 122
      %v299 = vpop.permute.xlu0 %298
      %300 = vrot.lane.b32.xlu0 %v231, 122
      %v301 = vpop.permute.xlu0 %300
      %302 = vrot.lane.b32.xlu0 %v232, 122
      %v303 = vpop.permute.xlu0 %302
      %vm304 = vcmask 998400
      %v305 = vsel %vm304, %v299, %v301
      %v306 = vsel %vm304, %v301, %v303
      %310 = vrot.lane.b32.xlu0 %v230, 121
      %v311 = vpop.permute.xlu0 %310
      %312 = vrot.lane.b32.xlu0 %v231, 121
      %v313 = vpop.permute.xlu0 %312
      %314 = vrot.lane.b32.xlu0 %v232, 121
      %v315 = vpop.permute.xlu0 %314
      %vm316 = vcmask 990208
      %v317 = vsel %vm316, %v311, %v313
      %v318 = vsel %vm316, %v313, %v315
      %322 = vrot.lane.b32.xlu0 %v230, 120
      %v323 = vpop.permute.xlu0 %322
      %324 = vrot.lane.b32.xlu0 %v231, 120
      %v325 = vpop.permute.xlu0 %324
      %326 = vrot.lane.b32.xlu0 %v232, 120
      %v327 = vpop.permute.xlu0 %326
      %vm328 = vcmask 982016
      %v329 = vsel %vm328, %v323, %v325
      %v330 = vsel %vm328, %v325, %v327
      %v334 = vld [vmem:[%s1] sm:$0xff]
      %v335 = vld [vmem:[%s1 + $0x8] sm:$0xff]
      %v336 = vld [vmem:[%s1 + $0x10] sm:$0x1]
      %vm337 = vcmask 588800
      %v339 = vsel %vm337, %v334, 0
      %v342 = vsel %vm337, %v335, 0
      %v345 = vsel %vm337, %v336, 0
      %347 = vmatprep.subr.mxu0 %v231
      %348 = vmatpush1.msra.mxu0 %v230
      %349 = vmatprep.subr.mxu0 %v246
      %350 = vmatpush1.msra.mxu0 %v245
      %351 = vmatprep.subr.mxu0 %v258
      %352 = vmatpush1.msra.mxu0 %v257
      %353 = vmatprep.subr.mxu0 %v270
      %354 = vmatpush1.msra.mxu0 %v269
      %355 = vmatprep.subr.mxu0 %v282
      %356 = vmatpush1.msra.mxu0 %v281
      %357 = vmatprep.subr.mxu0 %v294
      %358 = vmatpush1.msra.mxu0 %v293
      %359 = vmatprep.subr.mxu0 %v306
      %360 = vmatpush1.msra.mxu0 %v305
      %361 = vmatprep.subr.mxu0 %v318
      %362 = vmatpush1.msra.mxu0 %v317
      %363 = vmatprep.subr.mxu0 %v330
      %364 = vmatpush1.msra.mxu0 %v329
      %365 = vmatprep.subr.mxu0 0.0
      %366 = vmatpush1.msra.mxu0 0.0
      %367 = vmatprep.subr.mxu0 0.0
      %368 = vmatpush1.msra.mxu0 0.0
      %369 = vmatprep.subr.mxu0 0.0
      %370 = vmatpush1.msra.mxu0 0.0
      %371 = vmatprep.subr.mxu0 0.0
      %372 = vmatpush1.msra.mxu0 0.0
      %373 = vmatprep.subr.mxu0 0.0
      %374 = vmatpush1.msra.mxu0 0.0
      %375 = vmatprep.subr.mxu0 0.0
      %376 = vmatpush1.msra.mxu0 0.0
      %377 = vmatprep.subr.mxu0 0.0
      %378 = vmatpush1.msra.mxu0 0.0
      %379 = vmatprep.subr.mxu0 0.0
      %380 = vmatpush1.msra.mxu0 0.0
      %381 = vmatprep.subr.mxu0 0.0
      %382 = vmatpush1.msra.mxu0 0.0
      %383 = vmatprep.subr.mxu0 0.0
      %384 = vmatpush1.msra.mxu0 0.0
      %385 = vmatprep.subr.mxu0 0.0
      %386 = vmatpush1.msra.mxu0 0.0
      %387 = vmatprep.subr.mxu0 0.0
      %388 = vmatpush1.msra.mxu0 0.0
      %389 = vmatprep.subr.mxu0 0.0
      %390 = vmatpush1.msra.mxu0 0.0
      %391 = vmatprep.subr.mxu0 0.0
      %392 = vmatpush1.msra.mxu0 0.0
      %393 = vmatprep.subr.mxu0 0.0
      %394 = vmatpush1.msra.mxu0 0.0
      %395 = vmatprep.subr.mxu0 0.0
      %396 = vmatpush1.msra.mxu0 0.0
      %397 = vmatprep.subr.mxu0 0.0
      %398 = vmatpush1.msra.mxu0 0.0
      %399 = vmatprep.subr.mxu0 0.0
      %400 = vmatpush1.msra.mxu0 0.0
      %401 = vmatprep.subr.mxu0 0.0
      %402 = vmatpush1.msra.mxu0 0.0
      %403 = vmatprep.subr.mxu0 0.0
      %404 = vmatpush1.msra.mxu0 0.0
      %405 = vmatprep.subr.mxu0 0.0
      %406 = vmatpush1.msra.mxu0 0.0
      %407 = vmatprep.subr.mxu0 0.0
      %408 = vmatpush1.msra.mxu0 0.0
      %409 = vmatprep.subr.mxu0 0.0
      %410 = vmatpush1.msra.mxu0 0.0
      %411 = vmatprep.mubr.f32.mxu0 0.0
      %412 = vmatmul.mubr.f32.gmra.mrb[0].mxu0 %v339
      %v413 = vpop.f32.mrb[0].mxu0
      %v414 = vadd.f32 0.0, %v413
      %v415 = vpop.f32.mrb[0].mxu0
      %v416 = vadd.f32 0.0, %v415
      %417 = vmatprep.mubr.f32.mxu0 0.0
      %418 = vmatmul.mubr.f32.gmra.mrb[0].mxu0 %v342
      %v419 = vpop.f32.mrb[0].mxu0
      %v420 = vadd.f32 0.0, %v419
      %v421 = vpop.f32.mrb[0].mxu0
      %v422 = vadd.f32 0.0, %v421
      %423 = vmatprep.mubr.f32.mxu0 0.0
      %424 = vmatmul.mubr.f32.gmra.mrb[0].mxu0 %v345
      %v425 = vpop.f32.mrb[0].mxu0
      %v426 = vadd.f32 0.0, %v425
      %v427 = vpop.f32.mrb[0].mxu0
      %v428 = vadd.f32 0.0, %v427
      %429 = vdwg.mxu0
      %430 = vmatprep.subr.mxu0 0.0
      %431 = vmatpush1.msra.mxu0 %v232
      %432 = vmatprep.subr.mxu0 0.0
      %433 = vmatpush1.msra.mxu0 %v243
      %434 = vmatprep.subr.mxu0 0.0
      %435 = vmatpush1.msra.mxu0 %v255
      %436 = vmatprep.subr.mxu0 0.0
      %437 = vmatpush1.msra.mxu0 %v267
      %438 = vmatprep.subr.mxu0 0.0
      %439 = vmatpush1.msra.mxu0 %v279
      %440 = vmatprep.subr.mxu0 0.0
      %441 = vmatpush1.msra.mxu0 %v291
      %442 = vmatprep.subr.mxu0 0.0
      %443 = vmatpush1.msra.mxu0 %v303
      %444 = vmatprep.subr.mxu0 0.0
      %445 = vmatpush1.msra.mxu0 %v315
      %446 = vmatprep.subr.mxu0 0.0
      %447 = vmatpush1.msra.mxu0 %v327
      %448 = vmatprep.subr.mxu0 0.0
      %449 = vmatpush1.msra.mxu0 0.0
      %450 = vmatprep.subr.mxu0 0.0
      %451 = vmatpush1.msra.mxu0 0.0
      %452 = vmatprep.subr.mxu0 0.0
      %453 = vmatpush1.msra.mxu0 0.0
      %454 = vmatprep.subr.mxu0 0.0
      %455 = vmatpush1.msra.mxu0 0.0
      %456 = vmatprep.subr.mxu0 0.0
      %457 = vmatpush1.msra.mxu0 0.0
      %458 = vmatprep.subr.mxu0 0.0
      %459 = vmatpush1.msra.mxu0 0.0
      %460 = vmatprep.subr.mxu0 0.0
      %461 = vmatpush1.msra.mxu0 0.0
      %462 = vmatprep.subr.mxu0 0.0
      %463 = vmatpush1.msra.mxu0 0.0
      %464 = vmatprep.subr.mxu0 0.0
      %465 = vmatpush1.msra.mxu0 0.0
      %466 = vmatprep.subr.mxu0 0.0
      %467 = vmatpush1.msra.mxu0 0.0
      %468 = vmatprep.subr.mxu0 0.0
      %469 = vmatpush1.msra.mxu0 0.0
      %470 = vmatprep.subr.mxu0 0.0
      %471 = vmatpush1.msra.mxu0 0.0
      %472 = vmatprep.subr.mxu0 0.0
      %473 = vmatpush1.msra.mxu0 0.0
      %474 = vmatprep.subr.mxu0 0.0
      %475 = vmatpush1.msra.mxu0 0.0
      %476 = vmatprep.subr.mxu0 0.0
      %477 = vmatpush1.msra.mxu0 0.0
      %478 = vmatprep.subr.mxu0 0.0
      %479 = vmatpush1.msra.mxu0 0.0
      %480 = vmatprep.subr.mxu0 0.0
      %481 = vmatpush1.msra.mxu0 0.0
      %482 = vmatprep.subr.mxu0 0.0
      %483 = vmatpush1.msra.mxu0 0.0
      %484 = vmatprep.subr.mxu0 0.0
      %485 = vmatpush1.msra.mxu0 0.0
      %486 = vmatprep.subr.mxu0 0.0
      %487 = vmatpush1.msra.mxu0 0.0
      %488 = vmatprep.subr.mxu0 0.0
      %489 = vmatpush1.msra.mxu0 0.0
      %490 = vmatprep.subr.mxu0 0.0
      %491 = vmatpush1.msra.mxu0 0.0
      %492 = vmatprep.subr.mxu0 0.0
      %493 = vmatpush1.msra.mxu0 0.0
      %494 = vmatprep.mubr.f32.mxu0 0.0
      %495 = vmatmul.mubr.f32.gmra.mrb[0].mxu0 %v339
      %v496 = vpop.f32.mrb[0].mxu0
      %v497 = vadd.f32 0.0, %v496
      %v498 = vpop.f32.mrb[0].mxu0
      %499 = vmatprep.mubr.f32.mxu0 0.0
      %500 = vmatmul.mubr.f32.gmra.mrb[0].mxu0 %v342
      %v501 = vpop.f32.mrb[0].mxu0
      %v502 = vadd.f32 0.0, %v501
      %v503 = vpop.f32.mrb[0].mxu0
      %504 = vmatprep.mubr.f32.mxu0 0.0
      %505 = vmatmul.mubr.f32.gmra.mrb[0].mxu0 %v345
      %v506 = vpop.f32.mrb[0].mxu0
      %v507 = vadd.f32 0.0, %v506
      %v508 = vpop.f32.mrb[0].mxu0
      %509 = vdwg.mxu0
      %v510 = vadd.f32 %v216, %v414
      %v511 = vadd.f32 %v216, %v416
      %v512 = vadd.f32 %v216, %v497
      %v513 = vadd.f32 %v221, %v420
      %v514 = vadd.f32 %v221, %v422
      %v515 = vadd.f32 %v221, %v502
      %v516 = vadd.f32 %v226, %v426
      %v517 = vadd.f32 %v226, %v428
      %v518 = vadd.f32 %v226, %v507
      %s519 = scalar_lea.vmem %s1, 24
      %v520 = vld [vmem:[%s519] sm:$0xff]
      %v521 = vld [vmem:[%s519 + $0x8] sm:$0xff]
      %v522 = vld [vmem:[%s519 + $0x10] sm:$0x1]
      %523 = vrot.lane.b32.xlu0 %v230, 104
      %v524 = vpop.permute.xlu0 %523
      %525 = vrot.lane.b32.xlu0 %v231, 104
      %v526 = vpop.permute.xlu0 %525
      %527 = vrot.lane.b32.xlu0 %v232, 104
      %v528 = vpop.permute.xlu0 %527
      %529 = vrot.lane.b32.xlu0 %v245, 104
      %v530 = vpop.permute.xlu0 %529
      %531 = vrot.lane.b32.xlu0 %v246, 104
      %v532 = vpop.permute.xlu0 %531
      %533 = vrot.lane.b32.xlu0 %v243, 104
      %v534 = vpop.permute.xlu0 %533
      %535 = vrot.lane.b32.xlu0 %v257, 104
      %v536 = vpop.permute.xlu0 %535
      %537 = vrot.lane.b32.xlu0 %v258, 104
      %v538 = vpop.permute.xlu0 %537
      %539 = vrot.lane.b32.xlu0 %v255, 104
      %v540 = vpop.permute.xlu0 %539
      %541 = vrot.lane.b32.xlu0 %v269, 104
      %v542 = vpop.permute.xlu0 %541
      %543 = vrot.lane.b32.xlu0 %v270, 104
      %v544 = vpop.permute.xlu0 %543
      %545 = vrot.lane.b32.xlu0 %v267, 104
      %v546 = vpop.permute.xlu0 %545
      %547 = vrot.lane.b32.xlu0 %v281, 104
      %v548 = vpop.permute.xlu0 %547
      %549 = vrot.lane.b32.xlu0 %v282, 104
      %v550 = vpop.permute.xlu0 %549
      %551 = vrot.lane.b32.xlu0 %v279, 104
      %v552 = vpop.permute.xlu0 %551
      %553 = vrot.lane.b32.xlu0 %v293, 104
      %v554 = vpop.permute.xlu0 %553
      %555 = vrot.lane.b32.xlu0 %v294, 104
      %v556 = vpop.permute.xlu0 %555
      %557 = vrot.lane.b32.xlu0 %v291, 104
      %v558 = vpop.permute.xlu0 %557
      %559 = vrot.lane.b32.xlu0 %v305, 104
      %v560 = vpop.permute.xlu0 %559
      %561 = vrot.lane.b32.xlu0 %v306, 104
      %v562 = vpop.permute.xlu0 %561
      %563 = vrot.lane.b32.xlu0 %v303, 104
      %v564 = vpop.permute.xlu0 %563
      %565 = vrot.lane.b32.xlu0 %v317, 104
      %v566 = vpop.permute.xlu0 %565
      %567 = vrot.lane.b32.xlu0 %v318, 104
      %v568 = vpop.permute.xlu0 %567
      %569 = vrot.lane.b32.xlu0 %v315, 104
      %v570 = vpop.permute.xlu0 %569
      %571 = vrot.lane.b32.xlu0 %v329, 104
      %v572 = vpop.permute.xlu0 %571
      %573 = vrot.lane.b32.xlu0 %v330, 104
      %v574 = vpop.permute.xlu0 %573
      %575 = vrot.lane.b32.xlu0 %v327, 104
      %v576 = vpop.permute.xlu0 %575
      %vm577 = vcmask 850944
      %v578 = vsel %vm577, %v524, %v526
      %v579 = vsel %vm577, %v526, %v528
      %v580 = vsel %vm577, %v530, %v532
      %v581 = vsel %vm577, %v532, %v534
      %v582 = vsel %vm577, %v536, %v538
      %v583 = vsel %vm577, %v538, %v540
      %v584 = vsel %vm577, %v542, %v544
      %v585 = vsel %vm577, %v544, %v546
      %v586 = vsel %vm577, %v548, %v550
      %v587 = vsel %vm577, %v550, %v552
      %v588 = vsel %vm577, %v554, %v556
      %v589 = vsel %vm577, %v556, %v558
      %v590 = vsel %vm577, %v560, %v562
      %v591 = vsel %vm577, %v562, %v564
      %v592 = vsel %vm577, %v566, %v568
      %v593 = vsel %vm577, %v568, %v570
      %v594 = vsel %vm577, %v572, %v574
      %v595 = vsel %vm577, %v574, %v576
      %v624 = vsel %vm337, %v520, 0
      %v627 = vsel %vm337, %v521, 0
      %v630 = vsel %vm337, %v522, 0
      %632 = vmatprep.subr.mxu0 %v579
      %633 = vmatpush1.msra.mxu0 %v578
      %634 = vmatprep.subr.mxu0 %v581
      %635 = vmatpush1.msra.mxu0 %v580
      %636 = vmatprep.subr.mxu0 %v583
      %637 = vmatpush1.msra.mxu0 %v582
      %638 = vmatprep.subr.mxu0 %v585
      %639 = vmatpush1.msra.mxu0 %v584
      %640 = vmatprep.subr.mxu0 %v587
      %641 = vmatpush1.msra.mxu0 %v586
      %642 = vmatprep.subr.mxu0 %v589
      %643 = vmatpush1.msra.mxu0 %v588
      %644 = vmatprep.subr.mxu0 %v591
      %645 = vmatpush1.msra.mxu0 %v590
      %646 = vmatprep.subr.mxu0 %v593
      %647 = vmatpush1.msra.mxu0 %v592
      %648 = vmatprep.subr.mxu0 %v595
      %649 = vmatpush1.msra.mxu0 %v594
      %650 = vmatprep.subr.mxu0 0.0
      %651 = vmatpush1.msra.mxu0 0.0
      %652 = vmatprep.subr.mxu0 0.0
      %653 = vmatpush1.msra.mxu0 0.0
      %654 = vmatprep.subr.mxu0 0.0
      %655 = vmatpush1.msra.mxu0 0.0
      %656 = vmatprep.subr.mxu0 0.0
      %657 = vmatpush1.msra.mxu0 0.0
      %658 = vmatprep.subr.mxu0 0.0
      %659 = vmatpush1.msra.mxu0 0.0
      %660 = vmatprep.subr.mxu0 0.0
      %661 = vmatpush1.msra.mxu0 0.0
      %662 = vmatprep.subr.mxu0 0.0
      %663 = vmatpush1.msra.mxu0 0.0
      %664 = vmatprep.subr.mxu0 0.0
      %665 = vmatpush1.msra.mxu0 0.0
      %666 = vmatprep.subr.mxu0 0.0
      %667 = vmatpush1.msra.mxu0 0.0
      %668 = vmatprep.subr.mxu0 0.0
      %669 = vmatpush1.msra.mxu0 0.0
      %670 = vmatprep.subr.mxu0 0.0
      %671 = vmatpush1.msra.mxu0 0.0
      %672 = vmatprep.subr.mxu0 0.0
      %673 = vmatpush1.msra.mxu0 0.0
      %674 = vmatprep.subr.mxu0 0.0
      %675 = vmatpush1.msra.mxu0 0.0
      %676 = vmatprep.subr.mxu0 0.0
      %677 = vmatpush1.msra.mxu0 0.0
      %678 = vmatprep.subr.mxu0 0.0
      %679 = vmatpush1.msra.mxu0 0.0
      %680 = vmatprep.subr.mxu0 0.0
      %681 = vmatpush1.msra.mxu0 0.0
      %682 = vmatprep.subr.mxu0 0.0
      %683 = vmatpush1.msra.mxu0 0.0
      %684 = vmatprep.subr.mxu0 0.0
      %685 = vmatpush1.msra.mxu0 0.0
      %686 = vmatprep.subr.mxu0 0.0
      %687 = vmatpush1.msra.mxu0 0.0
      %688 = vmatprep.subr.mxu0 0.0
      %689 = vmatpush1.msra.mxu0 0.0
      %690 = vmatprep.subr.mxu0 0.0
      %691 = vmatpush1.msra.mxu0 0.0
      %692 = vmatprep.subr.mxu0 0.0
      %693 = vmatpush1.msra.mxu0 0.0
      %694 = vmatprep.subr.mxu0 0.0
      %695 = vmatpush1.msra.mxu0 0.0
      %696 = vmatprep.mubr.f32.mxu0 0.0
      %697 = vmatmul.mubr.f32.gmra.mrb[0].mxu0 %v624
      %v698 = vpop.f32.mrb[0].mxu0
      %v699 = vadd.f32 0.0, %v698
      %v700 = vpop.f32.mrb[0].mxu0
      %v701 = vadd.f32 0.0, %v700
      %702 = vmatprep.mubr.f32.mxu0 0.0
      %703 = vmatmul.mubr.f32.gmra.mrb[0].mxu0 %v627
      %v704 = vpop.f32.mrb[0].mxu0
      %v705 = vadd.f32 0.0, %v704
      %v706 = vpop.f32.mrb[0].mxu0
      %v707 = vadd.f32 0.0, %v706
      %708 = vmatprep.mubr.f32.mxu0 0.0
      %709 = vmatmul.mubr.f32.gmra.mrb[0].mxu0 %v630
      %v710 = vpop.f32.mrb[0].mxu0
      %v711 = vadd.f32 0.0, %v710
      %v712 = vpop.f32.mrb[0].mxu0
      %v713 = vadd.f32 0.0, %v712
      %714 = vdwg.mxu0
      %715 = vmatprep.subr.mxu0 0.0
      %716 = vmatpush1.msra.mxu0 %v528
      %717 = vmatprep.subr.mxu0 0.0
      %718 = vmatpush1.msra.mxu0 %v534
      %719 = vmatprep.subr.mxu0 0.0
      %720 = vmatpush1.msra.mxu0 %v540
      %721 = vmatprep.subr.mxu0 0.0
      %722 = vmatpush1.msra.mxu0 %v546
      %723 = vmatprep.subr.mxu0 0.0
      %724 = vmatpush1.msra.mxu0 %v552
      %725 = vmatprep.subr.mxu0 0.0
      %726 = vmatpush1.msra.mxu0 %v558
      %727 = vmatprep.subr.mxu0 0.0
      %728 = vmatpush1.msra.mxu0 %v564
      %729 = vmatprep.subr.mxu0 0.0
      %730 = vmatpush1.msra.mxu0 %v570
      %731 = vmatprep.subr.mxu0 0.0
      %732 = vmatpush1.msra.mxu0 %v576
      %733 = vmatprep.subr.mxu0 0.0
      %734 = vmatpush1.msra.mxu0 0.0
      %735 = vmatprep.subr.mxu0 0.0
      %736 = vmatpush1.msra.mxu0 0.0
      %737 = vmatprep.subr.mxu0 0.0
      %738 = vmatpush1.msra.mxu0 0.0
      %739 = vmatprep.subr.mxu0 0.0
      %740 = vmatpush1.msra.mxu0 0.0
      %741 = vmatprep.subr.mxu0 0.0
      %742 = vmatpush1.msra.mxu0 0.0
      %743 = vmatprep.subr.mxu0 0.0
      %744 = vmatpush1.msra.mxu0 0.0
      %745 = vmatprep.subr.mxu0 0.0
      %746 = vmatpush1.msra.mxu0 0.0
      %747 = vmatprep.subr.mxu0 0.0
      %748 = vmatpush1.msra.mxu0 0.0
      %749 = vmatprep.subr.mxu0 0.0
      %750 = vmatpush1.msra.mxu0 0.0
      %751 = vmatprep.subr.mxu0 0.0
      %752 = vmatpush1.msra.mxu0 0.0
      %753 = vmatprep.subr.mxu0 0.0
      %754 = vmatpush1.msra.mxu0 0.0
      %755 = vmatprep.subr.mxu0 0.0
      %756 = vmatpush1.msra.mxu0 0.0
      %757 = vmatprep.subr.mxu0 0.0
      %758 = vmatpush1.msra.mxu0 0.0
      %759 = vmatprep.subr.mxu0 0.0
      %760 = vmatpush1.msra.mxu0 0.0
      %761 = vmatprep.subr.mxu0 0.0
      %762 = vmatpush1.msra.mxu0 0.0
      %763 = vmatprep.subr.mxu0 0.0
      %764 = vmatpush1.msra.mxu0 0.0
      %765 = vmatprep.subr.mxu0 0.0
      %766 = vmatpush1.msra.mxu0 0.0
      %767 = vmatprep.subr.mxu0 0.0
      %768 = vmatpush1.msra.mxu0 0.0
      %769 = vmatprep.subr.mxu0 0.0
      %770 = vmatpush1.msra.mxu0 0.0
      %771 = vmatprep.subr.mxu0 0.0
      %772 = vmatpush1.msra.mxu0 0.0
      %773 = vmatprep.subr.mxu0 0.0
      %774 = vmatpush1.msra.mxu0 0.0
      %775 = vmatprep.subr.mxu0 0.0
      %776 = vmatpush1.msra.mxu0 0.0
      %777 = vmatprep.subr.mxu0 0.0
      %778 = vmatpush1.msra.mxu0 0.0
      %779 = vmatprep.mubr.f32.mxu0 0.0
      %780 = vmatmul.mubr.f32.gmra.mrb[0].mxu0 %v624
      %v781 = vpop.f32.mrb[0].mxu0
      %v782 = vadd.f32 0.0, %v781
      %v783 = vpop.f32.mrb[0].mxu0
      %784 = vmatprep.mubr.f32.mxu0 0.0
      %785 = vmatmul.mubr.f32.gmra.mrb[0].mxu0 %v627
      %v786 = vpop.f32.mrb[0].mxu0
      %v787 = vadd.f32 0.0, %v786
      %v788 = vpop.f32.mrb[0].mxu0
      %789 = vmatprep.mubr.f32.mxu0 0.0
      %790 = vmatmul.mubr.f32.gmra.mrb[0].mxu0 %v630
      %v791 = vpop.f32.mrb[0].mxu0
      %v792 = vadd.f32 0.0, %v791
      %v793 = vpop.f32.mrb[0].mxu0
      %794 = vdwg.mxu0
      %v795 = vadd.f32 %v510, %v699
      %v796 = vadd.f32 %v511, %v701
      %v797 = vadd.f32 %v512, %v782
      %v798 = vadd.f32 %v513, %v705
      %v799 = vadd.f32 %v514, %v707
      %v800 = vadd.f32 %v515, %v787
      %v801 = vadd.f32 %v516, %v711
      %v802 = vadd.f32 %v517, %v713
      %v803 = vadd.f32 %v518, %v792
      %805 = vrot.lane.b32.xlu0 %v233, 127
      %v806 = vpop.permute.xlu0 %805
      %v807 = vsel %vm244, %v243, %v806
      %808 = vrot.lane.b32.xlu0 %v233, 126
      %v809 = vpop.permute.xlu0 %808
      %v810 = vsel %vm256, %v255, %v809
      %811 = vrot.lane.b32.xlu0 %v233, 125
      %v812 = vpop.permute.xlu0 %811
      %v813 = vsel %vm268, %v267, %v812
      %814 = vrot.lane.b32.xlu0 %v233, 124
      %v815 = vpop.permute.xlu0 %814
      %v816 = vsel %vm280, %v279, %v815
      %817 = vrot.lane.b32.xlu0 %v233, 123
      %v818 = vpop.permute.xlu0 %817
      %v819 = vsel %vm292, %v291, %v818
      %820 = vrot.lane.b32.xlu0 %v233, 122
      %v821 = vpop.permute.xlu0 %820
      %v822 = vsel %vm304, %v303, %v821
      %823 = vrot.lane.b32.xlu0 %v233, 121
      %v824 = vpop.permute.xlu0 %823
      %v825 = vsel %vm316, %v315, %v824
      %826 = vrot.lane.b32.xlu0 %v233, 120
      %v827 = vpop.permute.xlu0 %826
      %v828 = vsel %vm328, %v327, %v827
      %s829 = scalar_lea.vmem %s1, 48
      %v830 = vld [vmem:[%s829] sm:$0xff]
      %v831 = vld [vmem:[%s829 + $0x8] sm:$0xff]
      %v832 = vld [vmem:[%s829 + $0x10] sm:$0x1]
      %833 = vrot.lane.b32.xlu0 %v230, 80
      %v834 = vpop.permute.xlu0 %833
      %835 = vrot.lane.b32.xlu0 %v231, 80
      %v836 = vpop.permute.xlu0 %835
      %837 = vrot.lane.b32.xlu0 %v232, 80
      %v838 = vpop.permute.xlu0 %837
      %839 = vrot.lane.b32.xlu0 %v245, 80
      %v840 = vpop.permute.xlu0 %839
      %841 = vrot.lane.b32.xlu0 %v246, 80
      %v842 = vpop.permute.xlu0 %841
      %843 = vrot.lane.b32.xlu0 %v807, 80
      %v844 = vpop.permute.xlu0 %843
      %845 = vrot.lane.b32.xlu0 %v257, 80
      %v846 = vpop.permute.xlu0 %845
      %847 = vrot.lane.b32.xlu0 %v258, 80
      %v848 = vpop.permute.xlu0 %847
      %849 = vrot.lane.b32.xlu0 %v810, 80
      %v850 = vpop.permute.xlu0 %849
      %851 = vrot.lane.b32.xlu0 %v269, 80
      %v852 = vpop.permute.xlu0 %851
      %853 = vrot.lane.b32.xlu0 %v270, 80
      %v854 = vpop.permute.xlu0 %853
      %855 = vrot.lane.b32.xlu0 %v813, 80
      %v856 = vpop.permute.xlu0 %855
      %857 = vrot.lane.b32.xlu0 %v281, 80
      %v858 = vpop.permute.xlu0 %857
      %859 = vrot.lane.b32.xlu0 %v282, 80
      %v860 = vpop.permute.xlu0 %859
      %861 = vrot.lane.b32.xlu0 %v816, 80
      %v862 = vpop.permute.xlu0 %861
      %863 = vrot.lane.b32.xlu0 %v293, 80
      %v864 = vpop.permute.xlu0 %863
      %865 = vrot.lane.b32.xlu0 %v294, 80
      %v866 = vpop.permute.xlu0 %865
      %867 = vrot.lane.b32.xlu0 %v819, 80
      %v868 = vpop.permute.xlu0 %867
      %869 = vrot.lane.b32.xlu0 %v305, 80
      %v870 = vpop.permute.xlu0 %869
      %871 = vrot.lane.b32.xlu0 %v306, 80
      %v872 = vpop.permute.xlu0 %871
      %873 = vrot.lane.b32.xlu0 %v822, 80
      %v874 = vpop.permute.xlu0 %873
      %875 = vrot.lane.b32.xlu0 %v317, 80
      %v876 = vpop.permute.xlu0 %875
      %877 = vrot.lane.b32.xlu0 %v318, 80
      %v878 = vpop.permute.xlu0 %877
      %879 = vrot.lane.b32.xlu0 %v825, 80
      %v880 = vpop.permute.xlu0 %879
      %881 = vrot.lane.b32.xlu0 %v329, 80
      %v882 = vpop.permute.xlu0 %881
      %883 = vrot.lane.b32.xlu0 %v330, 80
      %v884 = vpop.permute.xlu0 %883
      %885 = vrot.lane.b32.xlu0 %v828, 80
      %v886 = vpop.permute.xlu0 %885
      %vm887 = vcmask 654336
      %v888 = vsel %vm887, %v834, %v836
      %v889 = vsel %vm887, %v836, %v838
      %v890 = vsel %vm887, %v840, %v842
      %v891 = vsel %vm887, %v842, %v844
      %v892 = vsel %vm887, %v846, %v848
      %v893 = vsel %vm887, %v848, %v850
      %v894 = vsel %vm887, %v852, %v854
      %v895 = vsel %vm887, %v854, %v856
      %v896 = vsel %vm887, %v858, %v860
      %v897 = vsel %vm887, %v860, %v862
      %v898 = vsel %vm887, %v864, %v866
      %v899 = vsel %vm887, %v866, %v868
      %v900 = vsel %vm887, %v870, %v872
      %v901 = vsel %vm887, %v872, %v874
      %v902 = vsel %vm887, %v876, %v878
      %v903 = vsel %vm887, %v878, %v880
      %v904 = vsel %vm887, %v882, %v884
      %v905 = vsel %vm887, %v884, %v886
      %v934 = vsel %vm337, %v830, 0
      %v937 = vsel %vm337, %v831, 0
      %v940 = vsel %vm337, %v832, 0
      %942 = vmatprep.subr.mxu0 %v889
      %943 = vmatpush1.msra.mxu0 %v888
      %944 = vmatprep.subr.mxu0 %v891
      %945 = vmatpush1.msra.mxu0 %v890
      %946 = vmatprep.subr.mxu0 %v893
      %947 = vmatpush1.msra.mxu0 %v892
      %948 = vmatprep.subr.mxu0 %v895
      %949 = vmatpush1.msra.mxu0 %v894
      %950 = vmatprep.subr.mxu0 %v897
      %951 = vmatpush1.msra.mxu0 %v896
      %952 = vmatprep.subr.mxu0 %v899
      %953 = vmatpush1.msra.mxu0 %v898
      %954 = vmatprep.subr.mxu0 %v901
      %955 = vmatpush1.msra.mxu0 %v900
      %956 = vmatprep.subr.mxu0 %v903
      %957 = vmatpush1.msra.mxu0 %v902
      %958 = vmatprep.subr.mxu0 %v905
      %959 = vmatpush1.msra.mxu0 %v904
      %960 = vmatprep.subr.mxu0 0.0
      %961 = vmatpush1.msra.mxu0 0.0
      %962 = vmatprep.subr.mxu0 0.0
      %963 = vmatpush1.msra.mxu0 0.0
      %964 = vmatprep.subr.mxu0 0.0
      %965 = vmatpush1.msra.mxu0 0.0
      %966 = vmatprep.subr.mxu0 0.0
      %967 = vmatpush1.msra.mxu0 0.0
      %968 = vmatprep.subr.mxu0 0.0
      %969 = vmatpush1.msra.mxu0 0.0
      %970 = vmatprep.subr.mxu0 0.0
      %971 = vmatpush1.msra.mxu0 0.0
      %972 = vmatprep.subr.mxu0 0.0
      %973 = vmatpush1.msra.mxu0 0.0
      %974 = vmatprep.subr.mxu0 0.0
      %975 = vmatpush1.msra.mxu0 0.0
      %976 = vmatprep.subr.mxu0 0.0
      %977 = vmatpush1.msra.mxu0 0.0
      %978 = vmatprep.subr.mxu0 0.0
      %979 = vmatpush1.msra.mxu0 0.0
      %980 = vmatprep.subr.mxu0 0.0
      %981 = vmatpush1.msra.mxu0 0.0
      %982 = vmatprep.subr.mxu0 0.0
      %983 = vmatpush1.msra.mxu0 0.0
      %984 = vmatprep.subr.mxu0 0.0
      %985 = vmatpush1.msra.mxu0 0.0
      %986 = vmatprep.subr.mxu0 0.0
      %987 = vmatpush1.msra.mxu0 0.0
      %988 = vmatprep.subr.mxu0 0.0
      %989 = vmatpush1.msra.mxu0 0.0
      %990 = vmatprep.subr.mxu0 0.0
      %991 = vmatpush1.msra.mxu0 0.0
      %992 = vmatprep.subr.mxu0 0.0
      %993 = vmatpush1.msra.mxu0 0.0
      %994 = vmatprep.subr.mxu0 0.0
      %995 = vmatpush1.msra.mxu0 0.0
      %996 = vmatprep.subr.mxu0 0.0
      %997 = vmatpush1.msra.mxu0 0.0
      %998 = vmatprep.subr.mxu0 0.0
      %999 = vmatpush1.msra.mxu0 0.0
      %1000 = vmatprep.subr.mxu0 0.0
      %1001 = vmatpush1.msra.mxu0 0.0
      %1002 = vmatprep.subr.mxu0 0.0
      %1003 = vmatpush1.msra.mxu0 0.0
      %1004 = vmatprep.subr.mxu0 0.0
      %1005 = vmatpush1.msra.mxu0 0.0
      %1006 = vmatprep.mubr.f32.mxu0 0.0
      %1007 = vmatmul.mubr.f32.gmra.mrb[0].mxu0 %v934
      %v1008 = vpop.f32.mrb[0].mxu0
      %v1009 = vadd.f32 0.0, %v1008
      %v1010 = vpop.f32.mrb[0].mxu0
      %v1011 = vadd.f32 0.0, %v1010
      %1012 = vmatprep.mubr.f32.mxu0 0.0
      %1013 = vmatmul.mubr.f32.gmra.mrb[0].mxu0 %v937
      %v1014 = vpop.f32.mrb[0].mxu0
      %v1015 = vadd.f32 0.0, %v1014
      %v1016 = vpop.f32.mrb[0].mxu0
      %v1017 = vadd.f32 0.0, %v1016
      %1018 = vmatprep.mubr.f32.mxu0 0.0
      %1019 = vmatmul.mubr.f32.gmra.mrb[0].mxu0 %v940
      %v1020 = vpop.f32.mrb[0].mxu0
      %v1021 = vadd.f32 0.0, %v1020
      %v1022 = vpop.f32.mrb[0].mxu0
      %v1023 = vadd.f32 0.0, %v1022
      %1024 = vdwg.mxu0
      %1025 = vmatprep.subr.mxu0 0.0
      %1026 = vmatpush1.msra.mxu0 %v838
      %1027 = vmatprep.subr.mxu0 0.0
      %1028 = vmatpush1.msra.mxu0 %v844
      %1029 = vmatprep.subr.mxu0 0.0
      %1030 = vmatpush1.msra.mxu0 %v850
      %1031 = vmatprep.subr.mxu0 0.0
      %1032 = vmatpush1.msra.mxu0 %v856
      %1033 = vmatprep.subr.mxu0 0.0
      %1034 = vmatpush1.msra.mxu0 %v862
      %1035 = vmatprep.subr.mxu0 0.0
      %1036 = vmatpush1.msra.mxu0 %v868
      %1037 = vmatprep.subr.mxu0 0.0
      %1038 = vmatpush1.msra.mxu0 %v874
      %1039 = vmatprep.subr.mxu0 0.0
      %1040 = vmatpush1.msra.mxu0 %v880
      %1041 = vmatprep.subr.mxu0 0.0
      %1042 = vmatpush1.msra.mxu0 %v886
      %1043 = vmatprep.subr.mxu0 0.0
      %1044 = vmatpush1.msra.mxu0 0.0
      %1045 = vmatprep.subr.mxu0 0.0
      %1046 = vmatpush1.msra.mxu0 0.0
      %1047 = vmatprep.subr.mxu0 0.0
      %1048 = vmatpush1.msra.mxu0 0.0
      %1049 = vmatprep.subr.mxu0 0.0
      %1050 = vmatpush1.msra.mxu0 0.0
      %1051 = vmatprep.subr.mxu0 0.0
      %1052 = vmatpush1.msra.mxu0 0.0
      %1053 = vmatprep.subr.mxu0 0.0
      %1054 = vmatpush1.msra.mxu0 0.0
      %1055 = vmatprep.subr.mxu0 0.0
      %1056 = vmatpush1.msra.mxu0 0.0
      %1057 = vmatprep.subr.mxu0 0.0
      %1058 = vmatpush1.msra.mxu0 0.0
      %1059 = vmatprep.subr.mxu0 0.0
      %1060 = vmatpush1.msra.mxu0 0.0
      %1061 = vmatprep.subr.mxu0 0.0
      %1062 = vmatpush1.msra.mxu0 0.0
      %1063 = vmatprep.subr.mxu0 0.0
      %1064 = vmatpush1.msra.mxu0 0.0
      %1065 = vmatprep.subr.mxu0 0.0
      %1066 = vmatpush1.msra.mxu0 0.0
      %1067 = vmatprep.subr.mxu0 0.0
      %1068 = vmatpush1.msra.mxu0 0.0
      %1069 = vmatprep.subr.mxu0 0.0
      %1070 = vmatpush1.msra.mxu0 0.0
      %1071 = vmatprep.subr.mxu0 0.0
      %1072 = vmatpush1.msra.mxu0 0.0
      %1073 = vmatprep.subr.mxu0 0.0
      %1074 = vmatpush1.msra.mxu0 0.0
      %1075 = vmatprep.subr.mxu0 0.0
      %1076 = vmatpush1.msra.mxu0 0.0
      %1077 = vmatprep.subr.mxu0 0.0
      %1078 = vmatpush1.msra.mxu0 0.0
      %1079 = vmatprep.subr.mxu0 0.0
      %1080 = vmatpush1.msra.mxu0 0.0
      %1081 = vmatprep.subr.mxu0 0.0
      %1082 = vmatpush1.msra.mxu0 0.0
      %1083 = vmatprep.subr.mxu0 0.0
      %1084 = vmatpush1.msra.mxu0 0.0
      %1085 = vmatprep.subr.mxu0 0.0
      %1086 = vmatpush1.msra.mxu0 0.0
      %1087 = vmatprep.subr.mxu0 0.0
      %1088 = vmatpush1.msra.mxu0 0.0
      %1089 = vmatprep.mubr.f32.mxu0 0.0
      %1090 = vmatmul.mubr.f32.gmra.mrb[0].mxu0 %v934
      %v1091 = vpop.f32.mrb[0].mxu0
      %v1092 = vadd.f32 0.0, %v1091
      %v1093 = vpop.f32.mrb[0].mxu0
      %1094 = vmatprep.mubr.f32.mxu0 0.0
      %1095 = vmatmul.mubr.f32.gmra.mrb[0].mxu0 %v937
      %v1096 = vpop.f32.mrb[0].mxu0
      %v1097 = vadd.f32 0.0, %v1096
      %v1098 = vpop.f32.mrb[0].mxu0
      %1099 = vmatprep.mubr.f32.mxu0 0.0
      %1100 = vmatmul.mubr.f32.gmra.mrb[0].mxu0 %v940
      %v1101 = vpop.f32.mrb[0].mxu0
      %v1102 = vadd.f32 0.0, %v1101
      %v1103 = vpop.f32.mrb[0].mxu0
      %1104 = vdwg.mxu0
      %v1105 = vadd.f32 %v795, %v1009
      %v1106 = vadd.f32 %v796, %v1011
      %v1107 = vadd.f32 %v797, %v1092
      %v1108 = vadd.f32 %v798, %v1015
      %v1109 = vadd.f32 %v799, %v1017
      %v1110 = vadd.f32 %v800, %v1097
      %v1111 = vadd.f32 %v801, %v1021
      %v1112 = vadd.f32 %v802, %v1023
      %v1113 = vadd.f32 %v803, %v1102
      %s1114 = scalar_lea.vmem %s1, 72
      %v1115 = vld [vmem:[%s1114] sm:$0xff]
      %v1116 = vld [vmem:[%s1114 + $0x8] sm:$0xff]
      %v1117 = vld [vmem:[%s1114 + $0x10] sm:$0x1]
      %1118 = vrot.lane.b32.xlu0 %v230, 56
      %v1119 = vpop.permute.xlu0 %1118
      %1120 = vrot.lane.b32.xlu0 %v231, 56
      %v1121 = vpop.permute.xlu0 %1120
      %1122 = vrot.lane.b32.xlu0 %v232, 56
      %v1123 = vpop.permute.xlu0 %1122
      %1124 = vrot.lane.b32.xlu0 %v233, 56
      %v1125 = vpop.permute.xlu0 %1124
      %1126 = vrot.lane.b32.xlu0 %v245, 56
      %v1127 = vpop.permute.xlu0 %1126
      %1128 = vrot.lane.b32.xlu0 %v246, 56
      %v1129 = vpop.permute.xlu0 %1128
      %1130 = vrot.lane.b32.xlu0 %v807, 56
      %v1131 = vpop.permute.xlu0 %1130
      %1132 = vrot.lane.b32.xlu0 %v806, 56
      %v1133 = vpop.permute.xlu0 %1132
      %1134 = vrot.lane.b32.xlu0 %v257, 56
      %v1135 = vpop.permute.xlu0 %1134
      %1136 = vrot.lane.b32.xlu0 %v258, 56
      %v1137 = vpop.permute.xlu0 %1136
      %1138 = vrot.lane.b32.xlu0 %v810, 56
      %v1139 = vpop.permute.xlu0 %1138
      %1140 = vrot.lane.b32.xlu0 %v809, 56
      %v1141 = vpop.permute.xlu0 %1140
      %1142 = vrot.lane.b32.xlu0 %v269, 56
      %v1143 = vpop.permute.xlu0 %1142
      %1144 = vrot.lane.b32.xlu0 %v270, 56
      %v1145 = vpop.permute.xlu0 %1144
      %1146 = vrot.lane.b32.xlu0 %v813, 56
      %v1147 = vpop.permute.xlu0 %1146
      %1148 = vrot.lane.b32.xlu0 %v812, 56
      %v1149 = vpop.permute.xlu0 %1148
      %1150 = vrot.lane.b32.xlu0 %v281, 56
      %v1151 = vpop.permute.xlu0 %1150
      %1152 = vrot.lane.b32.xlu0 %v282, 56
      %v1153 = vpop.permute.xlu0 %1152
      %1154 = vrot.lane.b32.xlu0 %v816, 56
      %v1155 = vpop.permute.xlu0 %1154
      %1156 = vrot.lane.b32.xlu0 %v815, 56
      %v1157 = vpop.permute.xlu0 %1156
      %1158 = vrot.lane.b32.xlu0 %v293, 56
      %v1159 = vpop.permute.xlu0 %1158
      %1160 = vrot.lane.b32.xlu0 %v294, 56
      %v1161 = vpop.permute.xlu0 %1160
      %1162 = vrot.lane.b32.xlu0 %v819, 56
      %v1163 = vpop.permute.xlu0 %1162
      %1164 = vrot.lane.b32.xlu0 %v818, 56
      %v1165 = vpop.permute.xlu0 %1164
      %1166 = vrot.lane.b32.xlu0 %v305, 56
      %v1167 = vpop.permute.xlu0 %1166
      %1168 = vrot.lane.b32.xlu0 %v306, 56
      %v1169 = vpop.permute.xlu0 %1168
      %1170 = vrot.lane.b32.xlu0 %v822, 56
      %v1171 = vpop.permute.xlu0 %1170
      %1172 = vrot.lane.b32.xlu0 %v821, 56
      %v1173 = vpop.permute.xlu0 %1172
      %1174 = vrot.lane.b32.xlu0 %v317, 56
      %v1175 = vpop.permute.xlu0 %1174
      %1176 = vrot.lane.b32.xlu0 %v318, 56
      %v1177 = vpop.permute.xlu0 %1176
      %1178 = vrot.lane.b32.xlu0 %v825, 56
      %v1179 = vpop.permute.xlu0 %1178
      %1180 = vrot.lane.b32.xlu0 %v824, 56
      %v1181 = vpop.permute.xlu0 %1180
      %1182 = vrot.lane.b32.xlu0 %v329, 56
      %v1183 = vpop.permute.xlu0 %1182
      %1184 = vrot.lane.b32.xlu0 %v330, 56
      %v1185 = vpop.permute.xlu0 %1184
      %1186 = vrot.lane.b32.xlu0 %v828, 56
      %v1187 = vpop.permute.xlu0 %1186
      %1188 = vrot.lane.b32.xlu0 %v827, 56
      %v1189 = vpop.permute.xlu0 %1188
      %vm1190 = vcmask 457728
      %v1191 = vsel %vm1190, %v1119, %v1121
      %v1192 = vsel %vm1190, %v1121, %v1123
      %v1193 = vsel %vm1190, %v1123, %v1125
      %v1194 = vsel %vm1190, %v1127, %v1129
      %v1195 = vsel %vm1190, %v1129, %v1131
      %v1196 = vsel %vm1190, %v1131, %v1133
      %v1197 = vsel %vm1190, %v1135, %v1137
      %v1198 = vsel %vm1190, %v1137, %v1139
      %v1199 = vsel %vm1190, %v1139, %v1141
      %v1200 = vsel %vm1190, %v1143, %v1145
      %v1201 = vsel %vm1190, %v1145, %v1147
      %v1202 = vsel %vm1190, %v1147, %v1149
      %v1203 = vsel %vm1190, %v1151, %v1153
      %v1204 = vsel %vm1190, %v1153, %v1155
      %v1205 = vsel %vm1190, %v1155, %v1157
      %v1206 = vsel %vm1190, %v1159, %v1161
      %v1207 = vsel %vm1190, %v1161, %v1163
      %v1208 = vsel %vm1190, %v1163, %v1165
      %v1209 = vsel %vm1190, %v1167, %v1169
      %v1210 = vsel %vm1190, %v1169, %v1171
      %v1211 = vsel %vm1190, %v1171, %v1173
      %v1212 = vsel %vm1190, %v1175, %v1177
      %v1213 = vsel %vm1190, %v1177, %v1179
      %v1214 = vsel %vm1190, %v1179, %v1181
      %v1215 = vsel %vm1190, %v1183, %v1185
      %v1216 = vsel %vm1190, %v1185, %v1187
      %v1217 = vsel %vm1190, %v1187, %v1189
      %v1246 = vsel %vm337, %v1115, 0
      %v1249 = vsel %vm337, %v1116, 0
      %v1252 = vsel %vm337, %v1117, 0
      %1254 = vmatprep.subr.mxu0 %v1192
      %1255 = vmatpush1.msra.mxu0 %v1191
      %1256 = vmatprep.subr.mxu0 %v1195
      %1257 = vmatpush1.msra.mxu0 %v1194
      %1258 = vmatprep.subr.mxu0 %v1198
      %1259 = vmatpush1.msra.mxu0 %v1197
      %1260 = vmatprep.subr.mxu0 %v1201
      %1261 = vmatpush1.msra.mxu0 %v1200
      %1262 = vmatprep.subr.mxu0 %v1204
      %1263 = vmatpush1.msra.mxu0 %v1203
      %1264 = vmatprep.subr.mxu0 %v1207
      %1265 = vmatpush1.msra.mxu0 %v1206
      %1266 = vmatprep.subr.mxu0 %v1210
      %1267 = vmatpush1.msra.mxu0 %v1209
      %1268 = vmatprep.subr.mxu0 %v1213
      %1269 = vmatpush1.msra.mxu0 %v1212
      %1270 = vmatprep.subr.mxu0 %v1216
      %1271 = vmatpush1.msra.mxu0 %v1215
      %1272 = vmatprep.subr.mxu0 0.0
      %1273 = vmatpush1.msra.mxu0 0.0
      %1274 = vmatprep.subr.mxu0 0.0
      %1275 = vmatpush1.msra.mxu0 0.0
      %1276 = vmatprep.subr.mxu0 0.0
      %1277 = vmatpush1.msra.mxu0 0.0
      %1278 = vmatprep.subr.mxu0 0.0
      %1279 = vmatpush1.msra.mxu0 0.0
      %1280 = vmatprep.subr.mxu0 0.0
      %1281 = vmatpush1.msra.mxu0 0.0
      %1282 = vmatprep.subr.mxu0 0.0
      %1283 = vmatpush1.msra.mxu0 0.0
      %1284 = vmatprep.subr.mxu0 0.0
      %1285 = vmatpush1.msra.mxu0 0.0
      %1286 = vmatprep.subr.mxu0 0.0
      %1287 = vmatpush1.msra.mxu0 0.0
      %1288 = vmatprep.subr.mxu0 0.0
      %1289 = vmatpush1.msra.mxu0 0.0
      %1290 = vmatprep.subr.mxu0 0.0
      %1291 = vmatpush1.msra.mxu0 0.0
      %1292 = vmatprep.subr.mxu0 0.0
      %1293 = vmatpush1.msra.mxu0 0.0
      %1294 = vmatprep.subr.mxu0 0.0
      %1295 = vmatpush1.msra.mxu0 0.0
      %1296 = vmatprep.subr.mxu0 0.0
      %1297 = vmatpush1.msra.mxu0 0.0
      %1298 = vmatprep.subr.mxu0 0.0
      %1299 = vmatpush1.msra.mxu0 0.0
      %1300 = vmatprep.subr.mxu0 0.0
      %1301 = vmatpush1.msra.mxu0 0.0
      %1302 = vmatprep.subr.mxu0 0.0
      %1303 = vmatpush1.msra.mxu0 0.0
      %1304 = vmatprep.subr.mxu0 0.0
      %1305 = vmatpush1.msra.mxu0 0.0
      %1306 = vmatprep.subr.mxu0 0.0
      %1307 = vmatpush1.msra.mxu0 0.0
      %1308 = vmatprep.subr.mxu0 0.0
      %1309 = vmatpush1.msra.mxu0 0.0
      %1310 = vmatprep.subr.mxu0 0.0
      %1311 = vmatpush1.msra.mxu0 0.0
      %1312 = vmatprep.subr.mxu0 0.0
      %1313 = vmatpush1.msra.mxu0 0.0
      %1314 = vmatprep.subr.mxu0 0.0
      %1315 = vmatpush1.msra.mxu0 0.0
      %1316 = vmatprep.subr.mxu0 0.0
      %1317 = vmatpush1.msra.mxu0 0.0
      %1318 = vmatprep.mubr.f32.mxu0 0.0
      %1319 = vmatmul.mubr.f32.gmra.mrb[0].mxu0 %v1246
      %v1320 = vpop.f32.mrb[0].mxu0
      %v1321 = vadd.f32 0.0, %v1320
      %v1322 = vpop.f32.mrb[0].mxu0
      %v1323 = vadd.f32 0.0, %v1322
      %1324 = vmatprep.mubr.f32.mxu0 0.0
      %1325 = vmatmul.mubr.f32.gmra.mrb[0].mxu0 %v1249
      %v1326 = vpop.f32.mrb[0].mxu0
      %v1327 = vadd.f32 0.0, %v1326
      %v1328 = vpop.f32.mrb[0].mxu0
      %v1329 = vadd.f32 0.0, %v1328
      %1330 = vmatprep.mubr.f32.mxu0 0.0
      %1331 = vmatmul.mubr.f32.gmra.mrb[0].mxu0 %v1252
      %v1332 = vpop.f32.mrb[0].mxu0
      %v1333 = vadd.f32 0.0, %v1332
      %v1334 = vpop.f32.mrb[0].mxu0
      %v1335 = vadd.f32 0.0, %v1334
      %1336 = vdwg.mxu0
      %1337 = vmatprep.subr.mxu0 0.0
      %1338 = vmatpush1.msra.mxu0 %v1193
      %1339 = vmatprep.subr.mxu0 0.0
      %1340 = vmatpush1.msra.mxu0 %v1196
      %1341 = vmatprep.subr.mxu0 0.0
      %1342 = vmatpush1.msra.mxu0 %v1199
      %1343 = vmatprep.subr.mxu0 0.0
      %1344 = vmatpush1.msra.mxu0 %v1202
      %1345 = vmatprep.subr.mxu0 0.0
      %1346 = vmatpush1.msra.mxu0 %v1205
      %1347 = vmatprep.subr.mxu0 0.0
      %1348 = vmatpush1.msra.mxu0 %v1208
      %1349 = vmatprep.subr.mxu0 0.0
      %1350 = vmatpush1.msra.mxu0 %v1211
      %1351 = vmatprep.subr.mxu0 0.0
      %1352 = vmatpush1.msra.mxu0 %v1214
      %1353 = vmatprep.subr.mxu0 0.0
      %1354 = vmatpush1.msra.mxu0 %v1217
      %1355 = vmatprep.subr.mxu0 0.0
      %1356 = vmatpush1.msra.mxu0 0.0
      %1357 = vmatprep.subr.mxu0 0.0
      %1358 = vmatpush1.msra.mxu0 0.0
      %1359 = vmatprep.subr.mxu0 0.0
      %1360 = vmatpush1.msra.mxu0 0.0
      %1361 = vmatprep.subr.mxu0 0.0
      %1362 = vmatpush1.msra.mxu0 0.0
      %1363 = vmatprep.subr.mxu0 0.0
      %1364 = vmatpush1.msra.mxu0 0.0
      %1365 = vmatprep.subr.mxu0 0.0
      %1366 = vmatpush1.msra.mxu0 0.0
      %1367 = vmatprep.subr.mxu0 0.0
      %1368 = vmatpush1.msra.mxu0 0.0
      %1369 = vmatprep.subr.mxu0 0.0
      %1370 = vmatpush1.msra.mxu0 0.0
      %1371 = vmatprep.subr.mxu0 0.0
      %1372 = vmatpush1.msra.mxu0 0.0
      %1373 = vmatprep.subr.mxu0 0.0
      %1374 = vmatpush1.msra.mxu0 0.0
      %1375 = vmatprep.subr.mxu0 0.0
      %1376 = vmatpush1.msra.mxu0 0.0
      %1377 = vmatprep.subr.mxu0 0.0
      %1378 = vmatpush1.msra.mxu0 0.0
      %1379 = vmatprep.subr.mxu0 0.0
      %1380 = vmatpush1.msra.mxu0 0.0
      %1381 = vmatprep.subr.mxu0 0.0
      %1382 = vmatpush1.msra.mxu0 0.0
      %1383 = vmatprep.subr.mxu0 0.0
      %1384 = vmatpush1.msra.mxu0 0.0
      %1385 = vmatprep.subr.mxu0 0.0
      %1386 = vmatpush1.msra.mxu0 0.0
      %1387 = vmatprep.subr.mxu0 0.0
      %1388 = vmatpush1.msra.mxu0 0.0
      %1389 = vmatprep.subr.mxu0 0.0
      %1390 = vmatpush1.msra.mxu0 0.0
      %1391 = vmatprep.subr.mxu0 0.0
      %1392 = vmatpush1.msra.mxu0 0.0
      %1393 = vmatprep.subr.mxu0 0.0
      %1394 = vmatpush1.msra.mxu0 0.0
      %1395 = vmatprep.subr.mxu0 0.0
      %1396 = vmatpush1.msra.mxu0 0.0
      %1397 = vmatprep.subr.mxu0 0.0
      %1398 = vmatpush1.msra.mxu0 0.0
      %1399 = vmatprep.subr.mxu0 0.0
      %1400 = vmatpush1.msra.mxu0 0.0
      %1401 = vmatprep.mubr.f32.mxu0 0.0
      %1402 = vmatmul.mubr.f32.gmra.mrb[0].mxu0 %v1246
      %v1403 = vpop.f32.mrb[0].mxu0
      %v1404 = vadd.f32 0.0, %v1403
      %v1405 = vpop.f32.mrb[0].mxu0
      %1406 = vmatprep.mubr.f32.mxu0 0.0
      %1407 = vmatmul.mubr.f32.gmra.mrb[0].mxu0 %v1249
      %v1408 = vpop.f32.mrb[0].mxu0
      %v1409 = vadd.f32 0.0, %v1408
      %v1410 = vpop.f32.mrb[0].mxu0
      %1411 = vmatprep.mubr.f32.mxu0 0.0
      %1412 = vmatmul.mubr.f32.gmra.mrb[0].mxu0 %v1252
      %v1413 = vpop.f32.mrb[0].mxu0
      %v1414 = vadd.f32 0.0, %v1413
      %v1415 = vpop.f32.mrb[0].mxu0
      %1416 = vdwg.mxu0
      %v1417 = vadd.f32 %v1105, %v1321
      %v1418 = vadd.f32 %v1106, %v1323
      %v1419 = vadd.f32 %v1107, %v1404
      %v1420 = vadd.f32 %v1108, %v1327
      %v1421 = vadd.f32 %v1109, %v1329
      %v1422 = vadd.f32 %v1110, %v1409
      %v1423 = vadd.f32 %v1111, %v1333
      %v1424 = vadd.f32 %v1112, %v1335
      %v1425 = vadd.f32 %v1113, %v1414
      %s1426 = scalar_lea.vmem %s1, 96
      %v1427 = vld [vmem:[%s1426] sm:$0xff]
      %v1428 = vld [vmem:[%s1426 + $0x8] sm:$0xff]
      %v1429 = vld [vmem:[%s1426 + $0x10] sm:$0x1]
      %1430 = vrot.lane.b32.xlu0 %v230, 32
      %v1431 = vpop.permute.xlu0 %1430
      %1432 = vrot.lane.b32.xlu0 %v231, 32
      %v1433 = vpop.permute.xlu0 %1432
      %1434 = vrot.lane.b32.xlu0 %v232, 32
      %v1435 = vpop.permute.xlu0 %1434
      %1436 = vrot.lane.b32.xlu0 %v233, 32
      %v1437 = vpop.permute.xlu0 %1436
      %1438 = vrot.lane.b32.xlu0 %v245, 32
      %v1439 = vpop.permute.xlu0 %1438
      %1440 = vrot.lane.b32.xlu0 %v246, 32
      %v1441 = vpop.permute.xlu0 %1440
      %1442 = vrot.lane.b32.xlu0 %v807, 32
      %v1443 = vpop.permute.xlu0 %1442
      %1444 = vrot.lane.b32.xlu0 %v806, 32
      %v1445 = vpop.permute.xlu0 %1444
      %1446 = vrot.lane.b32.xlu0 %v257, 32
      %v1447 = vpop.permute.xlu0 %1446
      %1448 = vrot.lane.b32.xlu0 %v258, 32
      %v1449 = vpop.permute.xlu0 %1448
      %1450 = vrot.lane.b32.xlu0 %v810, 32
      %v1451 = vpop.permute.xlu0 %1450
      %1452 = vrot.lane.b32.xlu0 %v809, 32
      %v1453 = vpop.permute.xlu0 %1452
      %1454 = vrot.lane.b32.xlu0 %v269, 32
      %v1455 = vpop.permute.xlu0 %1454
      %1456 = vrot.lane.b32.xlu0 %v270, 32
      %v1457 = vpop.permute.xlu0 %1456
      %1458 = vrot.lane.b32.xlu0 %v813, 32
      %v1459 = vpop.permute.xlu0 %1458
      %1460 = vrot.lane.b32.xlu0 %v812, 32
      %v1461 = vpop.permute.xlu0 %1460
      %1462 = vrot.lane.b32.xlu0 %v281, 32
      %v1463 = vpop.permute.xlu0 %1462
      %1464 = vrot.lane.b32.xlu0 %v282, 32
      %v1465 = vpop.permute.xlu0 %1464
      %1466 = vrot.lane.b32.xlu0 %v816, 32
      %v1467 = vpop.permute.xlu0 %1466
      %1468 = vrot.lane.b32.xlu0 %v815, 32
      %v1469 = vpop.permute.xlu0 %1468
      %1470 = vrot.lane.b32.xlu0 %v293, 32
      %v1471 = vpop.permute.xlu0 %1470
      %1472 = vrot.lane.b32.xlu0 %v294, 32
      %v1473 = vpop.permute.xlu0 %1472
      %1474 = vrot.lane.b32.xlu0 %v819, 32
      %v1475 = vpop.permute.xlu0 %1474
      %1476 = vrot.lane.b32.xlu0 %v818, 32
      %v1477 = vpop.permute.xlu0 %1476
      %1478 = vrot.lane.b32.xlu0 %v305, 32
      %v1479 = vpop.permute.xlu0 %1478
      %1480 = vrot.lane.b32.xlu0 %v306, 32
      %v1481 = vpop.permute.xlu0 %1480
      %1482 = vrot.lane.b32.xlu0 %v822, 32
      %v1483 = vpop.permute.xlu0 %1482
      %1484 = vrot.lane.b32.xlu0 %v821, 32
      %v1485 = vpop.permute.xlu0 %1484
      %1486 = vrot.lane.b32.xlu0 %v317, 32
      %v1487 = vpop.permute.xlu0 %1486
      %1488 = vrot.lane.b32.xlu0 %v318, 32
      %v1489 = vpop.permute.xlu0 %1488
      %1490 = vrot.lane.b32.xlu0 %v825, 32
      %v1491 = vpop.permute.xlu0 %1490
      %1492 = vrot.lane.b32.xlu0 %v824, 32
      %v1493 = vpop.permute.xlu0 %1492
      %1494 = vrot.lane.b32.xlu0 %v329, 32
      %v1495 = vpop.permute.xlu0 %1494
      %1496 = vrot.lane.b32.xlu0 %v330, 32
      %v1497 = vpop.permute.xlu0 %1496
      %1498 = vrot.lane.b32.xlu0 %v828, 32
      %v1499 = vpop.permute.xlu0 %1498
      %1500 = vrot.lane.b32.xlu0 %v827, 32
      %v1501 = vpop.permute.xlu0 %1500
      %vm1502 = vcmask 261120
      %v1503 = vsel %vm1502, %v1431, %v1433
      %v1504 = vsel %vm1502, %v1433, %v1435
      %v1505 = vsel %vm1502, %v1435, %v1437
      %v1506 = vsel %vm1502, %v1439, %v1441
      %v1507 = vsel %vm1502, %v1441, %v1443
      %v1508 = vsel %vm1502, %v1443, %v1445
      %v1509 = vsel %vm1502, %v1447, %v1449
      %v1510 = vsel %vm1502, %v1449, %v1451
      %v1511 = vsel %vm1502, %v1451, %v1453
      %v1512 = vsel %vm1502, %v1455, %v1457
      %v1513 = vsel %vm1502, %v1457, %v1459
      %v1514 = vsel %vm1502, %v1459, %v1461
      %v1515 = vsel %vm1502, %v1463, %v1465
      %v1516 = vsel %vm1502, %v1465, %v1467
      %v1517 = vsel %vm1502, %v1467, %v1469
      %v1518 = vsel %vm1502, %v1471, %v1473
      %v1519 = vsel %vm1502, %v1473, %v1475
      %v1520 = vsel %vm1502, %v1475, %v1477
      %v1521 = vsel %vm1502, %v1479, %v1481
      %v1522 = vsel %vm1502, %v1481, %v1483
      %v1523 = vsel %vm1502, %v1483, %v1485
      %v1524 = vsel %vm1502, %v1487, %v1489
      %v1525 = vsel %vm1502, %v1489, %v1491
      %v1526 = vsel %vm1502, %v1491, %v1493
      %v1527 = vsel %vm1502, %v1495, %v1497
      %v1528 = vsel %vm1502, %v1497, %v1499
      %v1529 = vsel %vm1502, %v1499, %v1501
      %v1558 = vsel %vm337, %v1427, 0
      %v1561 = vsel %vm337, %v1428, 0
      %v1564 = vsel %vm337, %v1429, 0
      %1566 = vmatprep.subr.mxu0 %v1504
      %1567 = vmatpush1.msra.mxu0 %v1503
      %1568 = vmatprep.subr.mxu0 %v1507
      %1569 = vmatpush1.msra.mxu0 %v1506
      %1570 = vmatprep.subr.mxu0 %v1510
      %1571 = vmatpush1.msra.mxu0 %v1509
      %1572 = vmatprep.subr.mxu0 %v1513
      %1573 = vmatpush1.msra.mxu0 %v1512
      %1574 = vmatprep.subr.mxu0 %v1516
      %1575 = vmatpush1.msra.mxu0 %v1515
      %1576 = vmatprep.subr.mxu0 %v1519
      %1577 = vmatpush1.msra.mxu0 %v1518
      %1578 = vmatprep.subr.mxu0 %v1522
      %1579 = vmatpush1.msra.mxu0 %v1521
      %1580 = vmatprep.subr.mxu0 %v1525
      %1581 = vmatpush1.msra.mxu0 %v1524
      %1582 = vmatprep.subr.mxu0 %v1528
      %1583 = vmatpush1.msra.mxu0 %v1527
      %1584 = vmatprep.subr.mxu0 0.0
      %1585 = vmatpush1.msra.mxu0 0.0
      %1586 = vmatprep.subr.mxu0 0.0
      %1587 = vmatpush1.msra.mxu0 0.0
      %1588 = vmatprep.subr.mxu0 0.0
      %1589 = vmatpush1.msra.mxu0 0.0
      %1590 = vmatprep.subr.mxu0 0.0
      %1591 = vmatpush1.msra.mxu0 0.0
      %1592 = vmatprep.subr.mxu0 0.0
      %1593 = vmatpush1.msra.mxu0 0.0
      %1594 = vmatprep.subr.mxu0 0.0
      %1595 = vmatpush1.msra.mxu0 0.0
      %1596 = vmatprep.subr.mxu0 0.0
      %1597 = vmatpush1.msra.mxu0 0.0
      %1598 = vmatprep.subr.mxu0 0.0
      %1599 = vmatpush1.msra.mxu0 0.0
      %1600 = vmatprep.subr.mxu0 0.0
      %1601 = vmatpush1.msra.mxu0 0.0
      %1602 = vmatprep.subr.mxu0 0.0
      %1603 = vmatpush1.msra.mxu0 0.0
      %1604 = vmatprep.subr.mxu0 0.0
      %1605 = vmatpush1.msra.mxu0 0.0
      %1606 = vmatprep.subr.mxu0 0.0
      %1607 = vmatpush1.msra.mxu0 0.0
      %1608 = vmatprep.subr.mxu0 0.0
      %1609 = vmatpush1.msra.mxu0 0.0
      %1610 = vmatprep.subr.mxu0 0.0
      %1611 = vmatpush1.msra.mxu0 0.0
      %1612 = vmatprep.subr.mxu0 0.0
      %1613 = vmatpush1.msra.mxu0 0.0
      %1614 = vmatprep.subr.mxu0 0.0
      %1615 = vmatpush1.msra.mxu0 0.0
      %1616 = vmatprep.subr.mxu0 0.0
      %1617 = vmatpush1.msra.mxu0 0.0
      %1618 = vmatprep.subr.mxu0 0.0
      %1619 = vmatpush1.msra.mxu0 0.0
      %1620 = vmatprep.subr.mxu0 0.0
      %1621 = vmatpush1.msra.mxu0 0.0
      %1622 = vmatprep.subr.mxu0 0.0
      %1623 = vmatpush1.msra.mxu0 0.0
      %1624 = vmatprep.subr.mxu0 0.0
      %1625 = vmatpush1.msra.mxu0 0.0
      %1626 = vmatprep.subr.mxu0 0.0
      %1627 = vmatpush1.msra.mxu0 0.0
      %1628 = vmatprep.subr.mxu0 0.0
      %1629 = vmatpush1.msra.mxu0 0.0
      %1630 = vmatprep.mubr.f32.mxu0 0.0
      %1631 = vmatmul.mubr.f32.gmra.mrb[0].mxu0 %v1558
      %v1632 = vpop.f32.mrb[0].mxu0
      %v1633 = vadd.f32 0.0, %v1632
      %v1634 = vpop.f32.mrb[0].mxu0
      %v1635 = vadd.f32 0.0, %v1634
      %1636 = vmatprep.mubr.f32.mxu0 0.0
      %1637 = vmatmul.mubr.f32.gmra.mrb[0].mxu0 %v1561
      %v1638 = vpop.f32.mrb[0].mxu0
      %v1639 = vadd.f32 0.0, %v1638
      %v1640 = vpop.f32.mrb[0].mxu0
      %v1641 = vadd.f32 0.0, %v1640
      %1642 = vmatprep.mubr.f32.mxu0 0.0
      %1643 = vmatmul.mubr.f32.gmra.mrb[0].mxu0 %v1564
      %v1644 = vpop.f32.mrb[0].mxu0
      %v1645 = vadd.f32 0.0, %v1644
      %v1646 = vpop.f32.mrb[0].mxu0
      %v1647 = vadd.f32 0.0, %v1646
      %1648 = vdwg.mxu0
      %1649 = vmatprep.subr.mxu0 0.0
      %1650 = vmatpush1.msra.mxu0 %v1505
      %1651 = vmatprep.subr.mxu0 0.0
      %1652 = vmatpush1.msra.mxu0 %v1508
      %1653 = vmatprep.subr.mxu0 0.0
      %1654 = vmatpush1.msra.mxu0 %v1511
      %1655 = vmatprep.subr.mxu0 0.0
      %1656 = vmatpush1.msra.mxu0 %v1514
      %1657 = vmatprep.subr.mxu0 0.0
      %1658 = vmatpush1.msra.mxu0 %v1517
      %1659 = vmatprep.subr.mxu0 0.0
      %1660 = vmatpush1.msra.mxu0 %v1520
      %1661 = vmatprep.subr.mxu0 0.0
      %1662 = vmatpush1.msra.mxu0 %v1523
      %1663 = vmatprep.subr.mxu0 0.0
      %1664 = vmatpush1.msra.mxu0 %v1526
      %1665 = vmatprep.subr.mxu0 0.0
      %1666 = vmatpush1.msra.mxu0 %v1529
      %1667 = vmatprep.subr.mxu0 0.0
      %1668 = vmatpush1.msra.mxu0 0.0
      %1669 = vmatprep.subr.mxu0 0.0
      %1670 = vmatpush1.msra.mxu0 0.0
      %1671 = vmatprep.subr.mxu0 0.0
      %1672 = vmatpush1.msra.mxu0 0.0
      %1673 = vmatprep.subr.mxu0 0.0
      %1674 = vmatpush1.msra.mxu0 0.0
      %1675 = vmatprep.subr.mxu0 0.0
      %1676 = vmatpush1.msra.mxu0 0.0
      %1677 = vmatprep.subr.mxu0 0.0
      %1678 = vmatpush1.msra.mxu0 0.0
      %1679 = vmatprep.subr.mxu0 0.0
      %1680 = vmatpush1.msra.mxu0 0.0
      %1681 = vmatprep.subr.mxu0 0.0
      %1682 = vmatpush1.msra.mxu0 0.0
      %1683 = vmatprep.subr.mxu0 0.0
      %1684 = vmatpush1.msra.mxu0 0.0
      %1685 = vmatprep.subr.mxu0 0.0
      %1686 = vmatpush1.msra.mxu0 0.0
      %1687 = vmatprep.subr.mxu0 0.0
      %1688 = vmatpush1.msra.mxu0 0.0
      %1689 = vmatprep.subr.mxu0 0.0
      %1690 = vmatpush1.msra.mxu0 0.0
      %1691 = vmatprep.subr.mxu0 0.0
      %1692 = vmatpush1.msra.mxu0 0.0
      %1693 = vmatprep.subr.mxu0 0.0
      %1694 = vmatpush1.msra.mxu0 0.0
      %1695 = vmatprep.subr.mxu0 0.0
      %1696 = vmatpush1.msra.mxu0 0.0
      %1697 = vmatprep.subr.mxu0 0.0
      %1698 = vmatpush1.msra.mxu0 0.0
      %1699 = vmatprep.subr.mxu0 0.0
      %1700 = vmatpush1.msra.mxu0 0.0
      %1701 = vmatprep.subr.mxu0 0.0
      %1702 = vmatpush1.msra.mxu0 0.0
      %1703 = vmatprep.subr.mxu0 0.0
      %1704 = vmatpush1.msra.mxu0 0.0
      %1705 = vmatprep.subr.mxu0 0.0
      %1706 = vmatpush1.msra.mxu0 0.0
      %1707 = vmatprep.subr.mxu0 0.0
      %1708 = vmatpush1.msra.mxu0 0.0
      %1709 = vmatprep.subr.mxu0 0.0
      %1710 = vmatpush1.msra.mxu0 0.0
      %1711 = vmatprep.subr.mxu0 0.0
      %1712 = vmatpush1.msra.mxu0 0.0
      %1713 = vmatprep.mubr.f32.mxu0 0.0
      %1714 = vmatmul.mubr.f32.gmra.mrb[0].mxu0 %v1558
      %v1715 = vpop.f32.mrb[0].mxu0
      %v1716 = vadd.f32 0.0, %v1715
      %v1717 = vpop.f32.mrb[0].mxu0
      %1718 = vmatprep.mubr.f32.mxu0 0.0
      %1719 = vmatmul.mubr.f32.gmra.mrb[0].mxu0 %v1561
      %v1720 = vpop.f32.mrb[0].mxu0
      %v1721 = vadd.f32 0.0, %v1720
      %v1722 = vpop.f32.mrb[0].mxu0
      %1723 = vmatprep.mubr.f32.mxu0 0.0
      %1724 = vmatmul.mubr.f32.gmra.mrb[0].mxu0 %v1564
      %v1725 = vpop.f32.mrb[0].mxu0
      %v1726 = vadd.f32 0.0, %v1725
      %v1727 = vpop.f32.mrb[0].mxu0
      %1728 = vdwg.mxu0
      %v1729 = vadd.f32 %v1417, %v1633
      %v1730 = vadd.f32 %v1418, %v1635
      %v1731 = vadd.f32 %v1419, %v1716
      %v1732 = vadd.f32 %v1420, %v1639
      %v1733 = vadd.f32 %v1421, %v1641
      %v1734 = vadd.f32 %v1422, %v1721
      %v1735 = vadd.f32 %v1423, %v1645
      %v1736 = vadd.f32 %v1424, %v1647
      %v1737 = vadd.f32 %v1425, %v1726
      %s1738 = scalar_lea.vmem %s1, 120
      %v1739 = vld [vmem:[%s1738] sm:$0xff]
      %v1740 = vld [vmem:[%s1738 + $0x8] sm:$0xff]
      %v1741 = vld [vmem:[%s1738 + $0x10] sm:$0x1]
      %1742 = vrot.lane.b32.xlu0 %v230, 8
      %v1743 = vpop.permute.xlu0 %1742
      %1744 = vrot.lane.b32.xlu0 %v231, 8
      %v1745 = vpop.permute.xlu0 %1744
      %1746 = vrot.lane.b32.xlu0 %v232, 8
      %v1747 = vpop.permute.xlu0 %1746
      %1748 = vrot.lane.b32.xlu0 %v233, 8
      %v1749 = vpop.permute.xlu0 %1748
      %1750 = vrot.lane.b32.xlu0 %v245, 8
      %v1751 = vpop.permute.xlu0 %1750
      %1752 = vrot.lane.b32.xlu0 %v246, 8
      %v1753 = vpop.permute.xlu0 %1752
      %1754 = vrot.lane.b32.xlu0 %v807, 8
      %v1755 = vpop.permute.xlu0 %1754
      %1756 = vrot.lane.b32.xlu0 %v806, 8
      %v1757 = vpop.permute.xlu0 %1756
      %1758 = vrot.lane.b32.xlu0 %v257, 8
      %v1759 = vpop.permute.xlu0 %1758
      %1760 = vrot.lane.b32.xlu0 %v258, 8
      %v1761 = vpop.permute.xlu0 %1760
      %1762 = vrot.lane.b32.xlu0 %v810, 8
      %v1763 = vpop.permute.xlu0 %1762
      %1764 = vrot.lane.b32.xlu0 %v809, 8
      %v1765 = vpop.permute.xlu0 %1764
      %1766 = vrot.lane.b32.xlu0 %v269, 8
      %v1767 = vpop.permute.xlu0 %1766
      %1768 = vrot.lane.b32.xlu0 %v270, 8
      %v1769 = vpop.permute.xlu0 %1768
      %1770 = vrot.lane.b32.xlu0 %v813, 8
      %v1771 = vpop.permute.xlu0 %1770
      %1772 = vrot.lane.b32.xlu0 %v812, 8
      %v1773 = vpop.permute.xlu0 %1772
      %1774 = vrot.lane.b32.xlu0 %v281, 8
      %v1775 = vpop.permute.xlu0 %1774
      %1776 = vrot.lane.b32.xlu0 %v282, 8
      %v1777 = vpop.permute.xlu0 %1776
      %1778 = vrot.lane.b32.xlu0 %v816, 8
      %v1779 = vpop.permute.xlu0 %1778
      %1780 = vrot.lane.b32.xlu0 %v815, 8
      %v1781 = vpop.permute.xlu0 %1780
      %1782 = vrot.lane.b32.xlu0 %v293, 8
      %v1783 = vpop.permute.xlu0 %1782
      %1784 = vrot.lane.b32.xlu0 %v294, 8
      %v1785 = vpop.permute.xlu0 %1784
      %1786 = vrot.lane.b32.xlu0 %v819, 8
      %v1787 = vpop.permute.xlu0 %1786
      %1788 = vrot.lane.b32.xlu0 %v818, 8
      %v1789 = vpop.permute.xlu0 %1788
      %1790 = vrot.lane.b32.xlu0 %v305, 8
      %v1791 = vpop.permute.xlu0 %1790
      %1792 = vrot.lane.b32.xlu0 %v306, 8
      %v1793 = vpop.permute.xlu0 %1792
      %1794 = vrot.lane.b32.xlu0 %v822, 8
      %v1795 = vpop.permute.xlu0 %1794
      %1796 = vrot.lane.b32.xlu0 %v821, 8
      %v1797 = vpop.permute.xlu0 %1796
      %1798 = vrot.lane.b32.xlu0 %v317, 8
      %v1799 = vpop.permute.xlu0 %1798
      %1800 = vrot.lane.b32.xlu0 %v318, 8
      %v1801 = vpop.permute.xlu0 %1800
      %1802 = vrot.lane.b32.xlu0 %v825, 8
      %v1803 = vpop.permute.xlu0 %1802
      %1804 = vrot.lane.b32.xlu0 %v824, 8
      %v1805 = vpop.permute.xlu0 %1804
      %1806 = vrot.lane.b32.xlu0 %v325, 8
      %v1807 = vpop.permute.xlu0 %1806
      %1808 = vrot.lane.b32.xlu0 %v330, 8
      %v1809 = vpop.permute.xlu0 %1808
      %1810 = vrot.lane.b32.xlu0 %v828, 8
      %v1811 = vpop.permute.xlu0 %1810
      %1812 = vrot.lane.b32.xlu0 %v827, 8
      %v1813 = vpop.permute.xlu0 %1812
      %vm1814 = vcmask 64512
      %v1815 = vsel %vm1814, %v1743, %v1745
      %v1816 = vsel %vm1814, %v1745, %v1747
      %v1817 = vsel %vm1814, %v1747, %v1749
      %v1818 = vsel %vm1814, %v1751, %v1753
      %v1819 = vsel %vm1814, %v1753, %v1755
      %v1820 = vsel %vm1814, %v1755, %v1757
      %v1821 = vsel %vm1814, %v1759, %v1761
      %v1822 = vsel %vm1814, %v1761, %v1763
      %v1823 = vsel %vm1814, %v1763, %v1765
      %v1824 = vsel %vm1814, %v1767, %v1769
      %v1825 = vsel %vm1814, %v1769, %v1771
      %v1826 = vsel %vm1814, %v1771, %v1773
      %v1827 = vsel %vm1814, %v1775, %v1777
      %v1828 = vsel %vm1814, %v1777, %v1779
      %v1829 = vsel %vm1814, %v1779, %v1781
      %v1830 = vsel %vm1814, %v1783, %v1785
      %v1831 = vsel %vm1814, %v1785, %v1787
      %v1832 = vsel %vm1814, %v1787, %v1789
      %v1833 = vsel %vm1814, %v1791, %v1793
      %v1834 = vsel %vm1814, %v1793, %v1795
      %v1835 = vsel %vm1814, %v1795, %v1797
      %v1836 = vsel %vm1814, %v1799, %v1801
      %v1837 = vsel %vm1814, %v1801, %v1803
      %v1838 = vsel %vm1814, %v1803, %v1805
      %v1839 = vsel %vm1814, %v1807, %v1809
      %v1840 = vsel %vm1814, %v1809, %v1811
      %v1841 = vsel %vm1814, %v1811, %v1813
      %v1870 = vsel %vm337, %v1739, 0
      %v1873 = vsel %vm337, %v1740, 0
      %v1876 = vsel %vm337, %v1741, 0
      %1878 = vmatprep.subr.mxu0 %v1816
      %1879 = vmatpush1.msra.mxu0 %v1815
      %1880 = vmatprep.subr.mxu0 %v1819
      %1881 = vmatpush1.msra.mxu0 %v1818
      %1882 = vmatprep.subr.mxu0 %v1822
      %1883 = vmatpush1.msra.mxu0 %v1821
      %1884 = vmatprep.subr.mxu0 %v1825
      %1885 = vmatpush1.msra.mxu0 %v1824
      %1886 = vmatprep.subr.mxu0 %v1828
      %1887 = vmatpush1.msra.mxu0 %v1827
      %1888 = vmatprep.subr.mxu0 %v1831
      %1889 = vmatpush1.msra.mxu0 %v1830
      %1890 = vmatprep.subr.mxu0 %v1834
      %1891 = vmatpush1.msra.mxu0 %v1833
      %1892 = vmatprep.subr.mxu0 %v1837
      %1893 = vmatpush1.msra.mxu0 %v1836
      %1894 = vmatprep.subr.mxu0 %v1840
      %1895 = vmatpush1.msra.mxu0 %v1839
      %1896 = vmatprep.subr.mxu0 0.0
      %1897 = vmatpush1.msra.mxu0 0.0
      %1898 = vmatprep.subr.mxu0 0.0
      %1899 = vmatpush1.msra.mxu0 0.0
      %1900 = vmatprep.subr.mxu0 0.0
      %1901 = vmatpush1.msra.mxu0 0.0
      %1902 = vmatprep.subr.mxu0 0.0
      %1903 = vmatpush1.msra.mxu0 0.0
      %1904 = vmatprep.subr.mxu0 0.0
      %1905 = vmatpush1.msra.mxu0 0.0
      %1906 = vmatprep.subr.mxu0 0.0
      %1907 = vmatpush1.msra.mxu0 0.0
      %1908 = vmatprep.subr.mxu0 0.0
      %1909 = vmatpush1.msra.mxu0 0.0
      %1910 = vmatprep.subr.mxu0 0.0
      %1911 = vmatpush1.msra.mxu0 0.0
      %1912 = vmatprep.subr.mxu0 0.0
      %1913 = vmatpush1.msra.mxu0 0.0
      %1914 = vmatprep.subr.mxu0 0.0
      %1915 = vmatpush1.msra.mxu0 0.0
      %1916 = vmatprep.subr.mxu0 0.0
      %1917 = vmatpush1.msra.mxu0 0.0
      %1918 = vmatprep.subr.mxu0 0.0
      %1919 = vmatpush1.msra.mxu0 0.0
      %1920 = vmatprep.subr.mxu0 0.0
      %1921 = vmatpush1.msra.mxu0 0.0
      %1922 = vmatprep.subr.mxu0 0.0
      %1923 = vmatpush1.msra.mxu0 0.0
      %1924 = vmatprep.subr.mxu0 0.0
      %1925 = vmatpush1.msra.mxu0 0.0
      %1926 = vmatprep.subr.mxu0 0.0
      %1927 = vmatpush1.msra.mxu0 0.0
      %1928 = vmatprep.subr.mxu0 0.0
      %1929 = vmatpush1.msra.mxu0 0.0
      %1930 = vmatprep.subr.mxu0 0.0
      %1931 = vmatpush1.msra.mxu0 0.0
      %1932 = vmatprep.subr.mxu0 0.0
      %1933 = vmatpush1.msra.mxu0 0.0
      %1934 = vmatprep.subr.mxu0 0.0
      %1935 = vmatpush1.msra.mxu0 0.0
      %1936 = vmatprep.subr.mxu0 0.0
      %1937 = vmatpush1.msra.mxu0 0.0
      %1938 = vmatprep.subr.mxu0 0.0
      %1939 = vmatpush1.msra.mxu0 0.0
      %1940 = vmatprep.subr.mxu0 0.0
      %1941 = vmatpush1.msra.mxu0 0.0
      %1942 = vmatprep.mubr.f32.mxu0 0.0
      %1943 = vmatmul.mubr.f32.gmra.mrb[0].mxu0 %v1870
      %v1944 = vpop.f32.mrb[0].mxu0
      %v1945 = vadd.f32 0.0, %v1944
      %v1946 = vpop.f32.mrb[0].mxu0
      %v1947 = vadd.f32 0.0, %v1946
      %1948 = vmatprep.mubr.f32.mxu0 0.0
      %1949 = vmatmul.mubr.f32.gmra.mrb[0].mxu0 %v1873
      %v1950 = vpop.f32.mrb[0].mxu0
      %v1951 = vadd.f32 0.0, %v1950
      %v1952 = vpop.f32.mrb[0].mxu0
      %v1953 = vadd.f32 0.0, %v1952
      %1954 = vmatprep.mubr.f32.mxu0 0.0
      %1955 = vmatmul.mubr.f32.gmra.mrb[0].mxu0 %v1876
      %v1956 = vpop.f32.mrb[0].mxu0
      %v1957 = vadd.f32 0.0, %v1956
      %v1958 = vpop.f32.mrb[0].mxu0
      %v1959 = vadd.f32 0.0, %v1958
      %1960 = vdwg.mxu0
      %1961 = vmatprep.subr.mxu0 0.0
      %1962 = vmatpush1.msra.mxu0 %v1817
      %1963 = vmatprep.subr.mxu0 0.0
      %1964 = vmatpush1.msra.mxu0 %v1820
      %1965 = vmatprep.subr.mxu0 0.0
      %1966 = vmatpush1.msra.mxu0 %v1823
      %1967 = vmatprep.subr.mxu0 0.0
      %1968 = vmatpush1.msra.mxu0 %v1826
      %1969 = vmatprep.subr.mxu0 0.0
      %1970 = vmatpush1.msra.mxu0 %v1829
      %1971 = vmatprep.subr.mxu0 0.0
      %1972 = vmatpush1.msra.mxu0 %v1832
      %1973 = vmatprep.subr.mxu0 0.0
      %1974 = vmatpush1.msra.mxu0 %v1835
      %1975 = vmatprep.subr.mxu0 0.0
      %1976 = vmatpush1.msra.mxu0 %v1838
      %1977 = vmatprep.subr.mxu0 0.0
      %1978 = vmatpush1.msra.mxu0 %v1841
      %1979 = vmatprep.subr.mxu0 0.0
      %1980 = vmatpush1.msra.mxu0 0.0
      %1981 = vmatprep.subr.mxu0 0.0
      %1982 = vmatpush1.msra.mxu0 0.0
      %1983 = vmatprep.subr.mxu0 0.0
      %1984 = vmatpush1.msra.mxu0 0.0
      %1985 = vmatprep.subr.mxu0 0.0
      %1986 = vmatpush1.msra.mxu0 0.0
      %1987 = vmatprep.subr.mxu0 0.0
      %1988 = vmatpush1.msra.mxu0 0.0
      %1989 = vmatprep.subr.mxu0 0.0
      %1990 = vmatpush1.msra.mxu0 0.0
      %1991 = vmatprep.subr.mxu0 0.0
      %1992 = vmatpush1.msra.mxu0 0.0
      %1993 = vmatprep.subr.mxu0 0.0
      %1994 = vmatpush1.msra.mxu0 0.0
      %1995 = vmatprep.subr.mxu0 0.0
      %1996 = vmatpush1.msra.mxu0 0.0
      %1997 = vmatprep.subr.mxu0 0.0
      %1998 = vmatpush1.msra.mxu0 0.0
      %1999 = vmatprep.subr.mxu0 0.0
      %2000 = vmatpush1.msra.mxu0 0.0
      %2001 = vmatprep.subr.mxu0 0.0
      %2002 = vmatpush1.msra.mxu0 0.0
      %2003 = vmatprep.subr.mxu0 0.0
      %2004 = vmatpush1.msra.mxu0 0.0
      %2005 = vmatprep.subr.mxu0 0.0
      %2006 = vmatpush1.msra.mxu0 0.0
      %2007 = vmatprep.subr.mxu0 0.0
      %2008 = vmatpush1.msra.mxu0 0.0
      %2009 = vmatprep.subr.mxu0 0.0
      %2010 = vmatpush1.msra.mxu0 0.0
      %2011 = vmatprep.subr.mxu0 0.0
      %2012 = vmatpush1.msra.mxu0 0.0
      %2013 = vmatprep.subr.mxu0 0.0
      %2014 = vmatpush1.msra.mxu0 0.0
      %2015 = vmatprep.subr.mxu0 0.0
      %2016 = vmatpush1.msra.mxu0 0.0
      %2017 = vmatprep.subr.mxu0 0.0
      %2018 = vmatpush1.msra.mxu0 0.0
      %2019 = vmatprep.subr.mxu0 0.0
      %2020 = vmatpush1.msra.mxu0 0.0
      %2021 = vmatprep.subr.mxu0 0.0
      %2022 = vmatpush1.msra.mxu0 0.0
      %2023 = vmatprep.subr.mxu0 0.0
      %2024 = vmatpush1.msra.mxu0 0.0
      %2025 = vmatprep.mubr.f32.mxu0 0.0
      %2026 = vmatmul.mubr.f32.gmra.mrb[0].mxu0 %v1870
      %v2027 = vpop.f32.mrb[0].mxu0
      %v2028 = vadd.f32 0.0, %v2027
      %v2029 = vpop.f32.mrb[0].mxu0
      %2030 = vmatprep.mubr.f32.mxu0 0.0
      %2031 = vmatmul.mubr.f32.gmra.mrb[0].mxu0 %v1873
      %v2032 = vpop.f32.mrb[0].mxu0
      %v2033 = vadd.f32 0.0, %v2032
      %v2034 = vpop.f32.mrb[0].mxu0
      %2035 = vmatprep.mubr.f32.mxu0 0.0
      %2036 = vmatmul.mubr.f32.gmra.mrb[0].mxu0 %v1876
      %v2037 = vpop.f32.mrb[0].mxu0
      %v2038 = vadd.f32 0.0, %v2037
      %v2039 = vpop.f32.mrb[0].mxu0
      %2040 = vdwg.mxu0
      %v2041 = vadd.f32 %v1729, %v1945
      %v2042 = vadd.f32 %v1730, %v1947
      %v2043 = vadd.f32 %v1731, %v2028
      %v2044 = vadd.f32 %v1732, %v1951
      %v2045 = vadd.f32 %v1733, %v1953
      %v2046 = vadd.f32 %v1734, %v2033
      %v2047 = vadd.f32 %v1735, %v1957
      %v2048 = vadd.f32 %v1736, %v1959
      %v2049 = vadd.f32 %v1737, %v2038
      %s2050 = scalar_lea.vmem %s1, 144
      %v2051 = vld [vmem:[%s2050] sm:$0xff]
      %v2052 = vld [vmem:[%s2050 + $0x8] sm:$0xff]
      %v2053 = vld [vmem:[%s2050 + $0x10] sm:$0x1]
      %2054 = vrot.lane.b32.xlu0 %v231, 112
      %v2055 = vpop.permute.xlu0 %2054
      %2056 = vrot.lane.b32.xlu0 %v232, 112
      %v2057 = vpop.permute.xlu0 %2056
      %2058 = vrot.lane.b32.xlu0 %v233, 112
      %v2059 = vpop.permute.xlu0 %2058
      %2060 = vrot.lane.b32.xlu0 %v246, 112
      %v2061 = vpop.permute.xlu0 %2060
      %2062 = vrot.lane.b32.xlu0 %v807, 112
      %v2063 = vpop.permute.xlu0 %2062
      %2064 = vrot.lane.b32.xlu0 %v806, 112
      %v2065 = vpop.permute.xlu0 %2064
      %2066 = vrot.lane.b32.xlu0 %v258, 112
      %v2067 = vpop.permute.xlu0 %2066
      %2068 = vrot.lane.b32.xlu0 %v810, 112
      %v2069 = vpop.permute.xlu0 %2068
      %2070 = vrot.lane.b32.xlu0 %v809, 112
      %v2071 = vpop.permute.xlu0 %2070
      %2072 = vrot.lane.b32.xlu0 %v270, 112
      %v2073 = vpop.permute.xlu0 %2072
      %2074 = vrot.lane.b32.xlu0 %v813, 112
      %v2075 = vpop.permute.xlu0 %2074
      %2076 = vrot.lane.b32.xlu0 %v812, 112
      %v2077 = vpop.permute.xlu0 %2076
      %2078 = vrot.lane.b32.xlu0 %v282, 112
      %v2079 = vpop.permute.xlu0 %2078
      %2080 = vrot.lane.b32.xlu0 %v816, 112
      %v2081 = vpop.permute.xlu0 %2080
      %2082 = vrot.lane.b32.xlu0 %v815, 112
      %v2083 = vpop.permute.xlu0 %2082
      %2084 = vrot.lane.b32.xlu0 %v294, 112
      %v2085 = vpop.permute.xlu0 %2084
      %2086 = vrot.lane.b32.xlu0 %v819, 112
      %v2087 = vpop.permute.xlu0 %2086
      %2088 = vrot.lane.b32.xlu0 %v818, 112
      %v2089 = vpop.permute.xlu0 %2088
      %2090 = vrot.lane.b32.xlu0 %v306, 112
      %v2091 = vpop.permute.xlu0 %2090
      %2092 = vrot.lane.b32.xlu0 %v822, 112
      %v2093 = vpop.permute.xlu0 %2092
      %2094 = vrot.lane.b32.xlu0 %v821, 112
      %v2095 = vpop.permute.xlu0 %2094
      %2096 = vrot.lane.b32.xlu0 %v318, 112
      %v2097 = vpop.permute.xlu0 %2096
      %2098 = vrot.lane.b32.xlu0 %v825, 112
      %v2099 = vpop.permute.xlu0 %2098
      %2100 = vrot.lane.b32.xlu0 %v824, 112
      %v2101 = vpop.permute.xlu0 %2100
      %2102 = vrot.lane.b32.xlu0 %v330, 112
      %v2103 = vpop.permute.xlu0 %2102
      %2104 = vrot.lane.b32.xlu0 %v828, 112
      %v2105 = vpop.permute.xlu0 %2104
      %2106 = vrot.lane.b32.xlu0 %v827, 112
      %v2107 = vpop.permute.xlu0 %2106
      %vm2108 = vcmask 916480
      %v2109 = vsel %vm2108, %v2055, %v2057
      %v2110 = vsel %vm2108, %v2057, %v2059
      %v2111 = vsel %vm2108, %v2061, %v2063
      %v2112 = vsel %vm2108, %v2063, %v2065
      %v2113 = vsel %vm2108, %v2067, %v2069
      %v2114 = vsel %vm2108, %v2069, %v2071
      %v2115 = vsel %vm2108, %v2073, %v2075
      %v2116 = vsel %vm2108, %v2075, %v2077
      %v2117 = vsel %vm2108, %v2079, %v2081
      %v2118 = vsel %vm2108, %v2081, %v2083
      %v2119 = vsel %vm2108, %v2085, %v2087
      %v2120 = vsel %vm2108, %v2087, %v2089
      %v2121 = vsel %vm2108, %v2091, %v2093
      %v2122 = vsel %vm2108, %v2093, %v2095
      %v2123 = vsel %vm2108, %v2097, %v2099
      %v2124 = vsel %vm2108, %v2099, %v2101
      %v2125 = vsel %vm2108, %v2103, %v2105
      %v2126 = vsel %vm2108, %v2105, %v2107
      %v2155 = vsel %vm337, %v2051, 0
      %v2158 = vsel %vm337, %v2052, 0
      %v2161 = vsel %vm337, %v2053, 0
      %2163 = vmatprep.subr.mxu0 %v2110
      %2164 = vmatpush1.msra.mxu0 %v2109
      %2165 = vmatprep.subr.mxu0 %v2112
      %2166 = vmatpush1.msra.mxu0 %v2111
      %2167 = vmatprep.subr.mxu0 %v2114
      %2168 = vmatpush1.msra.mxu0 %v2113
      %2169 = vmatprep.subr.mxu0 %v2116
      %2170 = vmatpush1.msra.mxu0 %v2115
      %2171 = vmatprep.subr.mxu0 %v2118
      %2172 = vmatpush1.msra.mxu0 %v2117
      %2173 = vmatprep.subr.mxu0 %v2120
      %2174 = vmatpush1.msra.mxu0 %v2119
      %2175 = vmatprep.subr.mxu0 %v2122
      %2176 = vmatpush1.msra.mxu0 %v2121
      %2177 = vmatprep.subr.mxu0 %v2124
      %2178 = vmatpush1.msra.mxu0 %v2123
      %2179 = vmatprep.subr.mxu0 %v2126
      %2180 = vmatpush1.msra.mxu0 %v2125
      %2181 = vmatprep.subr.mxu0 0.0
      %2182 = vmatpush1.msra.mxu0 0.0
      %2183 = vmatprep.subr.mxu0 0.0
      %2184 = vmatpush1.msra.mxu0 0.0
      %2185 = vmatprep.subr.mxu0 0.0
      %2186 = vmatpush1.msra.mxu0 0.0
      %2187 = vmatprep.subr.mxu0 0.0
      %2188 = vmatpush1.msra.mxu0 0.0
      %2189 = vmatprep.subr.mxu0 0.0
      %2190 = vmatpush1.msra.mxu0 0.0
      %2191 = vmatprep.subr.mxu0 0.0
      %2192 = vmatpush1.msra.mxu0 0.0
      %2193 = vmatprep.subr.mxu0 0.0
      %2194 = vmatpush1.msra.mxu0 0.0
      %2195 = vmatprep.subr.mxu0 0.0
      %2196 = vmatpush1.msra.mxu0 0.0
      %2197 = vmatprep.subr.mxu0 0.0
      %2198 = vmatpush1.msra.mxu0 0.0
      %2199 = vmatprep.subr.mxu0 0.0
      %2200 = vmatpush1.msra.mxu0 0.0
      %2201 = vmatprep.subr.mxu0 0.0
      %2202 = vmatpush1.msra.mxu0 0.0
      %2203 = vmatprep.subr.mxu0 0.0
      %2204 = vmatpush1.msra.mxu0 0.0
      %2205 = vmatprep.subr.mxu0 0.0
      %2206 = vmatpush1.msra.mxu0 0.0
      %2207 = vmatprep.subr.mxu0 0.0
      %2208 = vmatpush1.msra.mxu0 0.0
      %2209 = vmatprep.subr.mxu0 0.0
      %2210 = vmatpush1.msra.mxu0 0.0
      %2211 = vmatprep.subr.mxu0 0.0
      %2212 = vmatpush1.msra.mxu0 0.0
      %2213 = vmatprep.subr.mxu0 0.0
      %2214 = vmatpush1.msra.mxu0 0.0
      %2215 = vmatprep.subr.mxu0 0.0
      %2216 = vmatpush1.msra.mxu0 0.0
      %2217 = vmatprep.subr.mxu0 0.0
      %2218 = vmatpush1.msra.mxu0 0.0
      %2219 = vmatprep.subr.mxu0 0.0
      %2220 = vmatpush1.msra.mxu0 0.0
      %2221 = vmatprep.subr.mxu0 0.0
      %2222 = vmatpush1.msra.mxu0 0.0
      %2223 = vmatprep.subr.mxu0 0.0
      %2224 = vmatpush1.msra.mxu0 0.0
      %2225 = vmatprep.subr.mxu0 0.0
      %2226 = vmatpush1.msra.mxu0 0.0
      %2227 = vmatprep.mubr.f32.mxu0 0.0
      %2228 = vmatmul.mubr.f32.gmra.mrb[0].mxu0 %v2155
      %v2229 = vpop.f32.mrb[0].mxu0
      %v2230 = vadd.f32 0.0, %v2229
      %v2231 = vpop.f32.mrb[0].mxu0
      %v2232 = vadd.f32 0.0, %v2231
      %2233 = vmatprep.mubr.f32.mxu0 0.0
      %2234 = vmatmul.mubr.f32.gmra.mrb[0].mxu0 %v2158
      %v2235 = vpop.f32.mrb[0].mxu0
      %v2236 = vadd.f32 0.0, %v2235
      %v2237 = vpop.f32.mrb[0].mxu0
      %v2238 = vadd.f32 0.0, %v2237
      %2239 = vmatprep.mubr.f32.mxu0 0.0
      %2240 = vmatmul.mubr.f32.gmra.mrb[0].mxu0 %v2161
      %v2241 = vpop.f32.mrb[0].mxu0
      %v2242 = vadd.f32 0.0, %v2241
      %v2243 = vpop.f32.mrb[0].mxu0
      %v2244 = vadd.f32 0.0, %v2243
      %2245 = vdwg.mxu0
      %2246 = vmatprep.subr.mxu0 0.0
      %2247 = vmatpush1.msra.mxu0 %v2059
      %2248 = vmatprep.subr.mxu0 0.0
      %2249 = vmatpush1.msra.mxu0 %v2065
      %2250 = vmatprep.subr.mxu0 0.0
      %2251 = vmatpush1.msra.mxu0 %v2071
      %2252 = vmatprep.subr.mxu0 0.0
      %2253 = vmatpush1.msra.mxu0 %v2077
      %2254 = vmatprep.subr.mxu0 0.0
      %2255 = vmatpush1.msra.mxu0 %v2083
      %2256 = vmatprep.subr.mxu0 0.0
      %2257 = vmatpush1.msra.mxu0 %v2089
      %2258 = vmatprep.subr.mxu0 0.0
      %2259 = vmatpush1.msra.mxu0 %v2095
      %2260 = vmatprep.subr.mxu0 0.0
      %2261 = vmatpush1.msra.mxu0 %v2101
      %2262 = vmatprep.subr.mxu0 0.0
      %2263 = vmatpush1.msra.mxu0 %v2107
      %2264 = vmatprep.subr.mxu0 0.0
      %2265 = vmatpush1.msra.mxu0 0.0
      %2266 = vmatprep.subr.mxu0 0.0
      %2267 = vmatpush1.msra.mxu0 0.0
      %2268 = vmatprep.subr.mxu0 0.0
      %2269 = vmatpush1.msra.mxu0 0.0
      %2270 = vmatprep.subr.mxu0 0.0
      %2271 = vmatpush1.msra.mxu0 0.0
      %2272 = vmatprep.subr.mxu0 0.0
      %2273 = vmatpush1.msra.mxu0 0.0
      %2274 = vmatprep.subr.mxu0 0.0
      %2275 = vmatpush1.msra.mxu0 0.0
      %2276 = vmatprep.subr.mxu0 0.0
      %2277 = vmatpush1.msra.mxu0 0.0
      %2278 = vmatprep.subr.mxu0 0.0
      %2279 = vmatpush1.msra.mxu0 0.0
      %2280 = vmatprep.subr.mxu0 0.0
      %2281 = vmatpush1.msra.mxu0 0.0
      %2282 = vmatprep.subr.mxu0 0.0
      %2283 = vmatpush1.msra.mxu0 0.0
      %2284 = vmatprep.subr.mxu0 0.0
      %2285 = vmatpush1.msra.mxu0 0.0
      %2286 = vmatprep.subr.mxu0 0.0
      %2287 = vmatpush1.msra.mxu0 0.0
      %2288 = vmatprep.subr.mxu0 0.0
      %2289 = vmatpush1.msra.mxu0 0.0
      %2290 = vmatprep.subr.mxu0 0.0
      %2291 = vmatpush1.msra.mxu0 0.0
      %2292 = vmatprep.subr.mxu0 0.0
      %2293 = vmatpush1.msra.mxu0 0.0
      %2294 = vmatprep.subr.mxu0 0.0
      %2295 = vmatpush1.msra.mxu0 0.0
      %2296 = vmatprep.subr.mxu0 0.0
      %2297 = vmatpush1.msra.mxu0 0.0
      %2298 = vmatprep.subr.mxu0 0.0
      %2299 = vmatpush1.msra.mxu0 0.0
      %2300 = vmatprep.subr.mxu0 0.0
      %2301 = vmatpush1.msra.mxu0 0.0
      %2302 = vmatprep.subr.mxu0 0.0
      %2303 = vmatpush1.msra.mxu0 0.0
      %2304 = vmatprep.subr.mxu0 0.0
      %2305 = vmatpush1.msra.mxu0 0.0
      %2306 = vmatprep.subr.mxu0 0.0
      %2307 = vmatpush1.msra.mxu0 0.0
      %2308 = vmatprep.subr.mxu0 0.0
      %2309 = vmatpush1.msra.mxu0 0.0
      %2310 = vmatprep.mubr.f32.mxu0 0.0
      %2311 = vmatmul.mubr.f32.gmra.mrb[0].mxu0 %v2155
      %v2312 = vpop.f32.mrb[0].mxu0
      %v2313 = vadd.f32 0.0, %v2312
      %v2314 = vpop.f32.mrb[0].mxu0
      %2315 = vmatprep.mubr.f32.mxu0 0.0
      %2316 = vmatmul.mubr.f32.gmra.mrb[0].mxu0 %v2158
      %v2317 = vpop.f32.mrb[0].mxu0
      %v2318 = vadd.f32 0.0, %v2317
      %v2319 = vpop.f32.mrb[0].mxu0
      %2320 = vmatprep.mubr.f32.mxu0 0.0
      %2321 = vmatmul.mubr.f32.gmra.mrb[0].mxu0 %v2161
      %v2322 = vpop.f32.mrb[0].mxu0
      %v2323 = vadd.f32 0.0, %v2322
      %v2324 = vpop.f32.mrb[0].mxu0
      %2325 = vdwg.mxu0
      %v2326 = vadd.f32 %v2041, %v2230
      %v2327 = vadd.f32 %v2042, %v2232
      %v2328 = vadd.f32 %v2043, %v2313
      %v2329 = vadd.f32 %v2044, %v2236
      %v2330 = vadd.f32 %v2045, %v2238
      %v2331 = vadd.f32 %v2046, %v2318
      %v2332 = vadd.f32 %v2047, %v2242
      %v2333 = vadd.f32 %v2048, %v2244
      %v2334 = vadd.f32 %v2049, %v2323
      %s2335 = scalar_lea.vmem %s1, 168
      %v2336 = vld [vmem:[%s2335] sm:$0xff]
      %v2337 = vld [vmem:[%s2335 + $0x8] sm:$0xff]
      %v2338 = vld [vmem:[%s2335 + $0x10] sm:$0x1]
      %2339 = vrot.lane.b32.xlu0 %v231, 88
      %v2340 = vpop.permute.xlu0 %2339
      %2341 = vrot.lane.b32.xlu0 %v232, 88
      %v2342 = vpop.permute.xlu0 %2341
      %2343 = vrot.lane.b32.xlu0 %v233, 88
      %v2344 = vpop.permute.xlu0 %2343
      %2345 = vrot.lane.b32.xlu0 %v246, 88
      %v2346 = vpop.permute.xlu0 %2345
      %2347 = vrot.lane.b32.xlu0 %v807, 88
      %v2348 = vpop.permute.xlu0 %2347
      %2349 = vrot.lane.b32.xlu0 %v806, 88
      %v2350 = vpop.permute.xlu0 %2349
      %2351 = vrot.lane.b32.xlu0 %v258, 88
      %v2352 = vpop.permute.xlu0 %2351
      %2353 = vrot.lane.b32.xlu0 %v810, 88
      %v2354 = vpop.permute.xlu0 %2353
      %2355 = vrot.lane.b32.xlu0 %v809, 88
      %v2356 = vpop.permute.xlu0 %2355
      %2357 = vrot.lane.b32.xlu0 %v270, 88
      %v2358 = vpop.permute.xlu0 %2357
      %2359 = vrot.lane.b32.xlu0 %v813, 88
      %v2360 = vpop.permute.xlu0 %2359
      %2361 = vrot.lane.b32.xlu0 %v812, 88
      %v2362 = vpop.permute.xlu0 %2361
      %2363 = vrot.lane.b32.xlu0 %v282, 88
      %v2364 = vpop.permute.xlu0 %2363
      %2365 = vrot.lane.b32.xlu0 %v816, 88
      %v2366 = vpop.permute.xlu0 %2365
      %2367 = vrot.lane.b32.xlu0 %v815, 88
      %v2368 = vpop.permute.xlu0 %2367
      %2369 = vrot.lane.b32.xlu0 %v294, 88
      %v2370 = vpop.permute.xlu0 %2369
      %2371 = vrot.lane.b32.xlu0 %v819, 88
      %v2372 = vpop.permute.xlu0 %2371
      %2373 = vrot.lane.b32.xlu0 %v818, 88
      %v2374 = vpop.permute.xlu0 %2373
      %2375 = vrot.lane.b32.xlu0 %v306, 88
      %v2376 = vpop.permute.xlu0 %2375
      %2377 = vrot.lane.b32.xlu0 %v822, 88
      %v2378 = vpop.permute.xlu0 %2377
      %2379 = vrot.lane.b32.xlu0 %v821, 88
      %v2380 = vpop.permute.xlu0 %2379
      %2381 = vrot.lane.b32.xlu0 %v318, 88
      %v2382 = vpop.permute.xlu0 %2381
      %2383 = vrot.lane.b32.xlu0 %v825, 88
      %v2384 = vpop.permute.xlu0 %2383
      %2385 = vrot.lane.b32.xlu0 %v824, 88
      %v2386 = vpop.permute.xlu0 %2385
      %2387 = vrot.lane.b32.xlu0 %v330, 88
      %v2388 = vpop.permute.xlu0 %2387
      %2389 = vrot.lane.b32.xlu0 %v828, 88
      %v2390 = vpop.permute.xlu0 %2389
      %2391 = vrot.lane.b32.xlu0 %v827, 88
      %v2392 = vpop.permute.xlu0 %2391
      %vm2393 = vcmask 719872
      %v2394 = vsel %vm2393, %v2340, %v2342
      %v2395 = vsel %vm2393, %v2342, %v2344
      %v2396 = vsel %vm2393, %v2346, %v2348
      %v2397 = vsel %vm2393, %v2348, %v2350
      %v2398 = vsel %vm2393, %v2352, %v2354
      %v2399 = vsel %vm2393, %v2354, %v2356
      %v2400 = vsel %vm2393, %v2358, %v2360
      %v2401 = vsel %vm2393, %v2360, %v2362
      %v2402 = vsel %vm2393, %v2364, %v2366
      %v2403 = vsel %vm2393, %v2366, %v2368
      %v2404 = vsel %vm2393, %v2370, %v2372
      %v2405 = vsel %vm2393, %v2372, %v2374
      %v2406 = vsel %vm2393, %v2376, %v2378
      %v2407 = vsel %vm2393, %v2378, %v2380
      %v2408 = vsel %vm2393, %v2382, %v2384
      %v2409 = vsel %vm2393, %v2384, %v2386
      %v2410 = vsel %vm2393, %v2388, %v2390
      %v2411 = vsel %vm2393, %v2390, %v2392
      %v2440 = vsel %vm337, %v2336, 0
      %v2443 = vsel %vm337, %v2337, 0
      %v2446 = vsel %vm337, %v2338, 0
      %2448 = vmatprep.subr.mxu0 %v2395
      %2449 = vmatpush1.msra.mxu0 %v2394
      %2450 = vmatprep.subr.mxu0 %v2397
      %2451 = vmatpush1.msra.mxu0 %v2396
      %2452 = vmatprep.subr.mxu0 %v2399
      %2453 = vmatpush1.msra.mxu0 %v2398
      %2454 = vmatprep.subr.mxu0 %v2401
      %2455 = vmatpush1.msra.mxu0 %v2400
      %2456 = vmatprep.subr.mxu0 %v2403
      %2457 = vmatpush1.msra.mxu0 %v2402
      %2458 = vmatprep.subr.mxu0 %v2405
      %2459 = vmatpush1.msra.mxu0 %v2404
      %2460 = vmatprep.subr.mxu0 %v2407
      %2461 = vmatpush1.msra.mxu0 %v2406
      %2462 = vmatprep.subr.mxu0 %v2409
      %2463 = vmatpush1.msra.mxu0 %v2408
      %2464 = vmatprep.subr.mxu0 %v2411
      %2465 = vmatpush1.msra.mxu0 %v2410
      %2466 = vmatprep.subr.mxu0 0.0
      %2467 = vmatpush1.msra.mxu0 0.0
      %2468 = vmatprep.subr.mxu0 0.0
      %2469 = vmatpush1.msra.mxu0 0.0
      %2470 = vmatprep.subr.mxu0 0.0
      %2471 = vmatpush1.msra.mxu0 0.0
      %2472 = vmatprep.subr.mxu0 0.0
      %2473 = vmatpush1.msra.mxu0 0.0
      %2474 = vmatprep.subr.mxu0 0.0
      %2475 = vmatpush1.msra.mxu0 0.0
      %2476 = vmatprep.subr.mxu0 0.0
      %2477 = vmatpush1.msra.mxu0 0.0
      %2478 = vmatprep.subr.mxu0 0.0
      %2479 = vmatpush1.msra.mxu0 0.0
      %2480 = vmatprep.subr.mxu0 0.0
      %2481 = vmatpush1.msra.mxu0 0.0
      %2482 = vmatprep.subr.mxu0 0.0
      %2483 = vmatpush1.msra.mxu0 0.0
      %2484 = vmatprep.subr.mxu0 0.0
      %2485 = vmatpush1.msra.mxu0 0.0
      %2486 = vmatprep.subr.mxu0 0.0
      %2487 = vmatpush1.msra.mxu0 0.0
      %2488 = vmatprep.subr.mxu0 0.0
      %2489 = vmatpush1.msra.mxu0 0.0
      %2490 = vmatprep.subr.mxu0 0.0
      %2491 = vmatpush1.msra.mxu0 0.0
      %2492 = vmatprep.subr.mxu0 0.0
      %2493 = vmatpush1.msra.mxu0 0.0
      %2494 = vmatprep.subr.mxu0 0.0
      %2495 = vmatpush1.msra.mxu0 0.0
      %2496 = vmatprep.subr.mxu0 0.0
      %2497 = vmatpush1.msra.mxu0 0.0
      %2498 = vmatprep.subr.mxu0 0.0
      %2499 = vmatpush1.msra.mxu0 0.0
      %2500 = vmatprep.subr.mxu0 0.0
      %2501 = vmatpush1.msra.mxu0 0.0
      %2502 = vmatprep.subr.mxu0 0.0
      %2503 = vmatpush1.msra.mxu0 0.0
      %2504 = vmatprep.subr.mxu0 0.0
      %2505 = vmatpush1.msra.mxu0 0.0
      %2506 = vmatprep.subr.mxu0 0.0
      %2507 = vmatpush1.msra.mxu0 0.0
      %2508 = vmatprep.subr.mxu0 0.0
      %2509 = vmatpush1.msra.mxu0 0.0
      %2510 = vmatprep.subr.mxu0 0.0
      %2511 = vmatpush1.msra.mxu0 0.0
      %2512 = vmatprep.mubr.f32.mxu0 0.0
      %2513 = vmatmul.mubr.f32.gmra.mrb[0].mxu0 %v2440
      %v2514 = vpop.f32.mrb[0].mxu0
      %v2515 = vadd.f32 0.0, %v2514
      %v2516 = vpop.f32.mrb[0].mxu0
      %v2517 = vadd.f32 0.0, %v2516
      %2518 = vmatprep.mubr.f32.mxu0 0.0
      %2519 = vmatmul.mubr.f32.gmra.mrb[0].mxu0 %v2443
      %v2520 = vpop.f32.mrb[0].mxu0
      %v2521 = vadd.f32 0.0, %v2520
      %v2522 = vpop.f32.mrb[0].mxu0
      %v2523 = vadd.f32 0.0, %v2522
      %2524 = vmatprep.mubr.f32.mxu0 0.0
      %2525 = vmatmul.mubr.f32.gmra.mrb[0].mxu0 %v2446
      %v2526 = vpop.f32.mrb[0].mxu0
      %v2527 = vadd.f32 0.0, %v2526
      %v2528 = vpop.f32.mrb[0].mxu0
      %v2529 = vadd.f32 0.0, %v2528
      %2530 = vdwg.mxu0
      %2531 = vmatprep.subr.mxu0 0.0
      %2532 = vmatpush1.msra.mxu0 %v2344
      %2533 = vmatprep.subr.mxu0 0.0
      %2534 = vmatpush1.msra.mxu0 %v2350
      %2535 = vmatprep.subr.mxu0 0.0
      %2536 = vmatpush1.msra.mxu0 %v2356
      %2537 = vmatprep.subr.mxu0 0.0
      %2538 = vmatpush1.msra.mxu0 %v2362
      %2539 = vmatprep.subr.mxu0 0.0
      %2540 = vmatpush1.msra.mxu0 %v2368
      %2541 = vmatprep.subr.mxu0 0.0
      %2542 = vmatpush1.msra.mxu0 %v2374
      %2543 = vmatprep.subr.mxu0 0.0
      %2544 = vmatpush1.msra.mxu0 %v2380
      %2545 = vmatprep.subr.mxu0 0.0
      %2546 = vmatpush1.msra.mxu0 %v2386
      %2547 = vmatprep.subr.mxu0 0.0
      %2548 = vmatpush1.msra.mxu0 %v2392
      %2549 = vmatprep.subr.mxu0 0.0
      %2550 = vmatpush1.msra.mxu0 0.0
      %2551 = vmatprep.subr.mxu0 0.0
      %2552 = vmatpush1.msra.mxu0 0.0
      %2553 = vmatprep.subr.mxu0 0.0
      %2554 = vmatpush1.msra.mxu0 0.0
      %2555 = vmatprep.subr.mxu0 0.0
      %2556 = vmatpush1.msra.mxu0 0.0
      %2557 = vmatprep.subr.mxu0 0.0
      %2558 = vmatpush1.msra.mxu0 0.0
      %2559 = vmatprep.subr.mxu0 0.0
      %2560 = vmatpush1.msra.mxu0 0.0
      %2561 = vmatprep.subr.mxu0 0.0
      %2562 = vmatpush1.msra.mxu0 0.0
      %2563 = vmatprep.subr.mxu0 0.0
      %2564 = vmatpush1.msra.mxu0 0.0
      %2565 = vmatprep.subr.mxu0 0.0
      %2566 = vmatpush1.msra.mxu0 0.0
      %2567 = vmatprep.subr.mxu0 0.0
      %2568 = vmatpush1.msra.mxu0 0.0
      %2569 = vmatprep.subr.mxu0 0.0
      %2570 = vmatpush1.msra.mxu0 0.0
      %2571 = vmatprep.subr.mxu0 0.0
      %2572 = vmatpush1.msra.mxu0 0.0
      %2573 = vmatprep.subr.mxu0 0.0
      %2574 = vmatpush1.msra.mxu0 0.0
      %2575 = vmatprep.subr.mxu0 0.0
      %2576 = vmatpush1.msra.mxu0 0.0
      %2577 = vmatprep.subr.mxu0 0.0
      %2578 = vmatpush1.msra.mxu0 0.0
      %2579 = vmatprep.subr.mxu0 0.0
      %2580 = vmatpush1.msra.mxu0 0.0
      %2581 = vmatprep.subr.mxu0 0.0
      %2582 = vmatpush1.msra.mxu0 0.0
      %2583 = vmatprep.subr.mxu0 0.0
      %2584 = vmatpush1.msra.mxu0 0.0
      %2585 = vmatprep.subr.mxu0 0.0
      %2586 = vmatpush1.msra.mxu0 0.0
      %2587 = vmatprep.subr.mxu0 0.0
      %2588 = vmatpush1.msra.mxu0 0.0
      %2589 = vmatprep.subr.mxu0 0.0
      %2590 = vmatpush1.msra.mxu0 0.0
      %2591 = vmatprep.subr.mxu0 0.0
      %2592 = vmatpush1.msra.mxu0 0.0
      %2593 = vmatprep.subr.mxu0 0.0
      %2594 = vmatpush1.msra.mxu0 0.0
      %2595 = vmatprep.mubr.f32.mxu0 0.0
      %2596 = vmatmul.mubr.f32.gmra.mrb[0].mxu0 %v2440
      %v2597 = vpop.f32.mrb[0].mxu0
      %v2598 = vadd.f32 0.0, %v2597
      %v2599 = vpop.f32.mrb[0].mxu0
      %2600 = vmatprep.mubr.f32.mxu0 0.0
      %2601 = vmatmul.mubr.f32.gmra.mrb[0].mxu0 %v2443
      %v2602 = vpop.f32.mrb[0].mxu0
      %v2603 = vadd.f32 0.0, %v2602
      %v2604 = vpop.f32.mrb[0].mxu0
      %2605 = vmatprep.mubr.f32.mxu0 0.0
      %2606 = vmatmul.mubr.f32.gmra.mrb[0].mxu0 %v2446
      %v2607 = vpop.f32.mrb[0].mxu0
      %v2608 = vadd.f32 0.0, %v2607
      %v2609 = vpop.f32.mrb[0].mxu0
      %2610 = vdwg.mxu0
      %v2611 = vadd.f32 %v2326, %v2515
      %v2612 = vadd.f32 %v2327, %v2517
      %v2613 = vadd.f32 %v2328, %v2598
      %v2614 = vadd.f32 %v2329, %v2521
      %v2615 = vadd.f32 %v2330, %v2523
      %v2616 = vadd.f32 %v2331, %v2603
      %v2617 = vadd.f32 %v2332, %v2527
      %v2618 = vadd.f32 %v2333, %v2529
      %v2619 = vadd.f32 %v2334, %v2608
      %2621 = vrot.lane.b32.xlu0 %v234, 127
      %v2622 = vpop.permute.xlu0 %2621
      %v2623 = vsel %vm244, %v806, %v2622
      %2624 = vrot.lane.b32.xlu0 %v234, 126
      %v2625 = vpop.permute.xlu0 %2624
      %v2626 = vsel %vm256, %v809, %v2625
      %2627 = vrot.lane.b32.xlu0 %v234, 125
      %v2628 = vpop.permute.xlu0 %2627
      %v2629 = vsel %vm268, %v812, %v2628
      %2630 = vrot.lane.b32.xlu0 %v234, 124
      %v2631 = vpop.permute.xlu0 %2630
      %v2632 = vsel %vm280, %v815, %v2631
      %2633 = vrot.lane.b32.xlu0 %v234, 123
      %v2634 = vpop.permute.xlu0 %2633
      %v2635 = vsel %vm292, %v818, %v2634
      %2636 = vrot.lane.b32.xlu0 %v234, 122
      %v2637 = vpop.permute.xlu0 %2636
      %v2638 = vsel %vm304, %v821, %v2637
      %2639 = vrot.lane.b32.xlu0 %v234, 121
      %v2640 = vpop.permute.xlu0 %2639
      %v2641 = vsel %vm316, %v824, %v2640
      %2642 = vrot.lane.b32.xlu0 %v234, 120
      %v2643 = vpop.permute.xlu0 %2642
      %v2644 = vsel %vm328, %v827, %v2643
      %s2645 = scalar_lea.vmem %s1, 192
      %v2646 = vld [vmem:[%s2645] sm:$0xff]
      %v2647 = vld [vmem:[%s2645 + $0x8] sm:$0xff]
      %v2648 = vld [vmem:[%s2645 + $0x10] sm:$0x1]
      %2649 = vrot.lane.b32.xlu0 %v231, 64
      %v2650 = vpop.permute.xlu0 %2649
      %2651 = vrot.lane.b32.xlu0 %v232, 64
      %v2652 = vpop.permute.xlu0 %2651
      %2653 = vrot.lane.b32.xlu0 %v233, 64
      %v2654 = vpop.permute.xlu0 %2653
      %2655 = vrot.lane.b32.xlu0 %v234, 64
      %v2656 = vpop.permute.xlu0 %2655
      %2657 = vrot.lane.b32.xlu0 %v246, 64
      %v2658 = vpop.permute.xlu0 %2657
      %2659 = vrot.lane.b32.xlu0 %v807, 64
      %v2660 = vpop.permute.xlu0 %2659
      %2661 = vrot.lane.b32.xlu0 %v2623, 64
      %v2662 = vpop.permute.xlu0 %2661
      %2663 = vrot.lane.b32.xlu0 %v2622, 64
      %v2664 = vpop.permute.xlu0 %2663
      %2665 = vrot.lane.b32.xlu0 %v258, 64
      %v2666 = vpop.permute.xlu0 %2665
      %2667 = vrot.lane.b32.xlu0 %v810, 64
      %v2668 = vpop.permute.xlu0 %2667
      %2669 = vrot.lane.b32.xlu0 %v2626, 64
      %v2670 = vpop.permute.xlu0 %2669
      %2671 = vrot.lane.b32.xlu0 %v2625, 64
      %v2672 = vpop.permute.xlu0 %2671
      %2673 = vrot.lane.b32.xlu0 %v270, 64
      %v2674 = vpop.permute.xlu0 %2673
      %2675 = vrot.lane.b32.xlu0 %v813, 64
      %v2676 = vpop.permute.xlu0 %2675
      %2677 = vrot.lane.b32.xlu0 %v2629, 64
      %v2678 = vpop.permute.xlu0 %2677
      %2679 = vrot.lane.b32.xlu0 %v2628, 64
      %v2680 = vpop.permute.xlu0 %2679
      %2681 = vrot.lane.b32.xlu0 %v282, 64
      %v2682 = vpop.permute.xlu0 %2681
      %2683 = vrot.lane.b32.xlu0 %v816, 64
      %v2684 = vpop.permute.xlu0 %2683
      %2685 = vrot.lane.b32.xlu0 %v2632, 64
      %v2686 = vpop.permute.xlu0 %2685
      %2687 = vrot.lane.b32.xlu0 %v2631, 64
      %v2688 = vpop.permute.xlu0 %2687
      %2689 = vrot.lane.b32.xlu0 %v294, 64
      %v2690 = vpop.permute.xlu0 %2689
      %2691 = vrot.lane.b32.xlu0 %v819, 64
      %v2692 = vpop.permute.xlu0 %2691
      %2693 = vrot.lane.b32.xlu0 %v2635, 64
      %v2694 = vpop.permute.xlu0 %2693
      %2695 = vrot.lane.b32.xlu0 %v2634, 64
      %v2696 = vpop.permute.xlu0 %2695
      %2697 = vrot.lane.b32.xlu0 %v306, 64
      %v2698 = vpop.permute.xlu0 %2697
      %2699 = vrot.lane.b32.xlu0 %v822, 64
      %v2700 = vpop.permute.xlu0 %2699
      %2701 = vrot.lane.b32.xlu0 %v2638, 64
      %v2702 = vpop.permute.xlu0 %2701
      %2703 = vrot.lane.b32.xlu0 %v2637, 64
      %v2704 = vpop.permute.xlu0 %2703
      %2705 = vrot.lane.b32.xlu0 %v318, 64
      %v2706 = vpop.permute.xlu0 %2705
      %2707 = vrot.lane.b32.xlu0 %v825, 64
      %v2708 = vpop.permute.xlu0 %2707
      %2709 = vrot.lane.b32.xlu0 %v2641, 64
      %v2710 = vpop.permute.xlu0 %2709
      %2711 = vrot.lane.b32.xlu0 %v2640, 64
      %v2712 = vpop.permute.xlu0 %2711
      %2713 = vrot.lane.b32.xlu0 %v330, 64
      %v2714 = vpop.permute.xlu0 %2713
      %2715 = vrot.lane.b32.xlu0 %v828, 64
      %v2716 = vpop.permute.xlu0 %2715
      %2717 = vrot.lane.b32.xlu0 %v2644, 64
      %v2718 = vpop.permute.xlu0 %2717
      %2719 = vrot.lane.b32.xlu0 %v2643, 64
      %v2720 = vpop.permute.xlu0 %2719
      %vm2721 = vcmask 523264
      %v2722 = vsel %vm2721, %v2650, %v2652
      %v2723 = vsel %vm2721, %v2652, %v2654
      %v2724 = vsel %vm2721, %v2654, %v2656
      %v2725 = vsel %vm2721, %v2658, %v2660
      %v2726 = vsel %vm2721, %v2660, %v2662
      %v2727 = vsel %vm2721, %v2662, %v2664
      %v2728 = vsel %vm2721, %v2666, %v2668
      %v2729 = vsel %vm2721, %v2668, %v2670
      %v2730 = vsel %vm2721, %v2670, %v2672
      %v2731 = vsel %vm2721, %v2674, %v2676
      %v2732 = vsel %vm2721, %v2676, %v2678
      %v2733 = vsel %vm2721, %v2678, %v2680
      %v2734 = vsel %vm2721, %v2682, %v2684
      %v2735 = vsel %vm2721, %v2684, %v2686
      %v2736 = vsel %vm2721, %v2686, %v2688
      %v2737 = vsel %vm2721, %v2690, %v2692
      %v2738 = vsel %vm2721, %v2692, %v2694
      %v2739 = vsel %vm2721, %v2694, %v2696
      %v2740 = vsel %vm2721, %v2698, %v2700
      %v2741 = vsel %vm2721, %v2700, %v2702
      %v2742 = vsel %vm2721, %v2702, %v2704
      %v2743 = vsel %vm2721, %v2706, %v2708
      %v2744 = vsel %vm2721, %v2708, %v2710
      %v2745 = vsel %vm2721, %v2710, %v2712
      %v2746 = vsel %vm2721, %v2714, %v2716
      %v2747 = vsel %vm2721, %v2716, %v2718
      %v2748 = vsel %vm2721, %v2718, %v2720
      %v2777 = vsel %vm337, %v2646, 0
      %v2780 = vsel %vm337, %v2647, 0
      %v2783 = vsel %vm337, %v2648, 0
      %2785 = vmatprep.subr.mxu0 %v2723
      %2786 = vmatpush1.msra.mxu0 %v2722
      %2787 = vmatprep.subr.mxu0 %v2726
      %2788 = vmatpush1.msra.mxu0 %v2725
      %2789 = vmatprep.subr.mxu0 %v2729
      %2790 = vmatpush1.msra.mxu0 %v2728
      %2791 = vmatprep.subr.mxu0 %v2732
      %2792 = vmatpush1.msra.mxu0 %v2731
      %2793 = vmatprep.subr.mxu0 %v2735
      %2794 = vmatpush1.msra.mxu0 %v2734
      %2795 = vmatprep.subr.mxu0 %v2738
      %2796 = vmatpush1.msra.mxu0 %v2737
      %2797 = vmatprep.subr.mxu0 %v2741
      %2798 = vmatpush1.msra.mxu0 %v2740
      %2799 = vmatprep.subr.mxu0 %v2744
      %2800 = vmatpush1.msra.mxu0 %v2743
      %2801 = vmatprep.subr.mxu0 %v2747
      %2802 = vmatpush1.msra.mxu0 %v2746
      %2803 = vmatprep.subr.mxu0 0.0
      %2804 = vmatpush1.msra.mxu0 0.0
      %2805 = vmatprep.subr.mxu0 0.0
      %2806 = vmatpush1.msra.mxu0 0.0
      %2807 = vmatprep.subr.mxu0 0.0
      %2808 = vmatpush1.msra.mxu0 0.0
      %2809 = vmatprep.subr.mxu0 0.0
      %2810 = vmatpush1.msra.mxu0 0.0
      %2811 = vmatprep.subr.mxu0 0.0
      %2812 = vmatpush1.msra.mxu0 0.0
      %2813 = vmatprep.subr.mxu0 0.0
      %2814 = vmatpush1.msra.mxu0 0.0
      %2815 = vmatprep.subr.mxu0 0.0
      %2816 = vmatpush1.msra.mxu0 0.0
      %2817 = vmatprep.subr.mxu0 0.0
      %2818 = vmatpush1.msra.mxu0 0.0
      %2819 = vmatprep.subr.mxu0 0.0
      %2820 = vmatpush1.msra.mxu0 0.0
      %2821 = vmatprep.subr.mxu0 0.0
      %2822 = vmatpush1.msra.mxu0 0.0
      %2823 = vmatprep.subr.mxu0 0.0
      %2824 = vmatpush1.msra.mxu0 0.0
      %2825 = vmatprep.subr.mxu0 0.0
      %2826 = vmatpush1.msra.mxu0 0.0
      %2827 = vmatprep.subr.mxu0 0.0
      %2828 = vmatpush1.msra.mxu0 0.0
      %2829 = vmatprep.subr.mxu0 0.0
      %2830 = vmatpush1.msra.mxu0 0.0
      %2831 = vmatprep.subr.mxu0 0.0
      %2832 = vmatpush1.msra.mxu0 0.0
      %2833 = vmatprep.subr.mxu0 0.0
      %2834 = vmatpush1.msra.mxu0 0.0
      %2835 = vmatprep.subr.mxu0 0.0
      %2836 = vmatpush1.msra.mxu0 0.0
      %2837 = vmatprep.subr.mxu0 0.0
      %2838 = vmatpush1.msra.mxu0 0.0
      %2839 = vmatprep.subr.mxu0 0.0
      %2840 = vmatpush1.msra.mxu0 0.0
      %2841 = vmatprep.subr.mxu0 0.0
      %2842 = vmatpush1.msra.mxu0 0.0
      %2843 = vmatprep.subr.mxu0 0.0
      %2844 = vmatpush1.msra.mxu0 0.0
      %2845 = vmatprep.subr.mxu0 0.0
      %2846 = vmatpush1.msra.mxu0 0.0
      %2847 = vmatprep.subr.mxu0 0.0
      %2848 = vmatpush1.msra.mxu0 0.0
      %2849 = vmatprep.mubr.f32.mxu0 0.0
      %2850 = vmatmul.mubr.f32.gmra.mrb[0].mxu0 %v2777
      %v2851 = vpop.f32.mrb[0].mxu0
      %v2852 = vadd.f32 0.0, %v2851
      %v2853 = vpop.f32.mrb[0].mxu0
      %v2854 = vadd.f32 0.0, %v2853
      %2855 = vmatprep.mubr.f32.mxu0 0.0
      %2856 = vmatmul.mubr.f32.gmra.mrb[0].mxu0 %v2780
      %v2857 = vpop.f32.mrb[0].mxu0
      %v2858 = vadd.f32 0.0, %v2857
      %v2859 = vpop.f32.mrb[0].mxu0
      %v2860 = vadd.f32 0.0, %v2859
      %2861 = vmatprep.mubr.f32.mxu0 0.0
      %2862 = vmatmul.mubr.f32.gmra.mrb[0].mxu0 %v2783
      %v2863 = vpop.f32.mrb[0].mxu0
      %v2864 = vadd.f32 0.0, %v2863
      %v2865 = vpop.f32.mrb[0].mxu0
      %v2866 = vadd.f32 0.0, %v2865
      %2867 = vdwg.mxu0
      %2868 = vmatprep.subr.mxu0 0.0
      %2869 = vmatpush1.msra.mxu0 %v2724
      %2870 = vmatprep.subr.mxu0 0.0
      %2871 = vmatpush1.msra.mxu0 %v2727
      %2872 = vmatprep.subr.mxu0 0.0
      %2873 = vmatpush1.msra.mxu0 %v2730
      %2874 = vmatprep.subr.mxu0 0.0
      %2875 = vmatpush1.msra.mxu0 %v2733
      %2876 = vmatprep.subr.mxu0 0.0
      %2877 = vmatpush1.msra.mxu0 %v2736
      %2878 = vmatprep.subr.mxu0 0.0
      %2879 = vmatpush1.msra.mxu0 %v2739
      %2880 = vmatprep.subr.mxu0 0.0
      %2881 = vmatpush1.msra.mxu0 %v2742
      %2882 = vmatprep.subr.mxu0 0.0
      %2883 = vmatpush1.msra.mxu0 %v2745
      %2884 = vmatprep.subr.mxu0 0.0
      %2885 = vmatpush1.msra.mxu0 %v2748
      %2886 = vmatprep.subr.mxu0 0.0
      %2887 = vmatpush1.msra.mxu0 0.0
      %2888 = vmatprep.subr.mxu0 0.0
      %2889 = vmatpush1.msra.mxu0 0.0
      %2890 = vmatprep.subr.mxu0 0.0
      %2891 = vmatpush1.msra.mxu0 0.0
      %2892 = vmatprep.subr.mxu0 0.0
      %2893 = vmatpush1.msra.mxu0 0.0
      %2894 = vmatprep.subr.mxu0 0.0
      %2895 = vmatpush1.msra.mxu0 0.0
      %2896 = vmatprep.subr.mxu0 0.0
      %2897 = vmatpush1.msra.mxu0 0.0
      %2898 = vmatprep.subr.mxu0 0.0
      %2899 = vmatpush1.msra.mxu0 0.0
      %2900 = vmatprep.subr.mxu0 0.0
      %2901 = vmatpush1.msra.mxu0 0.0
      %2902 = vmatprep.subr.mxu0 0.0
      %2903 = vmatpush1.msra.mxu0 0.0
      %2904 = vmatprep.subr.mxu0 0.0
      %2905 = vmatpush1.msra.mxu0 0.0
      %2906 = vmatprep.subr.mxu0 0.0
      %2907 = vmatpush1.msra.mxu0 0.0
      %2908 = vmatprep.subr.mxu0 0.0
      %2909 = vmatpush1.msra.mxu0 0.0
      %2910 = vmatprep.subr.mxu0 0.0
      %2911 = vmatpush1.msra.mxu0 0.0
      %2912 = vmatprep.subr.mxu0 0.0
      %2913 = vmatpush1.msra.mxu0 0.0
      %2914 = vmatprep.subr.mxu0 0.0
      %2915 = vmatpush1.msra.mxu0 0.0
      %2916 = vmatprep.subr.mxu0 0.0
      %2917 = vmatpush1.msra.mxu0 0.0
      %2918 = vmatprep.subr.mxu0 0.0
      %2919 = vmatpush1.msra.mxu0 0.0
      %2920 = vmatprep.subr.mxu0 0.0
      %2921 = vmatpush1.msra.mxu0 0.0
      %2922 = vmatprep.subr.mxu0 0.0
      %2923 = vmatpush1.msra.mxu0 0.0
      %2924 = vmatprep.subr.mxu0 0.0
      %2925 = vmatpush1.msra.mxu0 0.0
      %2926 = vmatprep.subr.mxu0 0.0
      %2927 = vmatpush1.msra.mxu0 0.0
      %2928 = vmatprep.subr.mxu0 0.0
      %2929 = vmatpush1.msra.mxu0 0.0
      %2930 = vmatprep.subr.mxu0 0.0
      %2931 = vmatpush1.msra.mxu0 0.0
      %2932 = vmatprep.mubr.f32.mxu0 0.0
      %2933 = vmatmul.mubr.f32.gmra.mrb[0].mxu0 %v2777
      %v2934 = vpop.f32.mrb[0].mxu0
      %v2935 = vadd.f32 0.0, %v2934
      %v2936 = vpop.f32.mrb[0].mxu0
      %2937 = vmatprep.mubr.f32.mxu0 0.0
      %2938 = vmatmul.mubr.f32.gmra.mrb[0].mxu0 %v2780
      %v2939 = vpop.f32.mrb[0].mxu0
      %v2940 = vadd.f32 0.0, %v2939
      %v2941 = vpop.f32.mrb[0].mxu0
      %2942 = vmatprep.mubr.f32.mxu0 0.0
      %2943 = vmatmul.mubr.f32.gmra.mrb[0].mxu0 %v2783
      %v2944 = vpop.f32.mrb[0].mxu0
      %v2945 = vadd.f32 0.0, %v2944
      %v2946 = vpop.f32.mrb[0].mxu0
      %2947 = vdwg.mxu0
      %v2948 = vadd.f32 %v2611, %v2852
      %v2949 = vadd.f32 %v2612, %v2854
      %v2950 = vadd.f32 %v2613, %v2935
      %v2951 = vadd.f32 %v2614, %v2858
      %v2952 = vadd.f32 %v2615, %v2860
      %v2953 = vadd.f32 %v2616, %v2940
      %v2954 = vadd.f32 %v2617, %v2864
      %v2955 = vadd.f32 %v2618, %v2866
      %v2956 = vadd.f32 %v2619, %v2945
      %2957 = vst [vmem:[#allocation2 + $0x8] sm:$0xff] %v2948
      %2958 = vst [vmem:[#allocation2 + $0x10] sm:$0xff] %v2949
      %2959 = vst.msk [vmem:[#allocation2 + $0x18] sm:$0xff] %vm887, %v2950
      %2960 = vst [vmem:[#allocation2 + $0x30] sm:$0xff] %v2951
      %2961 = vst [vmem:[#allocation2 + $0x38] sm:$0xff] %v2952
      %2962 = vst.msk [vmem:[#allocation2 + $0x40] sm:$0xff] %vm887, %v2953
      %2963 = vst [vmem:[#allocation2 + $0x58] sm:$0x1] %v2954
      %2964 = vst [vmem:[#allocation2 + $0x60] sm:$0x1] %v2955
      %vm2965 = vcmask 647168
      %2966 = vst.msk [vmem:[#allocation2 + $0x68] sm:$0x1] %vm2965, %v2956
      %v2967 = vld [vmem:[#allocation2] ss:$8 sm:$0x3]
      %v2968 = vadd.f32 %v229, %v2967
      %s2969 = scalar_lea.vmem [#allocation2], 1
      %v2970 = vld [vmem:[%s2969] ss:$8 sm:$0x3]
      %2972 = vrot.lane.b32.xlu0 %v2970, 104
      %v2973 = vpop.permute.xlu0 %2972
      %v2974 = vrot.slane %v2973, 1
      %v2975 = vsel %vm577, %v2973, %v2974
      %v2977 = vadd.f32 %v2968, %v2975
      %s2978 = scalar_lea.vmem [#allocation2], 2
      %v2979 = vld [vmem:[%s2978] ss:$8 sm:$0x3]
      %2981 = vrot.lane.b32.xlu0 %v2979, 80
      %v2982 = vpop.permute.xlu0 %2981
      %v2983 = vrot.slane %v2982, 1
      %v2984 = vsel %vm887, %v2982, %v2983
      %v2986 = vadd.f32 %v2977, %v2984
      %s2987 = scalar_lea.vmem [#allocation2], 3
      %v2988 = vld [vmem:[%s2987] ss:$8 sm:$0x3]
      %2990 = vrot.lane.b32.xlu0 %v2988, 56
      %v2991 = vpop.permute.xlu0 %2990
      %v2992 = vrot.slane %v2991, 1
      %v2993 = vsel %vm1190, %v2991, %v2992
      %v2995 = vadd.f32 %v2986, %v2993
      %s2996 = scalar_lea.vmem [#allocation2], 12
      %v2997 = vld [vmem:[%s2996] ss:$8 sm:$0x3]
      %2999 = vrot.lane.b32.xlu0 %v2997, 32
      %v3000 = vpop.permute.xlu0 %2999
      %v3001 = vrot.slane %v3000, 7
      %v3002 = vsel %vm1502, %v3001, %v3000
      %v3004 = vadd.f32 %v2995, %v3002
      %s3005 = scalar_lea.vmem [#allocation2], 13
      %v3006 = vld [vmem:[%s3005] ss:$8 sm:$0x3]
      %3008 = vrot.lane.b32.xlu0 %v3006, 8
      %v3009 = vpop.permute.xlu0 %3008
      %v3010 = vrot.slane %v3009, 7
      %v3011 = vsel %vm1814, %v3010, %v3009
      %v3013 = vadd.f32 %v3004, %v3011
      %s3014 = scalar_lea.vmem [#allocation2], 14
      %v3015 = vld [vmem:[%s3014] ss:$8 sm:$0x3]
      %3017 = vrot.lane.b32.xlu0 %v3015, 112
      %v3018 = vpop.permute.xlu0 %3017
      %v3019 = vrot.slane %v3018, 1
      %v3020 = vsel %vm2108, %v3018, %v3019
      %v3022 = vadd.f32 %v3013, %v3020
      %s3023 = scalar_lea.vmem [#allocation2], 15
      %v3024 = vld [vmem:[%s3023] ss:$8 sm:$0x3]
      %3026 = vrot.lane.b32.xlu0 %v3024, 88
      %v3027 = vpop.permute.xlu0 %3026
      %v3028 = vrot.slane %v3027, 1
      %v3029 = vsel %vm2393, %v3027, %v3028
      %v3031 = vadd.f32 %v3022, %v3029
      %s3032 = scalar_lea.vmem [#allocation2], 48
      %v3033 = vld [vmem:[%s3032] ss:$8 sm:$0x3]
      %3035 = vrot.lane.b32.xlu0 %v3033, 64
      %v3036 = vpop.permute.xlu0 %3035
      %v3037 = vrot.slane %v3036, 1
      %v3038 = vsel %vm2721, %v3036, %v3037
      %v3040 = vadd.f32 %v3031, %v3038
      %s3041 = scalar_lea.vmem [#allocation2], 49
      %v3042 = vld [vmem:[%s3041] ss:$8 sm:$0x7]
      %3044 = vrot.lane.b32.xlu0 %v3042, 40
      %v3045 = vpop.permute.xlu0 %3044
      %v3046 = vrot.slane %v3045, 1
      %vm3047 = vcmask 326656
      %v3048 = vsel %vm3047, %v3045, %v3046
      %v3050 = vadd.f32 %v3040, %v3048
      %s3051 = scalar_lea.vmem [#allocation2], 58
      %v3052 = vld [vmem:[%s3051] ss:$8 sm:$0x3]
      %3054 = vrot.lane.b32.xlu0 %v3052, 16
      %v3055 = vpop.permute.xlu0 %3054
      %v3056 = vrot.slane %v3055, 7
      %vm3057 = vcmask 130048
      %v3058 = vsel %vm3057, %v3056, %v3055
      %v3060 = vadd.f32 %v3050, %v3058
      %s3061 = scalar_lea.vmem [#allocation2], 59
      %v3062 = vld [vmem:[%s3061] ss:$8 sm:$0x3]
      %3064 = vrot.lane.b32.xlu0 %v3062, 120
      %v3065 = vpop.permute.xlu0 %3064
      %v3066 = vrot.slane %v3065, 1
      %v3067 = vsel %vm328, %v3065, %v3066
      %v3069 = vadd.f32 %v3060, %v3067
      %s3070 = scalar_lea.vmem [#allocation2], 60
      %v3071 = vld [vmem:[%s3070] ss:$8 sm:$0x3]
      %3073 = vrot.lane.b32.xlu0 %v3071, 96
      %v3074 = vpop.permute.xlu0 %3073
      %v3075 = vrot.slane %v3074, 1
      %vm3076 = vcmask 785408
      %v3077 = vsel %vm3076, %v3074, %v3075
      %v3079 = vadd.f32 %v3069, %v3077
      %s3080 = scalar_lea.vmem [#allocation2], 61
      %v3081 = vld [vmem:[%s3080] ss:$8 sm:$0x3]
      %3083 = vrot.lane.b32.xlu0 %v3081, 72
      %v3084 = vpop.permute.xlu0 %3083
      %v3085 = vrot.slane %v3084, 1
      %v3086 = vsel %vm337, %v3084, %v3085
      %v3088 = vadd.f32 %v3079, %v3086
      %s3089 = scalar_lea.vmem [#allocation2], 62
      %v3090 = vld [vmem:[%s3089] ss:$8 sm:$0x3]
      %3092 = vrot.lane.b32.xlu0 %v3090, 48
      %v3093 = vpop.permute.xlu0 %3092
      %v3094 = vrot.slane %v3093, 1
      %v3095 = vsel %vm202, %v3093, %v3094
      %v3097 = vadd.f32 %v3088, %v3095
      %s3098 = scalar_lea.vmem [#allocation2], 71
      %v3099 = vld [vmem:[%s3098] ss:$8 sm:$0x3]
      %3101 = vrot.lane.b32.xlu0 %v3099, 24
      %v3102 = vpop.permute.xlu0 %3101
      %v3103 = vrot.slane %v3102, 7
      %vm3104 = vcmask 195584
      %v3105 = vsel %vm3104, %v3103, %v3102
      %v3107 = vadd.f32 %v3097, %v3105
      %s3108 = scalar_lea.vmem [#allocation2], 104
      %v3109 = vld [vmem:[%s3108] ss:$8 sm:$0x3]
      %v3110 = vadd.f32 %v3107, %v3109
      %3112 = vrot.lane.b32.xlu0 %v3110, 96
      %v3113 = vpop.permute.xlu0 %3112
      %v3114 = vrot.slane %v3113, 1
      %v3115 = vsel %vm3076, %v3113, %v3114
      %v3117 = vlaneseq
      %vm3118 = vcmp.ge.s32.totalorder %v3117, 0
      %vm3119 = vcmp.lt.s32.totalorder %v3117, 144
      %vm3120 = vmand %vm3118, %vm3119
      %3121 = vst.msk [vmem:[%s196] sm:$0x3] %vm3120, %v3115
      %p3122 = scmp.lt.s32.totalorder %s16, 1
      %s3123 = scalar_select %p3122, %s16, 1
      %s3124 = smul.addr %s3123, 2
      %s3125 = scalar_lea.vmem %s4, %s3124
      // Predicated region
      $region37: #{signal_cnn_forward.1} parent=35 // pred_check
        %p3126 = pneg %p123
      $region38: #{signal_cnn_forward.1} parent=35 // pred_check_branch
        %3128 = sbr.rel (%p3126) target = $region40
      $region39: #{signal_cnn_forward.1} parent=35 // pred_region
        _
      $region40: #{signal_cnn_forward.1} parent=35 // pred_fallthru
        _
    $region36: #{signal_cnn_forward.1} parent=5 // pred_fallthru
      _
    %p3129 = scmp.le.s32.totalorder 2, %s11
    // Predicated region
    $region41: #{signal_cnn_forward.1} parent=5 // pred_check
      %p3130 = pneg %p3129
    $region42: #{signal_cnn_forward.1} parent=5 // pred_check_branch
      %3132 = sbr.rel (%p3130) target = $region44
    $region43: #{signal_cnn_forward.1} parent=5 // pred_region
      %s3133 = ssub.s32 %s11, 2
      // Predicated region
      $region45: #{signal_cnn_forward.1} parent=43 // pred_check
        %p3134 = pneg %p129
      $region46: #{signal_cnn_forward.1} parent=43 // pred_check_branch
        %3136 = sbr.rel (%p3134) target = $region48
      $region47: #{signal_cnn_forward.1} parent=43 // pred_region
        %p3137 = scmp.lt.s32.totalorder %s17, 1
        %s3138 = scalar_select %p3137, %s17, 1
        %s3139 = smul.addr %s3138, 2
        %s3140 = scalar_lea.vmem %s4, %s3139
      $region48: #{signal_cnn_forward.1} parent=43 // pred_fallthru
        _
    $region44: #{signal_cnn_forward.1} parent=5 // pred_fallthru
      _
  $region6: #{signal_cnn_forward.1} parent=0 // loop_footer
    %s15 = sadd.s32 1, %s11
  $region7: #{signal_cnn_forward.1} parent=0 // loop_footer_branch
    %10 = sbr.rel target = $region3
  $region8: #{signal_cnn_forward.1} parent=0 // loop_exit
    _

</llo_original>
